<compile_context>
chip_gen: v7x
topology: tpu7x:2x2x1
jax: 0.10.0
libtpu: 0.0.40
codegen_flags: <defaults>
</compile_context>

<pallas_src>
import functools

import jax
import jax.numpy as jnp
from jax.experimental import pallas as pl
from jax.experimental.pallas import tpu as pltpu


def _round_up(x, m):
    return ((x + m - 1) // m) * m


# ----------------------------------------------------------------------------
# Pallas kernel: fused matmul + bias + LeakyReLU (bf16 MXU, f32 accumulate)
# ----------------------------------------------------------------------------
def _matmul_bias_act_kernel(x_ref, w_ref, b_ref, o_ref, *, negative_slope):
    acc = jnp.dot(x_ref[...], w_ref[...], preferred_element_type=jnp.float32)
    acc = acc + b_ref[...]                       # (1, N) broadcasts over rows
    if negative_slope is not None:
        acc = jnp.where(acc > 0, acc, negative_slope * acc)
    o_ref[...] = acc.astype(o_ref.dtype)


def matmul_bias_act(x, w, b, negative_slope, out_dtype):
    """x: (M, K) bf16, w: (K, N) bf16, b: (1, N) f32 -> (M, N) out_dtype.

    N is a multiple of 128 (lane-dense stores).  Large layers are gridded over
    M row-tiles with 'parallel' semantics (megacore on v7x, DMA/MXU overlap);
    small layers run as a single grid step.  The weight/bias use constant
    index_maps so they stay VMEM-resident across grid steps.
    """
    M, K = x.shape
    K2, N = w.shape
    assert K == K2 and N % 128 == 0
    tile_m = 512 if (M > 512 and M % 512 == 0) else M
    grid = (M // tile_m,)
    kernel = functools.partial(_matmul_bias_act_kernel,
                               negative_slope=negative_slope)
    return pl.pallas_call(
        kernel,
        out_shape=jax.ShapeDtypeStruct((M, N), out_dtype),
        grid=grid,
        in_specs=[
            pl.BlockSpec((tile_m, K), lambda i: (i, 0)),
            pl.BlockSpec((K, N), lambda i: (0, 0)),
            pl.BlockSpec((1, N), lambda i: (0, 0)),
        ],
        out_specs=pl.BlockSpec((tile_m, N), lambda i: (i, 0)),
        compiler_params=pltpu.CompilerParams(
            dimension_semantics=("parallel",)),
    )(x, w, b)


# ----------------------------------------------------------------------------
# Plain-JAX glue: im2col patch extraction (NHWC, channels = real, mult. of 8)
# ----------------------------------------------------------------------------
def im2col(x_nhwc, kh, kw, stride, padding):
    x = jnp.pad(x_nhwc, ((0, 0), (padding, padding), (padding, padding), (0, 0)))
    n, hp, wp, c = x.shape
    ho = (hp - kh) // stride + 1
    wo = (wp - kw) // stride + 1
    cols = [x[:, i:i + ho * stride:stride, j:j + wo * stride:stride, :]
            for i in range(kh) for j in range(kw)]
    patches = jnp.stack(cols, axis=3)            # (N, Ho, Wo, KH*KW, C)
    return patches.reshape(n * ho * wo, kh * kw * c), (n, ho, wo)


# ----------------------------------------------------------------------------
# Parameter setup (deterministic; mimics PyTorch Conv2d default init bounds)
# ----------------------------------------------------------------------------
def init_conv_params(key, cout, cin, k):
    fan_in = cin * k * k
    bound = 1.0 / jnp.sqrt(fan_in)
    wkey, bkey = jax.random.split(key)
    w = jax.random.uniform(wkey, (cout, cin, k, k), jnp.float32, -bound, bound)
    b = jax.random.uniform(bkey, (cout,), jnp.float32, -bound, bound)
    return w, b


def spectral_normalize(weight_oihw, key, n_iter=1, eps=1e-12):
    """W / sigma, sigma via power iteration on W.reshape(Cout, -1)."""
    cout = weight_oihw.shape[0]
    w_mat = weight_oihw.reshape(cout, -1)
    u = jax.random.normal(key, (cout,), jnp.float32)
    u = u / (jnp.linalg.norm(u) + eps)
    for _ in range(n_iter):
        v = w_mat.T @ u
        v = v / (jnp.linalg.norm(v) + eps)
        u = w_mat @ v
        u = u / (jnp.linalg.norm(u) + eps)
    sigma = u @ (w_mat @ v)
    return weight_oihw / sigma


def prep_conv(w_oihw, bias, cin_pad, cout_pad):
    """One-time prep: OIHW -> (KH*KW*Cin_pad, Cout_pad) bf16, padded f32 bias."""
    cout, cin, kh, kw = w_oihw.shape
    w_t = jnp.transpose(w_oihw, (2, 3, 1, 0))                 # (KH, KW, Cin, Cout)
    w_t = jnp.pad(w_t, ((0, 0), (0, 0),
                        (0, cin_pad - cin), (0, cout_pad - cout)))
    w_mat = w_t.reshape(kh * kw * cin_pad, cout_pad).astype(jnp.bfloat16)
    b_pad = jnp.pad(bias, (0, cout_pad - cout)).reshape(1, cout_pad)
    return w_mat, b_pad.astype(jnp.float32)


def prep_final_conv(w_oihw, bias):
    """Final 4x4 valid conv on a 4x4 map == full contraction per image.

    OIHW (1, Cin, 4, 4) -> flat (KH*KW*Cin,) matching an (oy, ox, c) flatten.
    """
    w = jnp.transpose(w_oihw[0], (1, 2, 0))                   # (KH, KW, Cin)
    return w.reshape(-1).astype(jnp.float32), bias.astype(jnp.float32)


def make_discriminator_params(key, img_channels=3, feature_d=8):
    fd = feature_d
    layer_defs = [
        # (cout, cin, spectral_norm?)
        (fd, img_channels, False),
        (fd * 2, fd, True),
        (fd * 4, fd * 2, True),
        (fd * 8, fd * 4, True),
    ]
    conv_params = []
    prev_cin_pad = _round_up(img_channels, 8)        # padded input channels
    for cout, cin, sn in layer_defs:
        key, wkey, ukey = jax.random.split(key, 3)
        w, b = init_conv_params(wkey, cout, cin, 4)
        if sn:
            w = spectral_normalize(w, ukey)
        cout_pad = _round_up(cout, 128)              # lane-dense matmul output
        conv_params.append(prep_conv(w, b, prev_cin_pad, cout_pad))
        prev_cin_pad = _round_up(cout, 8)            # K fix: real channels onward
    # Final Conv2d(fd*8, 1, 4, 1, 0): done in plain XLA (see forward).
    key, wkey = jax.random.split(key)
    w5, b5 = init_conv_params(wkey, 1, fd * 8, 4)
    return conv_params, prep_final_conv(w5, b5)


# ----------------------------------------------------------------------------
# Discriminator forward
# ----------------------------------------------------------------------------
_STRIDES = (2, 2, 2, 2)
_PADDINGS = (1, 1, 1, 1)
_SLOPE = 0.2


def discriminator_forward(params, x_nchw, feature_d=8):
    conv_params, (w5_flat, b5) = params
    real_couts = (feature_d, feature_d * 2, feature_d * 4, feature_d * 8)

    # NCHW -> NHWC, cast to bf16 and pad input channels to a multiple of 8.
    x = jnp.transpose(x_nchw, (0, 2, 3, 1)).astype(jnp.bfloat16)
    cin = x.shape[-1]
    cin_pad = _round_up(cin, 8)
    if cin_pad != cin:
        x = jnp.pad(x, ((0, 0), (0, 0), (0, 0), (0, cin_pad - cin)))

    for (w_mat, b_pad), cout, s, p in zip(conv_params, real_couts,
                                          _STRIDES, _PADDINGS):
        patches, (n, ho, wo) = im2col(x, 4, 4, s, p)
        y = matmul_bias_act(patches, w_mat, b_pad, _SLOPE, jnp.bfloat16)
        # Keep only the REAL output channels for the next layer (K fix);
        # the padded lanes were exactly zero anyway.
        x = y.reshape(n, ho, wo, y.shape[-1])[..., :cout]

    # Final Conv2d(fd*8, 1, 4, stride=1, pad=0) on the 4x4 map: a single full
    # contraction per image.  Done as a tiny XLA dot with the real weight
    # (a (2, K) x (K, 128) pallas_call would be pure launch/DMA overhead).
    n, h, w_sp, c = x.shape
    assert h == 4 and w_sp == 4, "expects 64x64 input (4x4 map before last conv)"
    x_flat = x.reshape(n, h * w_sp * c).astype(jnp.float32)
    logits = x_flat @ w5_flat + b5               # (N,)
    return logits                                # == .view(-1), raw logits


if __name__ == "__main__":
    key = jax.random.PRNGKey(0)
    pkey, xkey = jax.random.split(key)

    img_channels, feature_d = 3, 8   # spatial must be 64 so the output is 1x1
    params = make_discriminator_params(pkey, img_channels, feature_d)

    x = jax.random.normal(xkey, (2, img_channels, 64, 64), jnp.float32)  # NCHW
    fwd = jax.jit(functools.partial(discriminator_forward, feature_d=feature_d))
    out = jax.block_until_ready(fwd(params, x))
    assert out.shape == (2,), out.shape
    print("KERNEL_OK")
</pallas_src>

<mosaic_0001>
module attributes {stable_mosaic.version = 11 : i64} {
  func.func @_matmul_bias_act_kernel(%arg0: i32, %arg1: memref<512x128xbf16, #tpu.memory_space<vmem>>, %arg2: memref<128x128xbf16, #tpu.memory_space<vmem>>, %arg3: memref<1x128xf32, #tpu.memory_space<vmem>>, %arg4: memref<512x128xbf16, #tpu.memory_space<vmem>>) attributes {dimension_semantics = [#tpu.dimension_semantics<parallel>], iteration_bounds = array<i64: 4>, scalar_prefetch = 0 : i64, scratch_operands = 0 : i64, tpu.core_type = #tpu.core_type<tc>, window_params = [{transform_indices = @transform_0, window_bounds = array<i64: 512, 128>}, {pipeline_mode = #tpu.pipeline_mode<synchronous>, transform_indices = @transform_1, window_bounds = array<i64: 128, 128>}, {pipeline_mode = #tpu.pipeline_mode<synchronous>, transform_indices = @transform_2, window_bounds = array<i64: 1, 128>}, {transform_indices = @transform_3, window_bounds = array<i64: 512, 128>}]} {
    %c0 = arith.constant 0 : index
    %c0_0 = arith.constant 0 : index
    %0 = vector.load %arg1[%c0, %c0_0] : memref<512x128xbf16, #tpu.memory_space<vmem>>, vector<512x128xbf16>
    %c0_1 = arith.constant 0 : index
    %c0_2 = arith.constant 0 : index
    %1 = vector.load %arg2[%c0_1, %c0_2] : memref<128x128xbf16, #tpu.memory_space<vmem>>, vector<128x128xbf16>
    %cst = arith.constant dense<0.000000e+00> : vector<512x128xf32>
    %2 = tpu.matmul %0, %1, %cst {dimension_numbers = #tpu.dot_dimension_numbers<[1], [0], [0], [1], [0, 0, 1, 1], [], []>} : vector<512x128xbf16>, vector<128x128xbf16>, vector<512x128xf32> -> vector<512x128xf32>
    %c0_3 = arith.constant 0 : index
    %c0_4 = arith.constant 0 : index
    %3 = vector.load %arg3[%c0_3, %c0_4] : memref<1x128xf32, #tpu.memory_space<vmem>>, vector<1x128xf32>
    %4 = vector.broadcast %3 : vector<1x128xf32> to vector<512x128xf32>
    %5 = arith.addf %2, %4 : vector<512x128xf32>
    %cst_5 = arith.constant 0.000000e+00 : f32
    %6 = vector.broadcast %cst_5 : f32 to vector<512x128xf32>
    %7 = arith.cmpf ogt, %5, %6 : vector<512x128xf32>
    %cst_6 = arith.constant 2.000000e-01 : f32
    %8 = vector.broadcast %cst_6 : f32 to vector<512x128xf32>
    %9 = arith.mulf %8, %5 : vector<512x128xf32>
    %10 = arith.select %7, %5, %9 : vector<512x128xi1>, vector<512x128xf32>
    %11 = arith.truncf %10 : vector<512x128xf32> to vector<512x128xbf16>
    %c0_7 = arith.constant 0 : index
    %c0_8 = arith.constant 0 : index
    %12 = vector.load %arg4[%c0_7, %c0_8] : memref<512x128xbf16, #tpu.memory_space<vmem>>, vector<512x128xbf16>
    tpu.vector_store %arg4[%c0_7, %c0_8], %11 {strides = array<i32>} : memref<512x128xbf16, #tpu.memory_space<vmem>>, vector<512x128xbf16>,
    return
  }
  func.func @transform_0(%arg0: i32) -> (i32, i32) {
    %c0_i32 = arith.constant 0 : i32
    %c0_i32_0 = arith.constant 0 : i32
    return %arg0, %c0_i32 : i32, i32
  }
  func.func @transform_1(%arg0: i32) -> (i32, i32) {
    %c0_i32 = arith.constant 0 : i32
    %c0_i32_0 = arith.constant 0 : i32
    %c0_i32_1 = arith.constant 0 : i32
    return %c0_i32, %c0_i32_0 : i32, i32
  }
  func.func @transform_2(%arg0: i32) -> (i32, i32) {
    %c0_i32 = arith.constant 0 : i32
    %c0_i32_0 = arith.constant 0 : i32
    %c0_i32_1 = arith.constant 0 : i32
    return %c0_i32, %c0_i32_0 : i32, i32
  }
  func.func @transform_3(%arg0: i32) -> (i32, i32) {
    %c0_i32 = arith.constant 0 : i32
    %c0_i32_0 = arith.constant 0 : i32
    return %arg0, %c0_i32 : i32, i32
  }
}

module attributes {stable_mosaic.version = 11 : i64} {
  func.func @_matmul_bias_act_kernel(%arg0: i32, %arg1: memref<512x128xbf16, #tpu.memory_space<vmem>>, %arg2: memref<128x128xbf16, #tpu.memory_space<vmem>>, %arg3: memref<1x128xf32, #tpu.memory_space<vmem>>, %arg4: memref<512x128xbf16, #tpu.memory_space<vmem>>) attributes {dimension_semantics = [#tpu.dimension_semantics<parallel>], iteration_bounds = array<i64: 1>, scalar_prefetch = 0 : i64, scratch_operands = 0 : i64, tpu.core_type = #tpu.core_type<tc>, window_params = [{transform_indices = @transform_0, window_bounds = array<i64: 512, 128>}, {pipeline_mode = #tpu.pipeline_mode<synchronous>, transform_indices = @transform_1, window_bounds = array<i64: 128, 128>}, {pipeline_mode = #tpu.pipeline_mode<synchronous>, transform_indices = @transform_2, window_bounds = array<i64: 1, 128>}, {transform_indices = @transform_3, window_bounds = array<i64: 512, 128>}]} {
    %c0 = arith.constant 0 : index
    %c0_0 = arith.constant 0 : index
    %0 = vector.load %arg1[%c0, %c0_0] : memref<512x128xbf16, #tpu.memory_space<vmem>>, vector<512x128xbf16>
    %c0_1 = arith.constant 0 : index
    %c0_2 = arith.constant 0 : index
    %1 = vector.load %arg2[%c0_1, %c0_2] : memref<128x128xbf16, #tpu.memory_space<vmem>>, vector<128x128xbf16>
    %cst = arith.constant dense<0.000000e+00> : vector<512x128xf32>
    %2 = tpu.matmul %0, %1, %cst {dimension_numbers = #tpu.dot_dimension_numbers<[1], [0], [0], [1], [0, 0, 1, 1], [], []>} : vector<512x128xbf16>, vector<128x128xbf16>, vector<512x128xf32> -> vector<512x128xf32>
    %c0_3 = arith.constant 0 : index
    %c0_4 = arith.constant 0 : index
    %3 = vector.load %arg3[%c0_3, %c0_4] : memref<1x128xf32, #tpu.memory_space<vmem>>, vector<1x128xf32>
    %4 = vector.broadcast %3 : vector<1x128xf32> to vector<512x128xf32>
    %5 = arith.addf %2, %4 : vector<512x128xf32>
    %cst_5 = arith.constant 0.000000e+00 : f32
    %6 = vector.broadcast %cst_5 : f32 to vector<512x128xf32>
    %7 = arith.cmpf ogt, %5, %6 : vector<512x128xf32>
    %cst_6 = arith.constant 2.000000e-01 : f32
    %8 = vector.broadcast %cst_6 : f32 to vector<512x128xf32>
    %9 = arith.mulf %8, %5 : vector<512x128xf32>
    %10 = arith.select %7, %5, %9 : vector<512x128xi1>, vector<512x128xf32>
    %11 = arith.truncf %10 : vector<512x128xf32> to vector<512x128xbf16>
    %c0_7 = arith.constant 0 : index
    %c0_8 = arith.constant 0 : index
    %12 = vector.load %arg4[%c0_7, %c0_8] : memref<512x128xbf16, #tpu.memory_space<vmem>>, vector<512x128xbf16>
    tpu.vector_store %arg4[%c0_7, %c0_8], %11 {strides = array<i32>} : memref<512x128xbf16, #tpu.memory_space<vmem>>, vector<512x128xbf16>,
    return
  }
  func.func @transform_0(%arg0: i32) -> (i32, i32) {
    %c0_i32 = arith.constant 0 : i32
    %c0_i32_0 = arith.constant 0 : i32
    return %arg0, %c0_i32 : i32, i32
  }
  func.func @transform_1(%arg0: i32) -> (i32, i32) {
    %c0_i32 = arith.constant 0 : i32
    %c0_i32_0 = arith.constant 0 : i32
    %c0_i32_1 = arith.constant 0 : i32
    return %c0_i32, %c0_i32_0 : i32, i32
  }
  func.func @transform_2(%arg0: i32) -> (i32, i32) {
    %c0_i32 = arith.constant 0 : i32
    %c0_i32_0 = arith.constant 0 : i32
    %c0_i32_1 = arith.constant 0 : i32
    return %c0_i32, %c0_i32_0 : i32, i32
  }
  func.func @transform_3(%arg0: i32) -> (i32, i32) {
    %c0_i32 = arith.constant 0 : i32
    %c0_i32_0 = arith.constant 0 : i32
    return %arg0, %c0_i32 : i32, i32
  }
}

module attributes {stable_mosaic.version = 11 : i64} {
  func.func @_matmul_bias_act_kernel(%arg0: i32, %arg1: memref<128x256xbf16, #tpu.memory_space<vmem>>, %arg2: memref<256x128xbf16, #tpu.memory_space<vmem>>, %arg3: memref<1x128xf32, #tpu.memory_space<vmem>>, %arg4: memref<128x128xbf16, #tpu.memory_space<vmem>>) attributes {dimension_semantics = [#tpu.dimension_semantics<parallel>], iteration_bounds = array<i64: 1>, scalar_prefetch = 0 : i64, scratch_operands = 0 : i64, tpu.core_type = #tpu.core_type<tc>, window_params = [{transform_indices = @transform_0, window_bounds = array<i64: 128, 256>}, {pipeline_mode = #tpu.pipeline_mode<synchronous>, transform_indices = @transform_1, window_bounds = array<i64: 256, 128>}, {pipeline_mode = #tpu.pipeline_mode<synchronous>, transform_indices = @transform_2, window_bounds = array<i64: 1, 128>}, {transform_indices = @transform_3, window_bounds = array<i64: 128, 128>}]} {
    %c0 = arith.constant 0 : index
    %c0_0 = arith.constant 0 : index
    %0 = vector.load %arg1[%c0, %c0_0] : memref<128x256xbf16, #tpu.memory_space<vmem>>, vector<128x256xbf16>
    %c0_1 = arith.constant 0 : index
    %c0_2 = arith.constant 0 : index
    %1 = vector.load %arg2[%c0_1, %c0_2] : memref<256x128xbf16, #tpu.memory_space<vmem>>, vector<256x128xbf16>
    %cst = arith.constant dense<0.000000e+00> : vector<128x128xf32>
    %2 = tpu.matmul %0, %1, %cst {dimension_numbers = #tpu.dot_dimension_numbers<[1], [0], [0], [1], [0, 0, 1, 1], [], []>} : vector<128x256xbf16>, vector<256x128xbf16>, vector<128x128xf32> -> vector<128x128xf32>
    %c0_3 = arith.constant 0 : index
    %c0_4 = arith.constant 0 : index
    %3 = vector.load %arg3[%c0_3, %c0_4] : memref<1x128xf32, #tpu.memory_space<vmem>>, vector<1x128xf32>
    %4 = vector.broadcast %3 : vector<1x128xf32> to vector<128x128xf32>
    %5 = arith.addf %2, %4 : vector<128x128xf32>
    %cst_5 = arith.constant 0.000000e+00 : f32
    %6 = vector.broadcast %cst_5 : f32 to vector<128x128xf32>
    %7 = arith.cmpf ogt, %5, %6 : vector<128x128xf32>
    %cst_6 = arith.constant 2.000000e-01 : f32
    %8 = vector.broadcast %cst_6 : f32 to vector<128x128xf32>
    %9 = arith.mulf %8, %5 : vector<128x128xf32>
    %10 = arith.select %7, %5, %9 : vector<128x128xi1>, vector<128x128xf32>
    %11 = arith.truncf %10 : vector<128x128xf32> to vector<128x128xbf16>
    %c0_7 = arith.constant 0 : index
    %c0_8 = arith.constant 0 : index
    %12 = vector.load %arg4[%c0_7, %c0_8] : memref<128x128xbf16, #tpu.memory_space<vmem>>, vector<128x128xbf16>
    tpu.vector_store %arg4[%c0_7, %c0_8], %11 {strides = array<i32>} : memref<128x128xbf16, #tpu.memory_space<vmem>>, vector<128x128xbf16>,
    return
  }
  func.func @transform_0(%arg0: i32) -> (i32, i32) {
    %c0_i32 = arith.constant 0 : i32
    %c0_i32_0 = arith.constant 0 : i32
    return %arg0, %c0_i32 : i32, i32
  }
  func.func @transform_1(%arg0: i32) -> (i32, i32) {
    %c0_i32 = arith.constant 0 : i32
    %c0_i32_0 = arith.constant 0 : i32
    %c0_i32_1 = arith.constant 0 : i32
    return %c0_i32, %c0_i32_0 : i32, i32
  }
  func.func @transform_2(%arg0: i32) -> (i32, i32) {
    %c0_i32 = arith.constant 0 : i32
    %c0_i32_0 = arith.constant 0 : i32
    %c0_i32_1 = arith.constant 0 : i32
    return %c0_i32, %c0_i32_0 : i32, i32
  }
  func.func @transform_3(%arg0: i32) -> (i32, i32) {
    %c0_i32 = arith.constant 0 : i32
    %c0_i32_0 = arith.constant 0 : i32
    return %arg0, %c0_i32 : i32, i32
  }
}

module attributes {stable_mosaic.version = 11 : i64} {
  func.func @_matmul_bias_act_kernel(%arg0: i32, %arg1: memref<32x512xbf16, #tpu.memory_space<vmem>>, %arg2: memref<512x128xbf16, #tpu.memory_space<vmem>>, %arg3: memref<1x128xf32, #tpu.memory_space<vmem>>, %arg4: memref<32x128xbf16, #tpu.memory_space<vmem>>) attributes {dimension_semantics = [#tpu.dimension_semantics<parallel>], iteration_bounds = array<i64: 1>, scalar_prefetch = 0 : i64, scratch_operands = 0 : i64, tpu.core_type = #tpu.core_type<tc>, window_params = [{transform_indices = @transform_0, window_bounds = array<i64: 32, 512>}, {pipeline_mode = #tpu.pipeline_mode<synchronous>, transform_indices = @transform_1, window_bounds = array<i64: 512, 128>}, {pipeline_mode = #tpu.pipeline_mode<synchronous>, transform_indices = @transform_2, window_bounds = array<i64: 1, 128>}, {transform_indices = @transform_3, window_bounds = array<i64: 32, 128>}]} {
    %c0 = arith.constant 0 : index
    %c0_0 = arith.constant 0 : index
    %0 = vector.load %arg1[%c0, %c0_0] : memref<32x512xbf16, #tpu.memory_space<vmem>>, vector<32x512xbf16>
    %c0_1 = arith.constant 0 : index
    %c0_2 = arith.constant 0 : index
    %1 = vector.load %arg2[%c0_1, %c0_2] : memref<512x128xbf16, #tpu.memory_space<vmem>>, vector<512x128xbf16>
    %cst = arith.constant dense<0.000000e+00> : vector<32x128xf32>
    %2 = tpu.matmul %0, %1, %cst {dimension_numbers = #tpu.dot_dimension_numbers<[1], [0], [0], [1], [0, 0, 1, 1], [], []>} : vector<32x512xbf16>, vector<512x128xbf16>, vector<32x128xf32> -> vector<32x128xf32>
    %c0_3 = arith.constant 0 : index
    %c0_4 = arith.constant 0 : index
    %3 = vector.load %arg3[%c0_3, %c0_4] : memref<1x128xf32, #tpu.memory_space<vmem>>, vector<1x128xf32>
    %4 = vector.broadcast %3 : vector<1x128xf32> to vector<32x128xf32>
    %5 = arith.addf %2, %4 : vector<32x128xf32>
    %cst_5 = arith.constant 0.000000e+00 : f32
    %6 = vector.broadcast %cst_5 : f32 to vector<32x128xf32>
    %7 = arith.cmpf ogt, %5, %6 : vector<32x128xf32>
    %cst_6 = arith.constant 2.000000e-01 : f32
    %8 = vector.broadcast %cst_6 : f32 to vector<32x128xf32>
    %9 = arith.mulf %8, %5 : vector<32x128xf32>
    %10 = arith.select %7, %5, %9 : vector<32x128xi1>, vector<32x128xf32>
    %11 = arith.truncf %10 : vector<32x128xf32> to vector<32x128xbf16>
    %c0_7 = arith.constant 0 : index
    %c0_8 = arith.constant 0 : index
    %12 = vector.load %arg4[%c0_7, %c0_8] : memref<32x128xbf16, #tpu.memory_space<vmem>>, vector<32x128xbf16>
    tpu.vector_store %arg4[%c0_7, %c0_8], %11 {strides = array<i32>} : memref<32x128xbf16, #tpu.memory_space<vmem>>, vector<32x128xbf16>,
    return
  }
  func.func @transform_0(%arg0: i32) -> (i32, i32) {
    %c0_i32 = arith.constant 0 : i32
    %c0_i32_0 = arith.constant 0 : i32
    return %arg0, %c0_i32 : i32, i32
  }
  func.func @transform_1(%arg0: i32) -> (i32, i32) {
    %c0_i32 = arith.constant 0 : i32
    %c0_i32_0 = arith.constant 0 : i32
    %c0_i32_1 = arith.constant 0 : i32
    return %c0_i32, %c0_i32_0 : i32, i32
  }
  func.func @transform_2(%arg0: i32) -> (i32, i32) {
    %c0_i32 = arith.constant 0 : i32
    %c0_i32_0 = arith.constant 0 : i32
    %c0_i32_1 = arith.constant 0 : i32
    return %c0_i32, %c0_i32_0 : i32, i32
  }
  func.func @transform_3(%arg0: i32) -> (i32, i32) {
    %c0_i32 = arith.constant 0 : i32
    %c0_i32_0 = arith.constant 0 : i32
    return %arg0, %c0_i32 : i32, i32
  }
}

</mosaic_0001>

<llo_original>
// kernel: discriminator_forward.4
$region0: #{discriminator_forward.4}
  #allocation0 [shape = 'u32[]', space=smem, size = 0x4, offset = 0x4, fixed_abs, tag = 'smem constant byte address 0x4 - core index']
  #allocation1 [shape = 'u32[144,128]{1,0:T(1,128)}', space=vmem, size = 0x12000, scoped, tag = 'internal scratch']
  %s0 = inlined_call_operand.vmem [shape: bf16[2048,128], index: 0, kind: input, shape index: {}]
  %s1 = inlined_call_operand.vmem [shape: bf16[128,128], index: 1, kind: input, shape index: {}]
  %s2 = inlined_call_operand.vmem [shape: f32[1,128], index: 2, kind: input, shape index: {}]
  %s3 = inlined_call_operand.vmem [shape: bf16[2048,128], index: 3, kind: output, shape index: {}]
  %s4 = sld [smem:[#allocation0]]
  $region45: #{discriminator_forward.4} parent=0
    _
  %s6 = ssub.s32 1, %s4
  %s7 = scalar_select 0, %s6, %s4
  loop: start=0, step=1, limit=6
  $region2: #{discriminator_forward.4} parent=0 // loop_pre_header
    _
  $region3: #{discriminator_forward.4} parent=0 // loop_header
    %s9 = sphi 0, %s13
    %p10 = scmp.ge.s32.totalorder %s9, 6
    %s19 = sphi 0, %s21
    %s22 = sphi 0, %s19
    %s23 = sphi 0, %s22
    %s39 = sphi 0, %s23
    %s43 = sphi 0, %s43
    %s45 = sphi 0, %s43
    %s46 = sphi 0, %s45
    %s60 = sphi 0, %s46
    %s64 = sphi 0, %s64
    %s66 = sphi 0, %s64
    %s67 = sphi 0, %s66
    %s81 = sphi 0, %s67
    %s87 = sphi 0, %s89
    %s90 = sphi 0, %s87
    %s91 = sphi 0, %s90
    %s107 = sphi 0, %s91
  $region4: #{discriminator_forward.4} parent=0 // loop_header_branch
    %12 = sbr.rel (%p10) target = $region8
  $region5: #{discriminator_forward.4} parent=0 // loop_body
    %s14 = ssub.s32 %s9, 1
    %s15 = ssub.s32 %s9, 2
    %s16 = sadd.s32 %s9, 1
    %s17 = ssub.s32 %s9, %s16
    %p18 = scmp.eq.s32.totalorder %s17, 0
    %s20 = sadd.s32 %s19, 1
    %s21 = scalar_select %p18, %s19, %s20
    %p24 = pneg %p18
    %p25 = scmp.eq.s32.totalorder %s9, 3
    %p26 = por %p24, %p25
    %p27 = scmp.ne.s32.totalorder %s19, %s22
    %p28 = scmp.eq.s32.totalorder %s9, 0
    %p29 = por %p27, %p28
    %p30 = scmp.ne.s32.totalorder %s19, %s22
    %p31 = scmp.eq.s32.totalorder %s14, 3
    %p32 = por %p30, %p31
    %p33 = scmp.ne.s32.totalorder %s22, %s23
    %p34 = scmp.eq.s32.totalorder %s14, 0
    %p35 = por %p33, %p34
    %p36 = scmp.ne.s32.totalorder %s22, %s23
    %p37 = scmp.eq.s32.totalorder %s15, 3
    %p38 = por %p36, %p37
    %p40 = scmp.ne.s32.totalorder %s23, %s39
    %p41 = scmp.eq.s32.totalorder %s15, 0
    %p42 = por %p40, %p41
    %s44 = sadd.s32 %s43, 1
    %p47 = scmp.eq.s32.totalorder %s9, 3
    %p48 = scmp.ne.s32.totalorder %s43, %s45
    %p49 = scmp.eq.s32.totalorder %s9, 0
    %p50 = por %p48, %p49
    %p51 = scmp.ne.s32.totalorder %s43, %s45
    %p52 = scmp.eq.s32.totalorder %s14, 3
    %p53 = por %p51, %p52
    %p54 = scmp.ne.s32.totalorder %s45, %s46
    %p55 = scmp.eq.s32.totalorder %s14, 0
    %p56 = por %p54, %p55
    %p57 = scmp.ne.s32.totalorder %s45, %s46
    %p58 = scmp.eq.s32.totalorder %s15, 3
    %p59 = por %p57, %p58
    %p61 = scmp.ne.s32.totalorder %s46, %s60
    %p62 = scmp.eq.s32.totalorder %s15, 0
    %p63 = por %p61, %p62
    %s65 = sadd.s32 %s64, 1
    %p68 = scmp.eq.s32.totalorder %s9, 3
    %p69 = scmp.ne.s32.totalorder %s64, %s66
    %p70 = scmp.eq.s32.totalorder %s9, 0
    %p71 = por %p69, %p70
    %p72 = scmp.ne.s32.totalorder %s64, %s66
    %p73 = scmp.eq.s32.totalorder %s14, 3
    %p74 = por %p72, %p73
    %p75 = scmp.ne.s32.totalorder %s66, %s67
    %p76 = scmp.eq.s32.totalorder %s14, 0
    %p77 = por %p75, %p76
    %p78 = scmp.ne.s32.totalorder %s66, %s67
    %p79 = scmp.eq.s32.totalorder %s15, 3
    %p80 = por %p78, %p79
    %p82 = scmp.ne.s32.totalorder %s67, %s81
    %p83 = scmp.eq.s32.totalorder %s15, 0
    %p84 = por %p82, %p83
    %s85 = ssub.s32 %s9, %s16
    %p86 = scmp.eq.s32.totalorder %s85, 0
    %s88 = sadd.s32 %s87, 1
    %s89 = scalar_select %p86, %s87, %s88
    %p92 = pneg %p86
    %p93 = scmp.eq.s32.totalorder %s9, 3
    %p94 = por %p92, %p93
    %p95 = scmp.ne.s32.totalorder %s87, %s90
    %p96 = scmp.eq.s32.totalorder %s9, 0
    %p97 = por %p95, %p96
    %p98 = scmp.ne.s32.totalorder %s87, %s90
    %p99 = scmp.eq.s32.totalorder %s14, 3
    %p100 = por %p98, %p99
    %p101 = scmp.ne.s32.totalorder %s90, %s91
    %p102 = scmp.eq.s32.totalorder %s14, 0
    %p103 = por %p101, %p102
    %p104 = scmp.ne.s32.totalorder %s90, %s91
    %p105 = scmp.eq.s32.totalorder %s15, 3
    %p106 = por %p104, %p105
    %p108 = scmp.ne.s32.totalorder %s91, %s107
    %p109 = scmp.eq.s32.totalorder %s15, 0
    %p110 = por %p108, %p109
    %p111 = scmp.le.s32.totalorder 1, %s9
    %p112 = scmp.lt.s32.totalorder %s9, 5
    %p113 = pnand %p111, %p112
    %p114 = pneg %p113
    // Predicated region
    $region9: #{discriminator_forward.4} parent=5 // pred_check
      _
    $region10: #{discriminator_forward.4} parent=5 // pred_check_branch
      %116 = sbr.rel (%p113) target = $region12
    $region11: #{discriminator_forward.4} parent=5 // pred_region
      %s117 = ssub.s32 %s9, 1
      // Predicated region
      $region13: #{discriminator_forward.4} parent=11 // pred_check
        %p118 = pneg %p56
      $region14: #{discriminator_forward.4} parent=11 // pred_check_branch
        %120 = sbr.rel (%p118) target = $region16
      $region15: #{discriminator_forward.4} parent=11 // pred_region
        _
      $region16: #{discriminator_forward.4} parent=11 // pred_fallthru
        _
      // Predicated region
      $region17: #{discriminator_forward.4} parent=11 // pred_check
        %p121 = pneg %p77
      $region18: #{discriminator_forward.4} parent=11 // pred_check_branch
        %123 = sbr.rel (%p121) target = $region20
      $region19: #{discriminator_forward.4} parent=11 // pred_region
        _
      $region20: #{discriminator_forward.4} parent=11 // pred_fallthru
        _
    $region12: #{discriminator_forward.4} parent=5 // pred_fallthru
      _
    %p124 = scmp.lt.s32.totalorder %s9, 4
    // Predicated region
    $region21: #{discriminator_forward.4} parent=5 // pred_check
      %p125 = pneg %p124
    $region22: #{discriminator_forward.4} parent=5 // pred_check_branch
      %127 = sbr.rel (%p125) target = $region24
    $region23: #{discriminator_forward.4} parent=5 // pred_region
      // Predicated region
      $region25: #{discriminator_forward.4} parent=23 // pred_check
        %p128 = pneg %p29
      $region26: #{discriminator_forward.4} parent=23 // pred_check_branch
        %130 = sbr.rel (%p128) target = $region28
      $region27: #{discriminator_forward.4} parent=23 // pred_region
        %s131 = smul.u32 64, %s9
        %p132 = scmp.lt.s32.totalorder %s131, 255
        %s133 = scalar_select %p132, %s131, 255
        %s134 = smul.addr %s133, 4
        %s135 = scalar_lea.vmem %s0, %s134
        %s136 = smul.u32 64, %s9
      $region28: #{discriminator_forward.4} parent=23 // pred_fallthru
        _
    $region24: #{discriminator_forward.4} parent=5 // pred_fallthru
      _
    %p137 = scmp.le.s32.totalorder 1, %s9
    %p138 = scmp.lt.s32.totalorder %s9, 5
    %p139 = pnand %p137, %p138
    %p140 = pneg %p139
    // Predicated region
    $region29: #{discriminator_forward.4} parent=5 // pred_check
      _
    $region30: #{discriminator_forward.4} parent=5 // pred_check_branch
      %142 = sbr.rel (%p139) target = $region32
    $region31: #{discriminator_forward.4} parent=5 // pred_region
      %s143 = ssub.s32 %s9, 1
      %s144 = smul.u32 64, %s14
      %p145 = scmp.lt.s32.totalorder %s144, 255
      %s146 = scalar_select %p145, %s144, 255
      %s147 = smul.addr %s146, 4
      %s148 = scalar_lea.vmem %s0, %s147
      %p149 = pneg %p35
      %p150 = pneg %p32
      %p151 = pneg %p56
      %p152 = pneg %p53
      %p153 = pneg %p77
      %p154 = pneg %p74
      %p155 = pneg %p103
      %p156 = pneg %p100
      %s157 = smul.u32 64, %s14
      %p158 = scmp.lt.s32.totalorder %s157, 255
      %s159 = scalar_select %p158, %s157, 255
      %s160 = smul.addr %s159, 4
      %s161 = scalar_lea.vmem %s3, %s160
      %s162 = smul.u32 64, %s14
      %p163 = scmp.lt.s32.totalorder %s162, 255
      %s164 = scalar_select %p163, %s162, 255
      %s165 = smul.addr %s164, 4
      %s166 = scalar_lea.vmem %s0, %s165
      %s167 = smul.u32 64, %s14
      %s168 = smul.u32 64, %s14
      %p169 = scmp.lt.s32.totalorder %s168, 255
      %s170 = scalar_select %p169, %s168, 255
      %s171 = smul.addr %s170, 4
      %s172 = scalar_lea.vmem %s3, %s171
      %s173 = smul.u32 64, %s14
      %v175 = vld [vmem:[%s166] sm:$0xf]
      %v176 = vld [vmem:[%s166 + $0x4] sm:$0xf]
      %v177 = vld [vmem:[%s166 + $0x8] sm:$0xf]
      %v178 = vld [vmem:[%s166 + $0xc] sm:$0xf]
      %v179 = vld [vmem:[%s166 + $0x10] sm:$0xf]
      %v180 = vld [vmem:[%s166 + $0x14] sm:$0xf]
      %v181 = vld [vmem:[%s166 + $0x18] sm:$0xf]
      %v182 = vld [vmem:[%s166 + $0x1c] sm:$0xf]
      %v183 = vld [vmem:[%s166 + $0x20] sm:$0xf]
      %v184 = vld [vmem:[%s166 + $0x24] sm:$0xf]
      %v185 = vld [vmem:[%s166 + $0x28] sm:$0xf]
      %v186 = vld [vmem:[%s166 + $0x2c] sm:$0xf]
      %v187 = vld [vmem:[%s166 + $0x30] sm:$0xf]
      %v188 = vld [vmem:[%s166 + $0x34] sm:$0xf]
      %v189 = vld [vmem:[%s166 + $0x38] sm:$0xf]
      %v190 = vld [vmem:[%s166 + $0x3c] sm:$0xf]
      %v191 = vld [vmem:[%s166 + $0x40] sm:$0xf]
      %v192 = vld [vmem:[%s166 + $0x44] sm:$0xf]
      %v193 = vld [vmem:[%s166 + $0x48] sm:$0xf]
      %v194 = vld [vmem:[%s166 + $0x4c] sm:$0xf]
      %v195 = vld [vmem:[%s166 + $0x50] sm:$0xf]
      %v196 = vld [vmem:[%s166 + $0x54] sm:$0xf]
      %v197 = vld [vmem:[%s166 + $0x58] sm:$0xf]
      %v198 = vld [vmem:[%s166 + $0x5c] sm:$0xf]
      %v199 = vld [vmem:[%s166 + $0x60] sm:$0xf]
      %v200 = vld [vmem:[%s166 + $0x64] sm:$0xf]
      %v201 = vld [vmem:[%s166 + $0x68] sm:$0xf]
      %v202 = vld [vmem:[%s166 + $0x6c] sm:$0xf]
      %v203 = vld [vmem:[%s166 + $0x70] sm:$0xf]
      %v204 = vld [vmem:[%s166 + $0x74] sm:$0xf]
      %v205 = vld [vmem:[%s166 + $0x78] sm:$0xf]
      %v206 = vld [vmem:[%s166 + $0x7c] sm:$0xf]
      %v207 = vld [vmem:[%s166 + $0x80] sm:$0xf]
      %v208 = vld [vmem:[%s166 + $0x84] sm:$0xf]
      %v209 = vld [vmem:[%s166 + $0x88] sm:$0xf]
      %v210 = vld [vmem:[%s166 + $0x8c] sm:$0xf]
      %v211 = vld [vmem:[%s166 + $0x90] sm:$0xf]
      %v212 = vld [vmem:[%s166 + $0x94] sm:$0xf]
      %v213 = vld [vmem:[%s166 + $0x98] sm:$0xf]
      %v214 = vld [vmem:[%s166 + $0x9c] sm:$0xf]
      %v215 = vld [vmem:[%s166 + $0xa0] sm:$0xf]
      %v216 = vld [vmem:[%s166 + $0xa4] sm:$0xf]
      %v217 = vld [vmem:[%s166 + $0xa8] sm:$0xf]
      %v218 = vld [vmem:[%s166 + $0xac] sm:$0xf]
      %v219 = vld [vmem:[%s166 + $0xb0] sm:$0xf]
      %v220 = vld [vmem:[%s166 + $0xb4] sm:$0xf]
      %v221 = vld [vmem:[%s166 + $0xb8] sm:$0xf]
      %v222 = vld [vmem:[%s166 + $0xbc] sm:$0xf]
      %v223 = vld [vmem:[%s166 + $0xc0] sm:$0xf]
      %v224 = vld [vmem:[%s166 + $0xc4] sm:$0xf]
      %v225 = vld [vmem:[%s166 + $0xc8] sm:$0xf]
      %v226 = vld [vmem:[%s166 + $0xcc] sm:$0xf]
      %v227 = vld [vmem:[%s166 + $0xd0] sm:$0xf]
      %v228 = vld [vmem:[%s166 + $0xd4] sm:$0xf]
      %v229 = vld [vmem:[%s166 + $0xd8] sm:$0xf]
      %v230 = vld [vmem:[%s166 + $0xdc] sm:$0xf]
      %v231 = vld [vmem:[%s166 + $0xe0] sm:$0xf]
      %v232 = vld [vmem:[%s166 + $0xe4] sm:$0xf]
      %v233 = vld [vmem:[%s166 + $0xe8] sm:$0xf]
      %v234 = vld [vmem:[%s166 + $0xec] sm:$0xf]
      %v235 = vld [vmem:[%s166 + $0xf0] sm:$0xf]
      %v236 = vld [vmem:[%s166 + $0xf4] sm:$0xf]
      %v237 = vld [vmem:[%s166 + $0xf8] sm:$0xf]
      %v238 = vld [vmem:[%s166 + $0xfc] sm:$0xf]
      %v239 = vld [vmem:[%s1] sm:$0xf]
      %v240 = vld [vmem:[%s1 + $0x4] sm:$0xf]
      %v241 = vld [vmem:[%s1 + $0x8] sm:$0xf]
      %v242 = vld [vmem:[%s1 + $0xc] sm:$0xf]
      %v243 = vld [vmem:[%s1 + $0x10] sm:$0xf]
      %v244 = vld [vmem:[%s1 + $0x14] sm:$0xf]
      %v245 = vld [vmem:[%s1 + $0x18] sm:$0xf]
      %v246 = vld [vmem:[%s1 + $0x1c] sm:$0xf]
      %v247 = vld [vmem:[%s1 + $0x20] sm:$0xf]
      %v248 = vld [vmem:[%s1 + $0x24] sm:$0xf]
      %v249 = vld [vmem:[%s1 + $0x28] sm:$0xf]
      %v250 = vld [vmem:[%s1 + $0x2c] sm:$0xf]
      %v251 = vld [vmem:[%s1 + $0x30] sm:$0xf]
      %v252 = vld [vmem:[%s1 + $0x34] sm:$0xf]
      %v253 = vld [vmem:[%s1 + $0x38] sm:$0xf]
      %v254 = vld [vmem:[%s1 + $0x3c] sm:$0xf]
      %v255 = vld [vmem:[%s2] sm:$0x1]
      %v257 = vlaneseq
      %v258 = vshrl.u32 %v257, 7
      %v259 = vsub.s32 0, %v258
      %v260 = vrot.slane %v255, %v259
      %v326 = vunpack.c.l.b16 %v175
      %v327 = vunpack.c.l.b16 %v176
      %v328 = vunpack.c.l.b16 %v177
      %v329 = vunpack.c.l.b16 %v178
      %v330 = vunpack.c.l.b16 %v179
      %v331 = vunpack.c.l.b16 %v180
      %v332 = vunpack.c.l.b16 %v181
      %v333 = vunpack.c.l.b16 %v182
      %v334 = vunpack.c.l.b16 %v183
      %v335 = vunpack.c.l.b16 %v184
      %v336 = vunpack.c.l.b16 %v185
      %v337 = vunpack.c.l.b16 %v186
      %v338 = vunpack.c.l.b16 %v187
      %v339 = vunpack.c.l.b16 %v188
      %v340 = vunpack.c.l.b16 %v189
      %v341 = vunpack.c.l.b16 %v190
      %v342 = vunpack.c.l.b16 %v191
      %v343 = vunpack.c.l.b16 %v192
      %v344 = vunpack.c.l.b16 %v193
      %v345 = vunpack.c.l.b16 %v194
      %v346 = vunpack.c.l.b16 %v195
      %v347 = vunpack.c.l.b16 %v196
      %v348 = vunpack.c.l.b16 %v197
      %v349 = vunpack.c.l.b16 %v198
      %v350 = vunpack.c.l.b16 %v199
      %v351 = vunpack.c.l.b16 %v200
      %v352 = vunpack.c.l.b16 %v201
      %v353 = vunpack.c.l.b16 %v202
      %v354 = vunpack.c.l.b16 %v203
      %v355 = vunpack.c.l.b16 %v204
      %v356 = vunpack.c.l.b16 %v205
      %v357 = vunpack.c.l.b16 %v206
      %v358 = vunpack.c.l.b16 %v207
      %v359 = vunpack.c.l.b16 %v208
      %v360 = vunpack.c.l.b16 %v209
      %v361 = vunpack.c.l.b16 %v210
      %v362 = vunpack.c.l.b16 %v211
      %v363 = vunpack.c.l.b16 %v212
      %v364 = vunpack.c.l.b16 %v213
      %v365 = vunpack.c.l.b16 %v214
      %v366 = vunpack.c.l.b16 %v215
      %v367 = vunpack.c.l.b16 %v216
      %v368 = vunpack.c.l.b16 %v217
      %v369 = vunpack.c.l.b16 %v218
      %v370 = vunpack.c.l.b16 %v219
      %v371 = vunpack.c.l.b16 %v220
      %v372 = vunpack.c.l.b16 %v221
      %v373 = vunpack.c.l.b16 %v222
      %v374 = vunpack.c.l.b16 %v223
      %v375 = vunpack.c.l.b16 %v224
      %v376 = vunpack.c.l.b16 %v225
      %v377 = vunpack.c.l.b16 %v226
      %v378 = vunpack.c.l.b16 %v227
      %v379 = vunpack.c.l.b16 %v228
      %v380 = vunpack.c.l.b16 %v229
      %v381 = vunpack.c.l.b16 %v230
      %v382 = vunpack.c.l.b16 %v231
      %v383 = vunpack.c.l.b16 %v232
      %v384 = vunpack.c.l.b16 %v233
      %v385 = vunpack.c.l.b16 %v234
      %v386 = vunpack.c.l.b16 %v235
      %v387 = vunpack.c.l.b16 %v236
      %v388 = vunpack.c.l.b16 %v237
      %v389 = vunpack.c.l.b16 %v238
      %v390 = vpack.c.b16 %v327, %v326
      %v391 = vpack.c.b16 %v329, %v328
      %v392 = vpack.c.b16 %v331, %v330
      %v393 = vpack.c.b16 %v333, %v332
      %v394 = vpack.c.b16 %v335, %v334
      %v395 = vpack.c.b16 %v337, %v336
      %v396 = vpack.c.b16 %v339, %v338
      %v397 = vpack.c.b16 %v341, %v340
      %v398 = vpack.c.b16 %v343, %v342
      %v399 = vpack.c.b16 %v345, %v344
      %v400 = vpack.c.b16 %v347, %v346
      %v401 = vpack.c.b16 %v349, %v348
      %v402 = vpack.c.b16 %v351, %v350
      %v403 = vpack.c.b16 %v353, %v352
      %v404 = vpack.c.b16 %v355, %v354
      %v405 = vpack.c.b16 %v357, %v356
      %v406 = vpack.c.b16 %v359, %v358
      %v407 = vpack.c.b16 %v361, %v360
      %v408 = vpack.c.b16 %v363, %v362
      %v409 = vpack.c.b16 %v365, %v364
      %v410 = vpack.c.b16 %v367, %v366
      %v411 = vpack.c.b16 %v369, %v368
      %v412 = vpack.c.b16 %v371, %v370
      %v413 = vpack.c.b16 %v373, %v372
      %v414 = vpack.c.b16 %v375, %v374
      %v415 = vpack.c.b16 %v377, %v376
      %v416 = vpack.c.b16 %v379, %v378
      %v417 = vpack.c.b16 %v381, %v380
      %v418 = vpack.c.b16 %v383, %v382
      %v419 = vpack.c.b16 %v385, %v384
      %v420 = vpack.c.b16 %v387, %v386
      %v421 = vpack.c.b16 %v389, %v388
      %v470 = vunpack.c.l.b16 %v239
      %v471 = vunpack.c.l.b16 %v240
      %v472 = vunpack.c.l.b16 %v241
      %v473 = vunpack.c.l.b16 %v242
      %v474 = vunpack.c.l.b16 %v243
      %v475 = vunpack.c.l.b16 %v244
      %v476 = vunpack.c.l.b16 %v245
      %v477 = vunpack.c.l.b16 %v246
      %v478 = vunpack.c.l.b16 %v247
      %v479 = vunpack.c.l.b16 %v248
      %v480 = vunpack.c.l.b16 %v249
      %v481 = vunpack.c.l.b16 %v250
      %v482 = vunpack.c.l.b16 %v251
      %v483 = vunpack.c.l.b16 %v252
      %v484 = vunpack.c.l.b16 %v253
      %v485 = vunpack.c.l.b16 %v254
      %v486 = vpack.c.b16 %v471, %v470
      %v487 = vpack.c.b16 %v473, %v472
      %v488 = vpack.c.b16 %v475, %v474
      %v489 = vpack.c.b16 %v477, %v476
      %v490 = vpack.c.b16 %v479, %v478
      %v491 = vpack.c.b16 %v481, %v480
      %v492 = vpack.c.b16 %v483, %v482
      %v493 = vpack.c.b16 %v485, %v484
      %502 = vmatprep.subr.bf16.mxu0 0
      %503 = vmatpush1.bf16.msra.mxu0 %v486
      %504 = vmatprep.subr.bf16.mxu0 0
      %505 = vmatpush1.bf16.msra.mxu0 %v487
      %506 = vmatprep.subr.bf16.mxu0 0
      %507 = vmatpush1.bf16.msra.mxu0 %v488
      %508 = vmatprep.subr.bf16.mxu0 0
      %509 = vmatpush1.bf16.msra.mxu0 %v489
      %510 = vmatprep.subr.bf16.mxu0 0
      %511 = vmatpush1.bf16.msra.mxu0 %v490
      %512 = vmatprep.subr.bf16.mxu0 0
      %513 = vmatpush1.bf16.msra.mxu0 %v491
      %514 = vmatprep.subr.bf16.mxu0 0
      %515 = vmatpush1.bf16.msra.mxu0 %v492
      %516 = vmatprep.subr.bf16.mxu0 0
      %517 = vmatpush1.bf16.msra.mxu0 %v493
      %518 = vmatprep.subr.bf16.mxu0 0
      %519 = vmatpush1.bf16.msra.mxu0 0
      %520 = vmatprep.subr.bf16.mxu0 0
      %521 = vmatpush1.bf16.msra.mxu0 0
      %522 = vmatprep.subr.bf16.mxu0 0
      %523 = vmatpush1.bf16.msra.mxu0 0
      %524 = vmatprep.subr.bf16.mxu0 0
      %525 = vmatpush1.bf16.msra.mxu0 0
      %526 = vmatprep.subr.bf16.mxu0 0
      %527 = vmatpush1.bf16.msra.mxu0 0
      %528 = vmatprep.subr.bf16.mxu0 0
      %529 = vmatpush1.bf16.msra.mxu0 0
      %530 = vmatprep.subr.bf16.mxu0 0
      %531 = vmatpush1.bf16.msra.mxu0 0
      %532 = vmatprep.subr.bf16.mxu0 0
      %533 = vmatpush1.bf16.msra.mxu0 0
      %534 = vmatprep.mubr.bf16.mxu0 0
      %535 = vmatmul.mubr.bf16.gmra.mrb[0].mxu0 %v390
      %v536 = vpop.f32.mrb[0].mxu0
      %v537 = vadd.f32 %v260, %v536
      %v538 = vpop.f32.mrb[0].mxu0
      %v539 = vpop.f32.mrb[0].mxu0
      %v540 = vadd.f32 %v260, %v539
      %v541 = vpop.f32.mrb[0].mxu0
      %542 = vmatprep.mubr.bf16.mxu0 0
      %543 = vmatmul.mubr.bf16.gmra.mrb[0].mxu0 %v391
      %v544 = vpop.f32.mrb[0].mxu0
      %v545 = vadd.f32 %v260, %v544
      %v546 = vpop.f32.mrb[0].mxu0
      %v547 = vpop.f32.mrb[0].mxu0
      %v548 = vadd.f32 %v260, %v547
      %v549 = vpop.f32.mrb[0].mxu0
      %550 = vmatprep.mubr.bf16.mxu0 0
      %551 = vmatmul.mubr.bf16.gmra.mrb[0].mxu0 %v392
      %v552 = vpop.f32.mrb[0].mxu0
      %v553 = vadd.f32 %v260, %v552
      %v554 = vpop.f32.mrb[0].mxu0
      %v555 = vpop.f32.mrb[0].mxu0
      %v556 = vadd.f32 %v260, %v555
      %v557 = vpop.f32.mrb[0].mxu0
      %558 = vmatprep.mubr.bf16.mxu0 0
      %559 = vmatmul.mubr.bf16.gmra.mrb[0].mxu0 %v393
      %v560 = vpop.f32.mrb[0].mxu0
      %v561 = vadd.f32 %v260, %v560
      %v562 = vpop.f32.mrb[0].mxu0
      %v563 = vpop.f32.mrb[0].mxu0
      %v564 = vadd.f32 %v260, %v563
      %v565 = vpop.f32.mrb[0].mxu0
      %566 = vmatprep.mubr.bf16.mxu0 0
      %567 = vmatmul.mubr.bf16.gmra.mrb[0].mxu0 %v394
      %v568 = vpop.f32.mrb[0].mxu0
      %v569 = vadd.f32 %v260, %v568
      %v570 = vpop.f32.mrb[0].mxu0
      %v571 = vpop.f32.mrb[0].mxu0
      %v572 = vadd.f32 %v260, %v571
      %v573 = vpop.f32.mrb[0].mxu0
      %574 = vmatprep.mubr.bf16.mxu0 0
      %575 = vmatmul.mubr.bf16.gmra.mrb[0].mxu0 %v395
      %v576 = vpop.f32.mrb[0].mxu0
      %v577 = vadd.f32 %v260, %v576
      %v578 = vpop.f32.mrb[0].mxu0
      %v579 = vpop.f32.mrb[0].mxu0
      %v580 = vadd.f32 %v260, %v579
      %v581 = vpop.f32.mrb[0].mxu0
      %582 = vmatprep.mubr.bf16.mxu0 0
      %583 = vmatmul.mubr.bf16.gmra.mrb[0].mxu0 %v396
      %v584 = vpop.f32.mrb[0].mxu0
      %v585 = vadd.f32 %v260, %v584
      %v586 = vpop.f32.mrb[0].mxu0
      %v587 = vpop.f32.mrb[0].mxu0
      %v588 = vadd.f32 %v260, %v587
      %v589 = vpop.f32.mrb[0].mxu0
      %590 = vmatprep.mubr.bf16.mxu0 0
      %591 = vmatmul.mubr.bf16.gmra.mrb[0].mxu0 %v397
      %v592 = vpop.f32.mrb[0].mxu0
      %v593 = vadd.f32 %v260, %v592
      %v594 = vpop.f32.mrb[0].mxu0
      %v595 = vpop.f32.mrb[0].mxu0
      %v596 = vadd.f32 %v260, %v595
      %v597 = vpop.f32.mrb[0].mxu0
      %598 = vmatprep.mubr.bf16.mxu0 0
      %599 = vmatmul.mubr.bf16.gmra.mrb[0].mxu0 %v398
      %v600 = vpop.f32.mrb[0].mxu0
      %v601 = vadd.f32 %v260, %v600
      %v602 = vpop.f32.mrb[0].mxu0
      %v603 = vpop.f32.mrb[0].mxu0
      %v604 = vadd.f32 %v260, %v603
      %v605 = vpop.f32.mrb[0].mxu0
      %606 = vmatprep.mubr.bf16.mxu0 0
      %607 = vmatmul.mubr.bf16.gmra.mrb[0].mxu0 %v399
      %v608 = vpop.f32.mrb[0].mxu0
      %v609 = vadd.f32 %v260, %v608
      %v610 = vpop.f32.mrb[0].mxu0
      %v611 = vpop.f32.mrb[0].mxu0
      %v612 = vadd.f32 %v260, %v611
      %v613 = vpop.f32.mrb[0].mxu0
      %614 = vmatprep.mubr.bf16.mxu0 0
      %615 = vmatmul.mubr.bf16.gmra.mrb[0].mxu0 %v400
      %v616 = vpop.f32.mrb[0].mxu0
      %v617 = vadd.f32 %v260, %v616
      %v618 = vpop.f32.mrb[0].mxu0
      %v619 = vpop.f32.mrb[0].mxu0
      %v620 = vadd.f32 %v260, %v619
      %v621 = vpop.f32.mrb[0].mxu0
      %622 = vmatprep.mubr.bf16.mxu0 0
      %623 = vmatmul.mubr.bf16.gmra.mrb[0].mxu0 %v401
      %v624 = vpop.f32.mrb[0].mxu0
      %v625 = vadd.f32 %v260, %v624
      %v626 = vpop.f32.mrb[0].mxu0
      %v627 = vpop.f32.mrb[0].mxu0
      %v628 = vadd.f32 %v260, %v627
      %v629 = vpop.f32.mrb[0].mxu0
      %630 = vmatprep.mubr.bf16.mxu0 0
      %631 = vmatmul.mubr.bf16.gmra.mrb[0].mxu0 %v402
      %v632 = vpop.f32.mrb[0].mxu0
      %v633 = vadd.f32 %v260, %v632
      %v634 = vpop.f32.mrb[0].mxu0
      %v635 = vpop.f32.mrb[0].mxu0
      %v636 = vadd.f32 %v260, %v635
      %v637 = vpop.f32.mrb[0].mxu0
      %638 = vmatprep.mubr.bf16.mxu0 0
      %639 = vmatmul.mubr.bf16.gmra.mrb[0].mxu0 %v403
      %v640 = vpop.f32.mrb[0].mxu0
      %v641 = vadd.f32 %v260, %v640
      %v642 = vpop.f32.mrb[0].mxu0
      %v643 = vpop.f32.mrb[0].mxu0
      %v644 = vadd.f32 %v260, %v643
      %v645 = vpop.f32.mrb[0].mxu0
      %646 = vmatprep.mubr.bf16.mxu0 0
      %647 = vmatmul.mubr.bf16.gmra.mrb[0].mxu0 %v404
      %v648 = vpop.f32.mrb[0].mxu0
      %v649 = vadd.f32 %v260, %v648
      %v650 = vpop.f32.mrb[0].mxu0
      %v651 = vpop.f32.mrb[0].mxu0
      %v652 = vadd.f32 %v260, %v651
      %v653 = vpop.f32.mrb[0].mxu0
      %654 = vmatprep.mubr.bf16.mxu0 0
      %655 = vmatmul.mubr.bf16.gmra.mrb[0].mxu0 %v405
      %v656 = vpop.f32.mrb[0].mxu0
      %v657 = vadd.f32 %v260, %v656
      %v658 = vpop.f32.mrb[0].mxu0
      %v659 = vpop.f32.mrb[0].mxu0
      %v660 = vadd.f32 %v260, %v659
      %v661 = vpop.f32.mrb[0].mxu0
      %662 = vmatprep.mubr.bf16.mxu0 0
      %663 = vmatmul.mubr.bf16.gmra.mrb[0].mxu0 %v406
      %v664 = vpop.f32.mrb[0].mxu0
      %v665 = vadd.f32 %v260, %v664
      %v666 = vpop.f32.mrb[0].mxu0
      %v667 = vpop.f32.mrb[0].mxu0
      %v668 = vadd.f32 %v260, %v667
      %v669 = vpop.f32.mrb[0].mxu0
      %670 = vmatprep.mubr.bf16.mxu0 0
      %671 = vmatmul.mubr.bf16.gmra.mrb[0].mxu0 %v407
      %v672 = vpop.f32.mrb[0].mxu0
      %v673 = vadd.f32 %v260, %v672
      %v674 = vpop.f32.mrb[0].mxu0
      %v675 = vpop.f32.mrb[0].mxu0
      %v676 = vadd.f32 %v260, %v675
      %v677 = vpop.f32.mrb[0].mxu0
      %678 = vmatprep.mubr.bf16.mxu0 0
      %679 = vmatmul.mubr.bf16.gmra.mrb[0].mxu0 %v408
      %v680 = vpop.f32.mrb[0].mxu0
      %v681 = vadd.f32 %v260, %v680
      %v682 = vpop.f32.mrb[0].mxu0
      %v683 = vpop.f32.mrb[0].mxu0
      %v684 = vadd.f32 %v260, %v683
      %v685 = vpop.f32.mrb[0].mxu0
      %686 = vmatprep.mubr.bf16.mxu0 0
      %687 = vmatmul.mubr.bf16.gmra.mrb[0].mxu0 %v409
      %v688 = vpop.f32.mrb[0].mxu0
      %v689 = vadd.f32 %v260, %v688
      %v690 = vpop.f32.mrb[0].mxu0
      %v691 = vpop.f32.mrb[0].mxu0
      %v692 = vadd.f32 %v260, %v691
      %v693 = vpop.f32.mrb[0].mxu0
      %694 = vmatprep.mubr.bf16.mxu0 0
      %695 = vmatmul.mubr.bf16.gmra.mrb[0].mxu0 %v410
      %v696 = vpop.f32.mrb[0].mxu0
      %v697 = vadd.f32 %v260, %v696
      %v698 = vpop.f32.mrb[0].mxu0
      %v699 = vpop.f32.mrb[0].mxu0
      %v700 = vadd.f32 %v260, %v699
      %v701 = vpop.f32.mrb[0].mxu0
      %702 = vmatprep.mubr.bf16.mxu0 0
      %703 = vmatmul.mubr.bf16.gmra.mrb[0].mxu0 %v411
      %v704 = vpop.f32.mrb[0].mxu0
      %v705 = vadd.f32 %v260, %v704
      %v706 = vpop.f32.mrb[0].mxu0
      %v707 = vpop.f32.mrb[0].mxu0
      %v708 = vadd.f32 %v260, %v707
      %v709 = vpop.f32.mrb[0].mxu0
      %710 = vmatprep.mubr.bf16.mxu0 0
      %711 = vmatmul.mubr.bf16.gmra.mrb[0].mxu0 %v412
      %v712 = vpop.f32.mrb[0].mxu0
      %v713 = vadd.f32 %v260, %v712
      %v714 = vpop.f32.mrb[0].mxu0
      %v715 = vpop.f32.mrb[0].mxu0
      %v716 = vadd.f32 %v260, %v715
      %v717 = vpop.f32.mrb[0].mxu0
      %718 = vmatprep.mubr.bf16.mxu0 0
      %719 = vmatmul.mubr.bf16.gmra.mrb[0].mxu0 %v413
      %v720 = vpop.f32.mrb[0].mxu0
      %v721 = vadd.f32 %v260, %v720
      %v722 = vpop.f32.mrb[0].mxu0
      %v723 = vpop.f32.mrb[0].mxu0
      %v724 = vadd.f32 %v260, %v723
      %v725 = vpop.f32.mrb[0].mxu0
      %726 = vmatprep.mubr.bf16.mxu0 0
      %727 = vmatmul.mubr.bf16.gmra.mrb[0].mxu0 %v414
      %v728 = vpop.f32.mrb[0].mxu0
      %v729 = vadd.f32 %v260, %v728
      %v730 = vpop.f32.mrb[0].mxu0
      %v731 = vpop.f32.mrb[0].mxu0
      %v732 = vadd.f32 %v260, %v731
      %v733 = vpop.f32.mrb[0].mxu0
      %734 = vmatprep.mubr.bf16.mxu0 0
      %735 = vmatmul.mubr.bf16.gmra.mrb[0].mxu0 %v415
      %v736 = vpop.f32.mrb[0].mxu0
      %v737 = vadd.f32 %v260, %v736
      %v738 = vpop.f32.mrb[0].mxu0
      %v739 = vpop.f32.mrb[0].mxu0
      %v740 = vadd.f32 %v260, %v739
      %v741 = vpop.f32.mrb[0].mxu0
      %742 = vmatprep.mubr.bf16.mxu0 0
      %743 = vmatmul.mubr.bf16.gmra.mrb[0].mxu0 %v416
      %v744 = vpop.f32.mrb[0].mxu0
      %v745 = vadd.f32 %v260, %v744
      %v746 = vpop.f32.mrb[0].mxu0
      %v747 = vpop.f32.mrb[0].mxu0
      %v748 = vadd.f32 %v260, %v747
      %v749 = vpop.f32.mrb[0].mxu0
      %750 = vmatprep.mubr.bf16.mxu0 0
      %751 = vmatmul.mubr.bf16.gmra.mrb[0].mxu0 %v417
      %v752 = vpop.f32.mrb[0].mxu0
      %v753 = vadd.f32 %v260, %v752
      %v754 = vpop.f32.mrb[0].mxu0
      %v755 = vpop.f32.mrb[0].mxu0
      %v756 = vadd.f32 %v260, %v755
      %v757 = vpop.f32.mrb[0].mxu0
      %758 = vmatprep.mubr.bf16.mxu0 0
      %759 = vmatmul.mubr.bf16.gmra.mrb[0].mxu0 %v418
      %v760 = vpop.f32.mrb[0].mxu0
      %v761 = vadd.f32 %v260, %v760
      %v762 = vpop.f32.mrb[0].mxu0
      %v763 = vpop.f32.mrb[0].mxu0
      %v764 = vadd.f32 %v260, %v763
      %v765 = vpop.f32.mrb[0].mxu0
      %766 = vmatprep.mubr.bf16.mxu0 0
      %767 = vmatmul.mubr.bf16.gmra.mrb[0].mxu0 %v419
      %v768 = vpop.f32.mrb[0].mxu0
      %v769 = vadd.f32 %v260, %v768
      %v770 = vpop.f32.mrb[0].mxu0
      %v771 = vpop.f32.mrb[0].mxu0
      %v772 = vadd.f32 %v260, %v771
      %v773 = vpop.f32.mrb[0].mxu0
      %774 = vmatprep.mubr.bf16.mxu0 0
      %775 = vmatmul.mubr.bf16.gmra.mrb[0].mxu0 %v420
      %v776 = vpop.f32.mrb[0].mxu0
      %v777 = vadd.f32 %v260, %v776
      %v778 = vpop.f32.mrb[0].mxu0
      %v779 = vpop.f32.mrb[0].mxu0
      %v780 = vadd.f32 %v260, %v779
      %v781 = vpop.f32.mrb[0].mxu0
      %782 = vmatprep.mubr.bf16.mxu0 0
      %783 = vmatmul.mubr.bf16.gmra.mrb[0].mxu0 %v421
      %v784 = vpop.f32.mrb[0].mxu0
      %v785 = vadd.f32 %v260, %v784
      %v786 = vpop.f32.mrb[0].mxu0
      %v787 = vpop.f32.mrb[0].mxu0
      %v788 = vadd.f32 %v260, %v787
      %v789 = vpop.f32.mrb[0].mxu0
      %790 = vdwg.mxu0
      %vm791 = vcmp.gt.f32.partialorder %v537, 0.0
      %vm792 = vcmp.gt.f32.partialorder %v540, 0.0
      %vm793 = vcmp.gt.f32.partialorder %v545, 0.0
      %vm794 = vcmp.gt.f32.partialorder %v548, 0.0
      %vm795 = vcmp.gt.f32.partialorder %v553, 0.0
      %vm796 = vcmp.gt.f32.partialorder %v556, 0.0
      %vm797 = vcmp.gt.f32.partialorder %v561, 0.0
      %vm798 = vcmp.gt.f32.partialorder %v564, 0.0
      %vm799 = vcmp.gt.f32.partialorder %v569, 0.0
      %vm800 = vcmp.gt.f32.partialorder %v572, 0.0
      %vm801 = vcmp.gt.f32.partialorder %v577, 0.0
      %vm802 = vcmp.gt.f32.partialorder %v580, 0.0
      %vm803 = vcmp.gt.f32.partialorder %v585, 0.0
      %vm804 = vcmp.gt.f32.partialorder %v588, 0.0
      %vm805 = vcmp.gt.f32.partialorder %v593, 0.0
      %vm806 = vcmp.gt.f32.partialorder %v596, 0.0
      %vm807 = vcmp.gt.f32.partialorder %v601, 0.0
      %vm808 = vcmp.gt.f32.partialorder %v604, 0.0
      %vm809 = vcmp.gt.f32.partialorder %v609, 0.0
      %vm810 = vcmp.gt.f32.partialorder %v612, 0.0
      %vm811 = vcmp.gt.f32.partialorder %v617, 0.0
      %vm812 = vcmp.gt.f32.partialorder %v620, 0.0
      %vm813 = vcmp.gt.f32.partialorder %v625, 0.0
      %vm814 = vcmp.gt.f32.partialorder %v628, 0.0
      %vm815 = vcmp.gt.f32.partialorder %v633, 0.0
      %vm816 = vcmp.gt.f32.partialorder %v636, 0.0
      %vm817 = vcmp.gt.f32.partialorder %v641, 0.0
      %vm818 = vcmp.gt.f32.partialorder %v644, 0.0
      %vm819 = vcmp.gt.f32.partialorder %v649, 0.0
      %vm820 = vcmp.gt.f32.partialorder %v652, 0.0
      %vm821 = vcmp.gt.f32.partialorder %v657, 0.0
      %vm822 = vcmp.gt.f32.partialorder %v660, 0.0
      %vm823 = vcmp.gt.f32.partialorder %v665, 0.0
      %vm824 = vcmp.gt.f32.partialorder %v668, 0.0
      %vm825 = vcmp.gt.f32.partialorder %v673, 0.0
      %vm826 = vcmp.gt.f32.partialorder %v676, 0.0
      %vm827 = vcmp.gt.f32.partialorder %v681, 0.0
      %vm828 = vcmp.gt.f32.partialorder %v684, 0.0
      %vm829 = vcmp.gt.f32.partialorder %v689, 0.0
      %vm830 = vcmp.gt.f32.partialorder %v692, 0.0
      %vm831 = vcmp.gt.f32.partialorder %v697, 0.0
      %vm832 = vcmp.gt.f32.partialorder %v700, 0.0
      %vm833 = vcmp.gt.f32.partialorder %v705, 0.0
      %vm834 = vcmp.gt.f32.partialorder %v708, 0.0
      %vm835 = vcmp.gt.f32.partialorder %v713, 0.0
      %vm836 = vcmp.gt.f32.partialorder %v716, 0.0
      %vm837 = vcmp.gt.f32.partialorder %v721, 0.0
      %vm838 = vcmp.gt.f32.partialorder %v724, 0.0
      %vm839 = vcmp.gt.f32.partialorder %v729, 0.0
      %vm840 = vcmp.gt.f32.partialorder %v732, 0.0
      %vm841 = vcmp.gt.f32.partialorder %v737, 0.0
      %vm842 = vcmp.gt.f32.partialorder %v740, 0.0
      %vm843 = vcmp.gt.f32.partialorder %v745, 0.0
      %vm844 = vcmp.gt.f32.partialorder %v748, 0.0
      %vm845 = vcmp.gt.f32.partialorder %v753, 0.0
      %vm846 = vcmp.gt.f32.partialorder %v756, 0.0
      %vm847 = vcmp.gt.f32.partialorder %v761, 0.0
      %vm848 = vcmp.gt.f32.partialorder %v764, 0.0
      %vm849 = vcmp.gt.f32.partialorder %v769, 0.0
      %vm850 = vcmp.gt.f32.partialorder %v772, 0.0
      %vm851 = vcmp.gt.f32.partialorder %v777, 0.0
      %vm852 = vcmp.gt.f32.partialorder %v780, 0.0
      %vm853 = vcmp.gt.f32.partialorder %v785, 0.0
      %vm854 = vcmp.gt.f32.partialorder %v788, 0.0
      %v855 = vmul.f32 %v537, 0.2
      %v856 = vmul.f32 %v540, 0.2
      %v857 = vmul.f32 %v545, 0.2
      %v858 = vmul.f32 %v548, 0.2
      %v859 = vmul.f32 %v553, 0.2
      %v860 = vmul.f32 %v556, 0.2
      %v861 = vmul.f32 %v561, 0.2
      %v862 = vmul.f32 %v564, 0.2
      %v863 = vmul.f32 %v569, 0.2
      %v864 = vmul.f32 %v572, 0.2
      %v865 = vmul.f32 %v577, 0.2
      %v866 = vmul.f32 %v580, 0.2
      %v867 = vmul.f32 %v585, 0.2
      %v868 = vmul.f32 %v588, 0.2
      %v869 = vmul.f32 %v593, 0.2
      %v870 = vmul.f32 %v596, 0.2
      %v871 = vmul.f32 %v601, 0.2
      %v872 = vmul.f32 %v604, 0.2
      %v873 = vmul.f32 %v609, 0.2
      %v874 = vmul.f32 %v612, 0.2
      %v875 = vmul.f32 %v617, 0.2
      %v876 = vmul.f32 %v620, 0.2
      %v877 = vmul.f32 %v625, 0.2
      %v878 = vmul.f32 %v628, 0.2
      %v879 = vmul.f32 %v633, 0.2
      %v880 = vmul.f32 %v636, 0.2
      %v881 = vmul.f32 %v641, 0.2
      %v882 = vmul.f32 %v644, 0.2
      %v883 = vmul.f32 %v649, 0.2
      %v884 = vmul.f32 %v652, 0.2
      %v885 = vmul.f32 %v657, 0.2
      %v886 = vmul.f32 %v660, 0.2
      %v887 = vmul.f32 %v665, 0.2
      %v888 = vmul.f32 %v668, 0.2
      %v889 = vmul.f32 %v673, 0.2
      %v890 = vmul.f32 %v676, 0.2
      %v891 = vmul.f32 %v681, 0.2
      %v892 = vmul.f32 %v684, 0.2
      %v893 = vmul.f32 %v689, 0.2
      %v894 = vmul.f32 %v692, 0.2
      %v895 = vmul.f32 %v697, 0.2
      %v896 = vmul.f32 %v700, 0.2
      %v897 = vmul.f32 %v705, 0.2
      %v898 = vmul.f32 %v708, 0.2
      %v899 = vmul.f32 %v713, 0.2
      %v900 = vmul.f32 %v716, 0.2
      %v901 = vmul.f32 %v721, 0.2
      %v902 = vmul.f32 %v724, 0.2
      %v903 = vmul.f32 %v729, 0.2
      %v904 = vmul.f32 %v732, 0.2
      %v905 = vmul.f32 %v737, 0.2
      %v906 = vmul.f32 %v740, 0.2
      %v907 = vmul.f32 %v745, 0.2
      %v908 = vmul.f32 %v748, 0.2
      %v909 = vmul.f32 %v753, 0.2
      %v910 = vmul.f32 %v756, 0.2
      %v911 = vmul.f32 %v761, 0.2
      %v912 = vmul.f32 %v764, 0.2
      %v913 = vmul.f32 %v769, 0.2
      %v914 = vmul.f32 %v772, 0.2
      %v915 = vmul.f32 %v777, 0.2
      %v916 = vmul.f32 %v780, 0.2
      %v917 = vmul.f32 %v785, 0.2
      %v918 = vmul.f32 %v788, 0.2
      %v919 = vsel %vm791, %v537, %v855
      %v920 = vsel %vm792, %v540, %v856
      %v921 = vsel %vm793, %v545, %v857
      %v922 = vsel %vm794, %v548, %v858
      %v923 = vsel %vm795, %v553, %v859
      %v924 = vsel %vm796, %v556, %v860
      %v925 = vsel %vm797, %v561, %v861
      %v926 = vsel %vm798, %v564, %v862
      %v927 = vsel %vm799, %v569, %v863
      %v928 = vsel %vm800, %v572, %v864
      %v929 = vsel %vm801, %v577, %v865
      %v930 = vsel %vm802, %v580, %v866
      %v931 = vsel %vm803, %v585, %v867
      %v932 = vsel %vm804, %v588, %v868
      %v933 = vsel %vm805, %v593, %v869
      %v934 = vsel %vm806, %v596, %v870
      %v935 = vsel %vm807, %v601, %v871
      %v936 = vsel %vm808, %v604, %v872
      %v937 = vsel %vm809, %v609, %v873
      %v938 = vsel %vm810, %v612, %v874
      %v939 = vsel %vm811, %v617, %v875
      %v940 = vsel %vm812, %v620, %v876
      %v941 = vsel %vm813, %v625, %v877
      %v942 = vsel %vm814, %v628, %v878
      %v943 = vsel %vm815, %v633, %v879
      %v944 = vsel %vm816, %v636, %v880
      %v945 = vsel %vm817, %v641, %v881
      %v946 = vsel %vm818, %v644, %v882
      %v947 = vsel %vm819, %v649, %v883
      %v948 = vsel %vm820, %v652, %v884
      %v949 = vsel %vm821, %v657, %v885
      %v950 = vsel %vm822, %v660, %v886
      %v951 = vsel %vm823, %v665, %v887
      %v952 = vsel %vm824, %v668, %v888
      %v953 = vsel %vm825, %v673, %v889
      %v954 = vsel %vm826, %v676, %v890
      %v955 = vsel %vm827, %v681, %v891
      %v956 = vsel %vm828, %v684, %v892
      %v957 = vsel %vm829, %v689, %v893
      %v958 = vsel %vm830, %v692, %v894
      %v959 = vsel %vm831, %v697, %v895
      %v960 = vsel %vm832, %v700, %v896
      %v961 = vsel %vm833, %v705, %v897
      %v962 = vsel %vm834, %v708, %v898
      %v963 = vsel %vm835, %v713, %v899
      %v964 = vsel %vm836, %v716, %v900
      %v965 = vsel %vm837, %v721, %v901
      %v966 = vsel %vm838, %v724, %v902
      %v967 = vsel %vm839, %v729, %v903
      %v968 = vsel %vm840, %v732, %v904
      %v969 = vsel %vm841, %v737, %v905
      %v970 = vsel %vm842, %v740, %v906
      %v971 = vsel %vm843, %v745, %v907
      %v972 = vsel %vm844, %v748, %v908
      %v973 = vsel %vm845, %v753, %v909
      %v974 = vsel %vm846, %v756, %v910
      %v975 = vsel %vm847, %v761, %v911
      %v976 = vsel %vm848, %v764, %v912
      %v977 = vsel %vm849, %v769, %v913
      %v978 = vsel %vm850, %v772, %v914
      %v979 = vsel %vm851, %v777, %v915
      %v980 = vsel %vm852, %v780, %v916
      %v981 = vsel %vm853, %v785, %v917
      %v982 = vsel %vm854, %v788, %v918
      %v983 = vpack.c.bf16 %v920, %v919
      %v984 = vpack.c.bf16 %v922, %v921
      %v985 = vpack.c.bf16 %v924, %v923
      %v986 = vpack.c.bf16 %v926, %v925
      %v987 = vpack.c.bf16 %v928, %v927
      %v988 = vpack.c.bf16 %v930, %v929
      %v989 = vpack.c.bf16 %v932, %v931
      %v990 = vpack.c.bf16 %v934, %v933
      %v991 = vpack.c.bf16 %v936, %v935
      %v992 = vpack.c.bf16 %v938, %v937
      %v993 = vpack.c.bf16 %v940, %v939
      %v994 = vpack.c.bf16 %v942, %v941
      %v995 = vpack.c.bf16 %v944, %v943
      %v996 = vpack.c.bf16 %v946, %v945
      %v997 = vpack.c.bf16 %v948, %v947
      %v998 = vpack.c.bf16 %v950, %v949
      %v999 = vpack.c.bf16 %v952, %v951
      %v1000 = vpack.c.bf16 %v954, %v953
      %v1001 = vpack.c.bf16 %v956, %v955
      %v1002 = vpack.c.bf16 %v958, %v957
      %v1003 = vpack.c.bf16 %v960, %v959
      %v1004 = vpack.c.bf16 %v962, %v961
      %v1005 = vpack.c.bf16 %v964, %v963
      %v1006 = vpack.c.bf16 %v966, %v965
      %v1007 = vpack.c.bf16 %v968, %v967
      %v1008 = vpack.c.bf16 %v970, %v969
      %v1009 = vpack.c.bf16 %v972, %v971
      %v1010 = vpack.c.bf16 %v974, %v973
      %v1011 = vpack.c.bf16 %v976, %v975
      %v1012 = vpack.c.bf16 %v978, %v977
      %v1013 = vpack.c.bf16 %v980, %v979
      %v1014 = vpack.c.bf16 %v982, %v981
      %v1047 = vunpack.c.l.b16 %v983
      %v1048 = vunpack.c.h.b16 %v983
      %v1049 = vunpack.c.l.b16 %v984
      %v1050 = vunpack.c.h.b16 %v984
      %v1051 = vunpack.c.l.b16 %v985
      %v1052 = vunpack.c.h.b16 %v985
      %v1053 = vunpack.c.l.b16 %v986
      %v1054 = vunpack.c.h.b16 %v986
      %v1055 = vunpack.c.l.b16 %v987
      %v1056 = vunpack.c.h.b16 %v987
      %v1057 = vunpack.c.l.b16 %v988
      %v1058 = vunpack.c.h.b16 %v988
      %v1059 = vunpack.c.l.b16 %v989
      %v1060 = vunpack.c.h.b16 %v989
      %v1061 = vunpack.c.l.b16 %v990
      %v1062 = vunpack.c.h.b16 %v990
      %v1063 = vunpack.c.l.b16 %v991
      %v1064 = vunpack.c.h.b16 %v991
      %v1065 = vunpack.c.l.b16 %v992
      %v1066 = vunpack.c.h.b16 %v992
      %v1067 = vunpack.c.l.b16 %v993
      %v1068 = vunpack.c.h.b16 %v993
      %v1069 = vunpack.c.l.b16 %v994
      %v1070 = vunpack.c.h.b16 %v994
      %v1071 = vunpack.c.l.b16 %v995
      %v1072 = vunpack.c.h.b16 %v995
      %v1073 = vunpack.c.l.b16 %v996
      %v1074 = vunpack.c.h.b16 %v996
      %v1075 = vunpack.c.l.b16 %v997
      %v1076 = vunpack.c.h.b16 %v997
      %v1077 = vunpack.c.l.b16 %v998
      %v1078 = vunpack.c.h.b16 %v998
      %v1079 = vunpack.c.l.b16 %v999
      %v1080 = vunpack.c.h.b16 %v999
      %v1081 = vunpack.c.l.b16 %v1000
      %v1082 = vunpack.c.h.b16 %v1000
      %v1083 = vunpack.c.l.b16 %v1001
      %v1084 = vunpack.c.h.b16 %v1001
      %v1085 = vunpack.c.l.b16 %v1002
      %v1086 = vunpack.c.h.b16 %v1002
      %v1087 = vunpack.c.l.b16 %v1003
      %v1088 = vunpack.c.h.b16 %v1003
      %v1089 = vunpack.c.l.b16 %v1004
      %v1090 = vunpack.c.h.b16 %v1004
      %v1091 = vunpack.c.l.b16 %v1005
      %v1092 = vunpack.c.h.b16 %v1005
      %v1093 = vunpack.c.l.b16 %v1006
      %v1094 = vunpack.c.h.b16 %v1006
      %v1095 = vunpack.c.l.b16 %v1007
      %v1096 = vunpack.c.h.b16 %v1007
      %v1097 = vunpack.c.l.b16 %v1008
      %v1098 = vunpack.c.h.b16 %v1008
      %v1099 = vunpack.c.l.b16 %v1009
      %v1100 = vunpack.c.h.b16 %v1009
      %v1101 = vunpack.c.l.b16 %v1010
      %v1102 = vunpack.c.h.b16 %v1010
      %v1103 = vunpack.c.l.b16 %v1011
      %v1104 = vunpack.c.h.b16 %v1011
      %v1105 = vunpack.c.l.b16 %v1012
      %v1106 = vunpack.c.h.b16 %v1012
      %v1107 = vunpack.c.l.b16 %v1013
      %v1108 = vunpack.c.h.b16 %v1013
      %v1109 = vunpack.c.l.b16 %v1014
      %v1110 = vunpack.c.h.b16 %v1014
      %v1111 = vpack.c.b16 %v1047, %v1047
      %v1112 = vpack.c.b16 %v1048, %v1048
      %v1113 = vpack.c.b16 %v1049, %v1049
      %v1114 = vpack.c.b16 %v1050, %v1050
      %v1115 = vpack.c.b16 %v1051, %v1051
      %v1116 = vpack.c.b16 %v1052, %v1052
      %v1117 = vpack.c.b16 %v1053, %v1053
      %v1118 = vpack.c.b16 %v1054, %v1054
      %v1119 = vpack.c.b16 %v1055, %v1055
      %v1120 = vpack.c.b16 %v1056, %v1056
      %v1121 = vpack.c.b16 %v1057, %v1057
      %v1122 = vpack.c.b16 %v1058, %v1058
      %v1123 = vpack.c.b16 %v1059, %v1059
      %v1124 = vpack.c.b16 %v1060, %v1060
      %v1125 = vpack.c.b16 %v1061, %v1061
      %v1126 = vpack.c.b16 %v1062, %v1062
      %v1127 = vpack.c.b16 %v1063, %v1063
      %v1128 = vpack.c.b16 %v1064, %v1064
      %v1129 = vpack.c.b16 %v1065, %v1065
      %v1130 = vpack.c.b16 %v1066, %v1066
      %v1131 = vpack.c.b16 %v1067, %v1067
      %v1132 = vpack.c.b16 %v1068, %v1068
      %v1133 = vpack.c.b16 %v1069, %v1069
      %v1134 = vpack.c.b16 %v1070, %v1070
      %v1135 = vpack.c.b16 %v1071, %v1071
      %v1136 = vpack.c.b16 %v1072, %v1072
      %v1137 = vpack.c.b16 %v1073, %v1073
      %v1138 = vpack.c.b16 %v1074, %v1074
      %v1139 = vpack.c.b16 %v1075, %v1075
      %v1140 = vpack.c.b16 %v1076, %v1076
      %v1141 = vpack.c.b16 %v1077, %v1077
      %v1142 = vpack.c.b16 %v1078, %v1078
      %v1143 = vpack.c.b16 %v1079, %v1079
      %v1144 = vpack.c.b16 %v1080, %v1080
      %v1145 = vpack.c.b16 %v1081, %v1081
      %v1146 = vpack.c.b16 %v1082, %v1082
      %v1147 = vpack.c.b16 %v1083, %v1083
      %v1148 = vpack.c.b16 %v1084, %v1084
      %v1149 = vpack.c.b16 %v1085, %v1085
      %v1150 = vpack.c.b16 %v1086, %v1086
      %v1151 = vpack.c.b16 %v1087, %v1087
      %v1152 = vpack.c.b16 %v1088, %v1088
      %v1153 = vpack.c.b16 %v1089, %v1089
      %v1154 = vpack.c.b16 %v1090, %v1090
      %v1155 = vpack.c.b16 %v1091, %v1091
      %v1156 = vpack.c.b16 %v1092, %v1092
      %v1157 = vpack.c.b16 %v1093, %v1093
      %v1158 = vpack.c.b16 %v1094, %v1094
      %v1159 = vpack.c.b16 %v1095, %v1095
      %v1160 = vpack.c.b16 %v1096, %v1096
      %v1161 = vpack.c.b16 %v1097, %v1097
      %v1162 = vpack.c.b16 %v1098, %v1098
      %v1163 = vpack.c.b16 %v1099, %v1099
      %v1164 = vpack.c.b16 %v1100, %v1100
      %v1165 = vpack.c.b16 %v1101, %v1101
      %v1166 = vpack.c.b16 %v1102, %v1102
      %v1167 = vpack.c.b16 %v1103, %v1103
      %v1168 = vpack.c.b16 %v1104, %v1104
      %v1169 = vpack.c.b16 %v1105, %v1105
      %v1170 = vpack.c.b16 %v1106, %v1106
      %v1171 = vpack.c.b16 %v1107, %v1107
      %v1172 = vpack.c.b16 %v1108, %v1108
      %v1173 = vpack.c.b16 %v1109, %v1109
      %v1174 = vpack.c.b16 %v1110, %v1110
      %1239 = vst [vmem:[%s172] sm:$0xf] %v1111
      %1240 = vst [vmem:[%s172 + $0x4] sm:$0xf] %v1112
      %1241 = vst [vmem:[%s172 + $0x8] sm:$0xf] %v1113
      %1242 = vst [vmem:[%s172 + $0xc] sm:$0xf] %v1114
      %1243 = vst [vmem:[%s172 + $0x10] sm:$0xf] %v1115
      %1244 = vst [vmem:[%s172 + $0x14] sm:$0xf] %v1116
      %1245 = vst [vmem:[%s172 + $0x18] sm:$0xf] %v1117
      %1246 = vst [vmem:[%s172 + $0x1c] sm:$0xf] %v1118
      %1247 = vst [vmem:[%s172 + $0x20] sm:$0xf] %v1119
      %1248 = vst [vmem:[%s172 + $0x24] sm:$0xf] %v1120
      %1249 = vst [vmem:[%s172 + $0x28] sm:$0xf] %v1121
      %1250 = vst [vmem:[%s172 + $0x2c] sm:$0xf] %v1122
      %1251 = vst [vmem:[%s172 + $0x30] sm:$0xf] %v1123
      %1252 = vst [vmem:[%s172 + $0x34] sm:$0xf] %v1124
      %1253 = vst [vmem:[%s172 + $0x38] sm:$0xf] %v1125
      %1254 = vst [vmem:[%s172 + $0x3c] sm:$0xf] %v1126
      %1255 = vst [vmem:[%s172 + $0x40] sm:$0xf] %v1127
      %1256 = vst [vmem:[%s172 + $0x44] sm:$0xf] %v1128
      %1257 = vst [vmem:[%s172 + $0x48] sm:$0xf] %v1129
      %1258 = vst [vmem:[%s172 + $0x4c] sm:$0xf] %v1130
      %1259 = vst [vmem:[%s172 + $0x50] sm:$0xf] %v1131
      %1260 = vst [vmem:[%s172 + $0x54] sm:$0xf] %v1132
      %1261 = vst [vmem:[%s172 + $0x58] sm:$0xf] %v1133
      %1262 = vst [vmem:[%s172 + $0x5c] sm:$0xf] %v1134
      %1263 = vst [vmem:[%s172 + $0x60] sm:$0xf] %v1135
      %1264 = vst [vmem:[%s172 + $0x64] sm:$0xf] %v1136
      %1265 = vst [vmem:[%s172 + $0x68] sm:$0xf] %v1137
      %1266 = vst [vmem:[%s172 + $0x6c] sm:$0xf] %v1138
      %1267 = vst [vmem:[%s172 + $0x70] sm:$0xf] %v1139
      %1268 = vst [vmem:[%s172 + $0x74] sm:$0xf] %v1140
      %1269 = vst [vmem:[%s172 + $0x78] sm:$0xf] %v1141
      %1270 = vst [vmem:[%s172 + $0x7c] sm:$0xf] %v1142
      %1271 = vst [vmem:[%s172 + $0x80] sm:$0xf] %v1143
      %1272 = vst [vmem:[%s172 + $0x84] sm:$0xf] %v1144
      %1273 = vst [vmem:[%s172 + $0x88] sm:$0xf] %v1145
      %1274 = vst [vmem:[%s172 + $0x8c] sm:$0xf] %v1146
      %1275 = vst [vmem:[%s172 + $0x90] sm:$0xf] %v1147
      %1276 = vst [vmem:[%s172 + $0x94] sm:$0xf] %v1148
      %1277 = vst [vmem:[%s172 + $0x98] sm:$0xf] %v1149
      %1278 = vst [vmem:[%s172 + $0x9c] sm:$0xf] %v1150
      %1279 = vst [vmem:[%s172 + $0xa0] sm:$0xf] %v1151
      %1280 = vst [vmem:[%s172 + $0xa4] sm:$0xf] %v1152
      %1281 = vst [vmem:[%s172 + $0xa8] sm:$0xf] %v1153
      %1282 = vst [vmem:[%s172 + $0xac] sm:$0xf] %v1154
      %1283 = vst [vmem:[%s172 + $0xb0] sm:$0xf] %v1155
      %1284 = vst [vmem:[%s172 + $0xb4] sm:$0xf] %v1156
      %1285 = vst [vmem:[%s172 + $0xb8] sm:$0xf] %v1157
      %1286 = vst [vmem:[%s172 + $0xbc] sm:$0xf] %v1158
      %1287 = vst [vmem:[%s172 + $0xc0] sm:$0xf] %v1159
      %1288 = vst [vmem:[%s172 + $0xc4] sm:$0xf] %v1160
      %1289 = vst [vmem:[%s172 + $0xc8] sm:$0xf] %v1161
      %1290 = vst [vmem:[%s172 + $0xcc] sm:$0xf] %v1162
      %1291 = vst [vmem:[%s172 + $0xd0] sm:$0xf] %v1163
      %1292 = vst [vmem:[%s172 + $0xd4] sm:$0xf] %v1164
      %1293 = vst [vmem:[%s172 + $0xd8] sm:$0xf] %v1165
      %1294 = vst [vmem:[%s172 + $0xdc] sm:$0xf] %v1166
      %1295 = vst [vmem:[%s172 + $0xe0] sm:$0xf] %v1167
      %1296 = vst [vmem:[%s172 + $0xe4] sm:$0xf] %v1168
      %1297 = vst [vmem:[%s172 + $0xe8] sm:$0xf] %v1169
      %1298 = vst [vmem:[%s172 + $0xec] sm:$0xf] %v1170
      %1299 = vst [vmem:[%s172 + $0xf0] sm:$0xf] %v1171
      %1300 = vst [vmem:[%s172 + $0xf4] sm:$0xf] %v1172
      %1301 = vst [vmem:[%s172 + $0xf8] sm:$0xf] %v1173
      %1302 = vst [vmem:[%s172 + $0xfc] sm:$0xf] %v1174
      %s1303 = smul.u32 64, %s14
      %p1304 = scmp.lt.s32.totalorder %s1303, 255
      %s1305 = scalar_select %p1304, %s1303, 255
      %s1306 = smul.addr %s1305, 4
      %s1307 = scalar_lea.vmem %s3, %s1306
      // Predicated region
      $region33: #{discriminator_forward.4} parent=31 // pred_check
        %p1308 = pneg %p100
      $region34: #{discriminator_forward.4} parent=31 // pred_check_branch
        %1310 = sbr.rel (%p1308) target = $region36
      $region35: #{discriminator_forward.4} parent=31 // pred_region
        %s1311 = smul.u32 64, %s14
      $region36: #{discriminator_forward.4} parent=31 // pred_fallthru
        _
    $region32: #{discriminator_forward.4} parent=5 // pred_fallthru
      _
    %p1312 = scmp.le.s32.totalorder 2, %s9
    // Predicated region
    $region37: #{discriminator_forward.4} parent=5 // pred_check
      %p1313 = pneg %p1312
    $region38: #{discriminator_forward.4} parent=5 // pred_check_branch
      %1315 = sbr.rel (%p1313) target = $region40
    $region39: #{discriminator_forward.4} parent=5 // pred_region
      %s1316 = ssub.s32 %s9, 2
      // Predicated region
      $region41: #{discriminator_forward.4} parent=39 // pred_check
        %p1317 = pneg %p106
      $region42: #{discriminator_forward.4} parent=39 // pred_check_branch
        %1319 = sbr.rel (%p1317) target = $region44
      $region43: #{discriminator_forward.4} parent=39 // pred_region
        %s1320 = smul.u32 64, %s15
        %p1321 = scmp.lt.s32.totalorder %s1320, 255
        %s1322 = scalar_select %p1321, %s1320, 255
        %s1323 = smul.addr %s1322, 4
        %s1324 = scalar_lea.vmem %s3, %s1323
      $region44: #{discriminator_forward.4} parent=39 // pred_fallthru
        _
    $region40: #{discriminator_forward.4} parent=5 // pred_fallthru
      _
  $region6: #{discriminator_forward.4} parent=0 // loop_footer
    %s13 = sadd.s32 1, %s9
  $region7: #{discriminator_forward.4} parent=0 // loop_footer_branch
    %8 = sbr.rel target = $region3
  $region8: #{discriminator_forward.4} parent=0 // loop_exit
    _

// kernel: discriminator_forward.5
$region0: #{discriminator_forward.5}
  #allocation0 [shape = 'u32[]', space=smem, size = 0x4, offset = 0x4, fixed_abs, tag = 'smem constant byte address 0x4 - core index']
  #allocation1 [shape = 'u32[144,128]{1,0:T(1,128)}', space=vmem, size = 0x12000, scoped, tag = 'internal scratch']
  %s0 = inlined_call_operand.vmem [shape: bf16[512,128], index: 0, kind: input, shape index: {}]
  %s1 = inlined_call_operand.vmem [shape: bf16[128,128], index: 1, kind: input, shape index: {}]
  %s2 = inlined_call_operand.vmem [shape: f32[1,128], index: 2, kind: input, shape index: {}]
  %s3 = inlined_call_operand.vmem [shape: bf16[512,128], index: 3, kind: output, shape index: {}]
  %s4 = sld [smem:[#allocation0]]
  $region22: #{discriminator_forward.5} parent=0
    _
  %s6 = ssub.s32 1, %s4
  %s7 = scalar_select 0, %s6, %s4
  // Predicated region
  $region2: #{discriminator_forward.5} parent=0 // pred_check
    _
  $region3: #{discriminator_forward.5} parent=0 // pred_check_branch
    %9 = sbr.rel (0) target = $region5
  $region4: #{discriminator_forward.5} parent=0 // pred_region
    _
  $region5: #{discriminator_forward.5} parent=0 // pred_fallthru
    _
  // Predicated region
  $region6: #{discriminator_forward.5} parent=0 // pred_check
    _
  $region7: #{discriminator_forward.5} parent=0 // pred_check_branch
    %11 = sbr.rel (0) target = $region9
  $region8: #{discriminator_forward.5} parent=0 // pred_region
    _
  $region9: #{discriminator_forward.5} parent=0 // pred_fallthru
    _
  // Predicated region
  $region10: #{discriminator_forward.5} parent=0 // pred_check
    _
  $region11: #{discriminator_forward.5} parent=0 // pred_check_branch
    %13 = sbr.rel (0) target = $region13
  $region12: #{discriminator_forward.5} parent=0 // pred_region
    _
  $region13: #{discriminator_forward.5} parent=0 // pred_fallthru
    _
  %v15 = vld [vmem:[%s0] sm:$0xf]
  %v16 = vld [vmem:[%s0 + $0x4] sm:$0xf]
  %v17 = vld [vmem:[%s0 + $0x8] sm:$0xf]
  %v18 = vld [vmem:[%s0 + $0xc] sm:$0xf]
  %v19 = vld [vmem:[%s0 + $0x10] sm:$0xf]
  %v20 = vld [vmem:[%s0 + $0x14] sm:$0xf]
  %v21 = vld [vmem:[%s0 + $0x18] sm:$0xf]
  %v22 = vld [vmem:[%s0 + $0x1c] sm:$0xf]
  %v23 = vld [vmem:[%s0 + $0x20] sm:$0xf]
  %v24 = vld [vmem:[%s0 + $0x24] sm:$0xf]
  %v25 = vld [vmem:[%s0 + $0x28] sm:$0xf]
  %v26 = vld [vmem:[%s0 + $0x2c] sm:$0xf]
  %v27 = vld [vmem:[%s0 + $0x30] sm:$0xf]
  %v28 = vld [vmem:[%s0 + $0x34] sm:$0xf]
  %v29 = vld [vmem:[%s0 + $0x38] sm:$0xf]
  %v30 = vld [vmem:[%s0 + $0x3c] sm:$0xf]
  %v31 = vld [vmem:[%s0 + $0x40] sm:$0xf]
  %v32 = vld [vmem:[%s0 + $0x44] sm:$0xf]
  %v33 = vld [vmem:[%s0 + $0x48] sm:$0xf]
  %v34 = vld [vmem:[%s0 + $0x4c] sm:$0xf]
  %v35 = vld [vmem:[%s0 + $0x50] sm:$0xf]
  %v36 = vld [vmem:[%s0 + $0x54] sm:$0xf]
  %v37 = vld [vmem:[%s0 + $0x58] sm:$0xf]
  %v38 = vld [vmem:[%s0 + $0x5c] sm:$0xf]
  %v39 = vld [vmem:[%s0 + $0x60] sm:$0xf]
  %v40 = vld [vmem:[%s0 + $0x64] sm:$0xf]
  %v41 = vld [vmem:[%s0 + $0x68] sm:$0xf]
  %v42 = vld [vmem:[%s0 + $0x6c] sm:$0xf]
  %v43 = vld [vmem:[%s0 + $0x70] sm:$0xf]
  %v44 = vld [vmem:[%s0 + $0x74] sm:$0xf]
  %v45 = vld [vmem:[%s0 + $0x78] sm:$0xf]
  %v46 = vld [vmem:[%s0 + $0x7c] sm:$0xf]
  %v47 = vld [vmem:[%s0 + $0x80] sm:$0xf]
  %v48 = vld [vmem:[%s0 + $0x84] sm:$0xf]
  %v49 = vld [vmem:[%s0 + $0x88] sm:$0xf]
  %v50 = vld [vmem:[%s0 + $0x8c] sm:$0xf]
  %v51 = vld [vmem:[%s0 + $0x90] sm:$0xf]
  %v52 = vld [vmem:[%s0 + $0x94] sm:$0xf]
  %v53 = vld [vmem:[%s0 + $0x98] sm:$0xf]
  %v54 = vld [vmem:[%s0 + $0x9c] sm:$0xf]
  %v55 = vld [vmem:[%s0 + $0xa0] sm:$0xf]
  %v56 = vld [vmem:[%s0 + $0xa4] sm:$0xf]
  %v57 = vld [vmem:[%s0 + $0xa8] sm:$0xf]
  %v58 = vld [vmem:[%s0 + $0xac] sm:$0xf]
  %v59 = vld [vmem:[%s0 + $0xb0] sm:$0xf]
  %v60 = vld [vmem:[%s0 + $0xb4] sm:$0xf]
  %v61 = vld [vmem:[%s0 + $0xb8] sm:$0xf]
  %v62 = vld [vmem:[%s0 + $0xbc] sm:$0xf]
  %v63 = vld [vmem:[%s0 + $0xc0] sm:$0xf]
  %v64 = vld [vmem:[%s0 + $0xc4] sm:$0xf]
  %v65 = vld [vmem:[%s0 + $0xc8] sm:$0xf]
  %v66 = vld [vmem:[%s0 + $0xcc] sm:$0xf]
  %v67 = vld [vmem:[%s0 + $0xd0] sm:$0xf]
  %v68 = vld [vmem:[%s0 + $0xd4] sm:$0xf]
  %v69 = vld [vmem:[%s0 + $0xd8] sm:$0xf]
  %v70 = vld [vmem:[%s0 + $0xdc] sm:$0xf]
  %v71 = vld [vmem:[%s0 + $0xe0] sm:$0xf]
  %v72 = vld [vmem:[%s0 + $0xe4] sm:$0xf]
  %v73 = vld [vmem:[%s0 + $0xe8] sm:$0xf]
  %v74 = vld [vmem:[%s0 + $0xec] sm:$0xf]
  %v75 = vld [vmem:[%s0 + $0xf0] sm:$0xf]
  %v76 = vld [vmem:[%s0 + $0xf4] sm:$0xf]
  %v77 = vld [vmem:[%s0 + $0xf8] sm:$0xf]
  %v78 = vld [vmem:[%s0 + $0xfc] sm:$0xf]
  %v79 = vld [vmem:[%s1] sm:$0xf]
  %v80 = vld [vmem:[%s1 + $0x4] sm:$0xf]
  %v81 = vld [vmem:[%s1 + $0x8] sm:$0xf]
  %v82 = vld [vmem:[%s1 + $0xc] sm:$0xf]
  %v83 = vld [vmem:[%s1 + $0x10] sm:$0xf]
  %v84 = vld [vmem:[%s1 + $0x14] sm:$0xf]
  %v85 = vld [vmem:[%s1 + $0x18] sm:$0xf]
  %v86 = vld [vmem:[%s1 + $0x1c] sm:$0xf]
  %v87 = vld [vmem:[%s1 + $0x20] sm:$0xf]
  %v88 = vld [vmem:[%s1 + $0x24] sm:$0xf]
  %v89 = vld [vmem:[%s1 + $0x28] sm:$0xf]
  %v90 = vld [vmem:[%s1 + $0x2c] sm:$0xf]
  %v91 = vld [vmem:[%s1 + $0x30] sm:$0xf]
  %v92 = vld [vmem:[%s1 + $0x34] sm:$0xf]
  %v93 = vld [vmem:[%s1 + $0x38] sm:$0xf]
  %v94 = vld [vmem:[%s1 + $0x3c] sm:$0xf]
  %v95 = vld [vmem:[%s2] sm:$0x1]
  %v97 = vlaneseq
  %v98 = vshrl.u32 %v97, 7
  %v99 = vsub.s32 0, %v98
  %v100 = vrot.slane %v95, %v99
  %v166 = vunpack.c.l.b16 %v15
  %v167 = vunpack.c.l.b16 %v16
  %v168 = vunpack.c.l.b16 %v17
  %v169 = vunpack.c.l.b16 %v18
  %v170 = vunpack.c.l.b16 %v19
  %v171 = vunpack.c.l.b16 %v20
  %v172 = vunpack.c.l.b16 %v21
  %v173 = vunpack.c.l.b16 %v22
  %v174 = vunpack.c.l.b16 %v23
  %v175 = vunpack.c.l.b16 %v24
  %v176 = vunpack.c.l.b16 %v25
  %v177 = vunpack.c.l.b16 %v26
  %v178 = vunpack.c.l.b16 %v27
  %v179 = vunpack.c.l.b16 %v28
  %v180 = vunpack.c.l.b16 %v29
  %v181 = vunpack.c.l.b16 %v30
  %v182 = vunpack.c.l.b16 %v31
  %v183 = vunpack.c.l.b16 %v32
  %v184 = vunpack.c.l.b16 %v33
  %v185 = vunpack.c.l.b16 %v34
  %v186 = vunpack.c.l.b16 %v35
  %v187 = vunpack.c.l.b16 %v36
  %v188 = vunpack.c.l.b16 %v37
  %v189 = vunpack.c.l.b16 %v38
  %v190 = vunpack.c.l.b16 %v39
  %v191 = vunpack.c.l.b16 %v40
  %v192 = vunpack.c.l.b16 %v41
  %v193 = vunpack.c.l.b16 %v42
  %v194 = vunpack.c.l.b16 %v43
  %v195 = vunpack.c.l.b16 %v44
  %v196 = vunpack.c.l.b16 %v45
  %v197 = vunpack.c.l.b16 %v46
  %v198 = vunpack.c.l.b16 %v47
  %v199 = vunpack.c.l.b16 %v48
  %v200 = vunpack.c.l.b16 %v49
  %v201 = vunpack.c.l.b16 %v50
  %v202 = vunpack.c.l.b16 %v51
  %v203 = vunpack.c.l.b16 %v52
  %v204 = vunpack.c.l.b16 %v53
  %v205 = vunpack.c.l.b16 %v54
  %v206 = vunpack.c.l.b16 %v55
  %v207 = vunpack.c.l.b16 %v56
  %v208 = vunpack.c.l.b16 %v57
  %v209 = vunpack.c.l.b16 %v58
  %v210 = vunpack.c.l.b16 %v59
  %v211 = vunpack.c.l.b16 %v60
  %v212 = vunpack.c.l.b16 %v61
  %v213 = vunpack.c.l.b16 %v62
  %v214 = vunpack.c.l.b16 %v63
  %v215 = vunpack.c.l.b16 %v64
  %v216 = vunpack.c.l.b16 %v65
  %v217 = vunpack.c.l.b16 %v66
  %v218 = vunpack.c.l.b16 %v67
  %v219 = vunpack.c.l.b16 %v68
  %v220 = vunpack.c.l.b16 %v69
  %v221 = vunpack.c.l.b16 %v70
  %v222 = vunpack.c.l.b16 %v71
  %v223 = vunpack.c.l.b16 %v72
  %v224 = vunpack.c.l.b16 %v73
  %v225 = vunpack.c.l.b16 %v74
  %v226 = vunpack.c.l.b16 %v75
  %v227 = vunpack.c.l.b16 %v76
  %v228 = vunpack.c.l.b16 %v77
  %v229 = vunpack.c.l.b16 %v78
  %v230 = vpack.c.b16 %v167, %v166
  %v231 = vpack.c.b16 %v169, %v168
  %v232 = vpack.c.b16 %v171, %v170
  %v233 = vpack.c.b16 %v173, %v172
  %v234 = vpack.c.b16 %v175, %v174
  %v235 = vpack.c.b16 %v177, %v176
  %v236 = vpack.c.b16 %v179, %v178
  %v237 = vpack.c.b16 %v181, %v180
  %v238 = vpack.c.b16 %v183, %v182
  %v239 = vpack.c.b16 %v185, %v184
  %v240 = vpack.c.b16 %v187, %v186
  %v241 = vpack.c.b16 %v189, %v188
  %v242 = vpack.c.b16 %v191, %v190
  %v243 = vpack.c.b16 %v193, %v192
  %v244 = vpack.c.b16 %v195, %v194
  %v245 = vpack.c.b16 %v197, %v196
  %v246 = vpack.c.b16 %v199, %v198
  %v247 = vpack.c.b16 %v201, %v200
  %v248 = vpack.c.b16 %v203, %v202
  %v249 = vpack.c.b16 %v205, %v204
  %v250 = vpack.c.b16 %v207, %v206
  %v251 = vpack.c.b16 %v209, %v208
  %v252 = vpack.c.b16 %v211, %v210
  %v253 = vpack.c.b16 %v213, %v212
  %v254 = vpack.c.b16 %v215, %v214
  %v255 = vpack.c.b16 %v217, %v216
  %v256 = vpack.c.b16 %v219, %v218
  %v257 = vpack.c.b16 %v221, %v220
  %v258 = vpack.c.b16 %v223, %v222
  %v259 = vpack.c.b16 %v225, %v224
  %v260 = vpack.c.b16 %v227, %v226
  %v261 = vpack.c.b16 %v229, %v228
  %v310 = vunpack.c.l.b16 %v79
  %v311 = vunpack.c.l.b16 %v80
  %v312 = vunpack.c.l.b16 %v81
  %v313 = vunpack.c.l.b16 %v82
  %v314 = vunpack.c.l.b16 %v83
  %v315 = vunpack.c.l.b16 %v84
  %v316 = vunpack.c.l.b16 %v85
  %v317 = vunpack.c.l.b16 %v86
  %v318 = vunpack.c.l.b16 %v87
  %v319 = vunpack.c.l.b16 %v88
  %v320 = vunpack.c.l.b16 %v89
  %v321 = vunpack.c.l.b16 %v90
  %v322 = vunpack.c.l.b16 %v91
  %v323 = vunpack.c.l.b16 %v92
  %v324 = vunpack.c.l.b16 %v93
  %v325 = vunpack.c.l.b16 %v94
  %v326 = vpack.c.b16 %v311, %v310
  %v327 = vpack.c.b16 %v313, %v312
  %v328 = vpack.c.b16 %v315, %v314
  %v329 = vpack.c.b16 %v317, %v316
  %v330 = vpack.c.b16 %v319, %v318
  %v331 = vpack.c.b16 %v321, %v320
  %v332 = vpack.c.b16 %v323, %v322
  %v333 = vpack.c.b16 %v325, %v324
  %342 = vmatprep.subr.bf16.mxu0 0
  %343 = vmatpush1.bf16.msra.mxu0 %v326
  %344 = vmatprep.subr.bf16.mxu0 0
  %345 = vmatpush1.bf16.msra.mxu0 %v327
  %346 = vmatprep.subr.bf16.mxu0 0
  %347 = vmatpush1.bf16.msra.mxu0 %v328
  %348 = vmatprep.subr.bf16.mxu0 0
  %349 = vmatpush1.bf16.msra.mxu0 %v329
  %350 = vmatprep.subr.bf16.mxu0 0
  %351 = vmatpush1.bf16.msra.mxu0 %v330
  %352 = vmatprep.subr.bf16.mxu0 0
  %353 = vmatpush1.bf16.msra.mxu0 %v331
  %354 = vmatprep.subr.bf16.mxu0 0
  %355 = vmatpush1.bf16.msra.mxu0 %v332
  %356 = vmatprep.subr.bf16.mxu0 0
  %357 = vmatpush1.bf16.msra.mxu0 %v333
  %358 = vmatprep.subr.bf16.mxu0 0
  %359 = vmatpush1.bf16.msra.mxu0 0
  %360 = vmatprep.subr.bf16.mxu0 0
  %361 = vmatpush1.bf16.msra.mxu0 0
  %362 = vmatprep.subr.bf16.mxu0 0
  %363 = vmatpush1.bf16.msra.mxu0 0
  %364 = vmatprep.subr.bf16.mxu0 0
  %365 = vmatpush1.bf16.msra.mxu0 0
  %366 = vmatprep.subr.bf16.mxu0 0
  %367 = vmatpush1.bf16.msra.mxu0 0
  %368 = vmatprep.subr.bf16.mxu0 0
  %369 = vmatpush1.bf16.msra.mxu0 0
  %370 = vmatprep.subr.bf16.mxu0 0
  %371 = vmatpush1.bf16.msra.mxu0 0
  %372 = vmatprep.subr.bf16.mxu0 0
  %373 = vmatpush1.bf16.msra.mxu0 0
  %374 = vmatprep.mubr.bf16.mxu0 0
  %375 = vmatmul.mubr.bf16.gmra.mrb[0].mxu0 %v230
  %v376 = vpop.f32.mrb[0].mxu0
  %v377 = vadd.f32 %v100, %v376
  %v378 = vpop.f32.mrb[0].mxu0
  %v379 = vpop.f32.mrb[0].mxu0
  %v380 = vadd.f32 %v100, %v379
  %v381 = vpop.f32.mrb[0].mxu0
  %382 = vmatprep.mubr.bf16.mxu0 0
  %383 = vmatmul.mubr.bf16.gmra.mrb[0].mxu0 %v231
  %v384 = vpop.f32.mrb[0].mxu0
  %v385 = vadd.f32 %v100, %v384
  %v386 = vpop.f32.mrb[0].mxu0
  %v387 = vpop.f32.mrb[0].mxu0
  %v388 = vadd.f32 %v100, %v387
  %v389 = vpop.f32.mrb[0].mxu0
  %390 = vmatprep.mubr.bf16.mxu0 0
  %391 = vmatmul.mubr.bf16.gmra.mrb[0].mxu0 %v232
  %v392 = vpop.f32.mrb[0].mxu0
  %v393 = vadd.f32 %v100, %v392
  %v394 = vpop.f32.mrb[0].mxu0
  %v395 = vpop.f32.mrb[0].mxu0
  %v396 = vadd.f32 %v100, %v395
  %v397 = vpop.f32.mrb[0].mxu0
  %398 = vmatprep.mubr.bf16.mxu0 0
  %399 = vmatmul.mubr.bf16.gmra.mrb[0].mxu0 %v233
  %v400 = vpop.f32.mrb[0].mxu0
  %v401 = vadd.f32 %v100, %v400
  %v402 = vpop.f32.mrb[0].mxu0
  %v403 = vpop.f32.mrb[0].mxu0
  %v404 = vadd.f32 %v100, %v403
  %v405 = vpop.f32.mrb[0].mxu0
  %406 = vmatprep.mubr.bf16.mxu0 0
  %407 = vmatmul.mubr.bf16.gmra.mrb[0].mxu0 %v234
  %v408 = vpop.f32.mrb[0].mxu0
  %v409 = vadd.f32 %v100, %v408
  %v410 = vpop.f32.mrb[0].mxu0
  %v411 = vpop.f32.mrb[0].mxu0
  %v412 = vadd.f32 %v100, %v411
  %v413 = vpop.f32.mrb[0].mxu0
  %414 = vmatprep.mubr.bf16.mxu0 0
  %415 = vmatmul.mubr.bf16.gmra.mrb[0].mxu0 %v235
  %v416 = vpop.f32.mrb[0].mxu0
  %v417 = vadd.f32 %v100, %v416
  %v418 = vpop.f32.mrb[0].mxu0
  %v419 = vpop.f32.mrb[0].mxu0
  %v420 = vadd.f32 %v100, %v419
  %v421 = vpop.f32.mrb[0].mxu0
  %422 = vmatprep.mubr.bf16.mxu0 0
  %423 = vmatmul.mubr.bf16.gmra.mrb[0].mxu0 %v236
  %v424 = vpop.f32.mrb[0].mxu0
  %v425 = vadd.f32 %v100, %v424
  %v426 = vpop.f32.mrb[0].mxu0
  %v427 = vpop.f32.mrb[0].mxu0
  %v428 = vadd.f32 %v100, %v427
  %v429 = vpop.f32.mrb[0].mxu0
  %430 = vmatprep.mubr.bf16.mxu0 0
  %431 = vmatmul.mubr.bf16.gmra.mrb[0].mxu0 %v237
  %v432 = vpop.f32.mrb[0].mxu0
  %v433 = vadd.f32 %v100, %v432
  %v434 = vpop.f32.mrb[0].mxu0
  %v435 = vpop.f32.mrb[0].mxu0
  %v436 = vadd.f32 %v100, %v435
  %v437 = vpop.f32.mrb[0].mxu0
  %438 = vmatprep.mubr.bf16.mxu0 0
  %439 = vmatmul.mubr.bf16.gmra.mrb[0].mxu0 %v238
  %v440 = vpop.f32.mrb[0].mxu0
  %v441 = vadd.f32 %v100, %v440
  %v442 = vpop.f32.mrb[0].mxu0
  %v443 = vpop.f32.mrb[0].mxu0
  %v444 = vadd.f32 %v100, %v443
  %v445 = vpop.f32.mrb[0].mxu0
  %446 = vmatprep.mubr.bf16.mxu0 0
  %447 = vmatmul.mubr.bf16.gmra.mrb[0].mxu0 %v239
  %v448 = vpop.f32.mrb[0].mxu0
  %v449 = vadd.f32 %v100, %v448
  %v450 = vpop.f32.mrb[0].mxu0
  %v451 = vpop.f32.mrb[0].mxu0
  %v452 = vadd.f32 %v100, %v451
  %v453 = vpop.f32.mrb[0].mxu0
  %454 = vmatprep.mubr.bf16.mxu0 0
  %455 = vmatmul.mubr.bf16.gmra.mrb[0].mxu0 %v240
  %v456 = vpop.f32.mrb[0].mxu0
  %v457 = vadd.f32 %v100, %v456
  %v458 = vpop.f32.mrb[0].mxu0
  %v459 = vpop.f32.mrb[0].mxu0
  %v460 = vadd.f32 %v100, %v459
  %v461 = vpop.f32.mrb[0].mxu0
  %462 = vmatprep.mubr.bf16.mxu0 0
  %463 = vmatmul.mubr.bf16.gmra.mrb[0].mxu0 %v241
  %v464 = vpop.f32.mrb[0].mxu0
  %v465 = vadd.f32 %v100, %v464
  %v466 = vpop.f32.mrb[0].mxu0
  %v467 = vpop.f32.mrb[0].mxu0
  %v468 = vadd.f32 %v100, %v467
  %v469 = vpop.f32.mrb[0].mxu0
  %470 = vmatprep.mubr.bf16.mxu0 0
  %471 = vmatmul.mubr.bf16.gmra.mrb[0].mxu0 %v242
  %v472 = vpop.f32.mrb[0].mxu0
  %v473 = vadd.f32 %v100, %v472
  %v474 = vpop.f32.mrb[0].mxu0
  %v475 = vpop.f32.mrb[0].mxu0
  %v476 = vadd.f32 %v100, %v475
  %v477 = vpop.f32.mrb[0].mxu0
  %478 = vmatprep.mubr.bf16.mxu0 0
  %479 = vmatmul.mubr.bf16.gmra.mrb[0].mxu0 %v243
  %v480 = vpop.f32.mrb[0].mxu0
  %v481 = vadd.f32 %v100, %v480
  %v482 = vpop.f32.mrb[0].mxu0
  %v483 = vpop.f32.mrb[0].mxu0
  %v484 = vadd.f32 %v100, %v483
  %v485 = vpop.f32.mrb[0].mxu0
  %486 = vmatprep.mubr.bf16.mxu0 0
  %487 = vmatmul.mubr.bf16.gmra.mrb[0].mxu0 %v244
  %v488 = vpop.f32.mrb[0].mxu0
  %v489 = vadd.f32 %v100, %v488
  %v490 = vpop.f32.mrb[0].mxu0
  %v491 = vpop.f32.mrb[0].mxu0
  %v492 = vadd.f32 %v100, %v491
  %v493 = vpop.f32.mrb[0].mxu0
  %494 = vmatprep.mubr.bf16.mxu0 0
  %495 = vmatmul.mubr.bf16.gmra.mrb[0].mxu0 %v245
  %v496 = vpop.f32.mrb[0].mxu0
  %v497 = vadd.f32 %v100, %v496
  %v498 = vpop.f32.mrb[0].mxu0
  %v499 = vpop.f32.mrb[0].mxu0
  %v500 = vadd.f32 %v100, %v499
  %v501 = vpop.f32.mrb[0].mxu0
  %502 = vmatprep.mubr.bf16.mxu0 0
  %503 = vmatmul.mubr.bf16.gmra.mrb[0].mxu0 %v246
  %v504 = vpop.f32.mrb[0].mxu0
  %v505 = vadd.f32 %v100, %v504
  %v506 = vpop.f32.mrb[0].mxu0
  %v507 = vpop.f32.mrb[0].mxu0
  %v508 = vadd.f32 %v100, %v507
  %v509 = vpop.f32.mrb[0].mxu0
  %510 = vmatprep.mubr.bf16.mxu0 0
  %511 = vmatmul.mubr.bf16.gmra.mrb[0].mxu0 %v247
  %v512 = vpop.f32.mrb[0].mxu0
  %v513 = vadd.f32 %v100, %v512
  %v514 = vpop.f32.mrb[0].mxu0
  %v515 = vpop.f32.mrb[0].mxu0
  %v516 = vadd.f32 %v100, %v515
  %v517 = vpop.f32.mrb[0].mxu0
  %518 = vmatprep.mubr.bf16.mxu0 0
  %519 = vmatmul.mubr.bf16.gmra.mrb[0].mxu0 %v248
  %v520 = vpop.f32.mrb[0].mxu0
  %v521 = vadd.f32 %v100, %v520
  %v522 = vpop.f32.mrb[0].mxu0
  %v523 = vpop.f32.mrb[0].mxu0
  %v524 = vadd.f32 %v100, %v523
  %v525 = vpop.f32.mrb[0].mxu0
  %526 = vmatprep.mubr.bf16.mxu0 0
  %527 = vmatmul.mubr.bf16.gmra.mrb[0].mxu0 %v249
  %v528 = vpop.f32.mrb[0].mxu0
  %v529 = vadd.f32 %v100, %v528
  %v530 = vpop.f32.mrb[0].mxu0
  %v531 = vpop.f32.mrb[0].mxu0
  %v532 = vadd.f32 %v100, %v531
  %v533 = vpop.f32.mrb[0].mxu0
  %534 = vmatprep.mubr.bf16.mxu0 0
  %535 = vmatmul.mubr.bf16.gmra.mrb[0].mxu0 %v250
  %v536 = vpop.f32.mrb[0].mxu0
  %v537 = vadd.f32 %v100, %v536
  %v538 = vpop.f32.mrb[0].mxu0
  %v539 = vpop.f32.mrb[0].mxu0
  %v540 = vadd.f32 %v100, %v539
  %v541 = vpop.f32.mrb[0].mxu0
  %542 = vmatprep.mubr.bf16.mxu0 0
  %543 = vmatmul.mubr.bf16.gmra.mrb[0].mxu0 %v251
  %v544 = vpop.f32.mrb[0].mxu0
  %v545 = vadd.f32 %v100, %v544
  %v546 = vpop.f32.mrb[0].mxu0
  %v547 = vpop.f32.mrb[0].mxu0
  %v548 = vadd.f32 %v100, %v547
  %v549 = vpop.f32.mrb[0].mxu0
  %550 = vmatprep.mubr.bf16.mxu0 0
  %551 = vmatmul.mubr.bf16.gmra.mrb[0].mxu0 %v252
  %v552 = vpop.f32.mrb[0].mxu0
  %v553 = vadd.f32 %v100, %v552
  %v554 = vpop.f32.mrb[0].mxu0
  %v555 = vpop.f32.mrb[0].mxu0
  %v556 = vadd.f32 %v100, %v555
  %v557 = vpop.f32.mrb[0].mxu0
  %558 = vmatprep.mubr.bf16.mxu0 0
  %559 = vmatmul.mubr.bf16.gmra.mrb[0].mxu0 %v253
  %v560 = vpop.f32.mrb[0].mxu0
  %v561 = vadd.f32 %v100, %v560
  %v562 = vpop.f32.mrb[0].mxu0
  %v563 = vpop.f32.mrb[0].mxu0
  %v564 = vadd.f32 %v100, %v563
  %v565 = vpop.f32.mrb[0].mxu0
  %566 = vmatprep.mubr.bf16.mxu0 0
  %567 = vmatmul.mubr.bf16.gmra.mrb[0].mxu0 %v254
  %v568 = vpop.f32.mrb[0].mxu0
  %v569 = vadd.f32 %v100, %v568
  %v570 = vpop.f32.mrb[0].mxu0
  %v571 = vpop.f32.mrb[0].mxu0
  %v572 = vadd.f32 %v100, %v571
  %v573 = vpop.f32.mrb[0].mxu0
  %574 = vmatprep.mubr.bf16.mxu0 0
  %575 = vmatmul.mubr.bf16.gmra.mrb[0].mxu0 %v255
  %v576 = vpop.f32.mrb[0].mxu0
  %v577 = vadd.f32 %v100, %v576
  %v578 = vpop.f32.mrb[0].mxu0
  %v579 = vpop.f32.mrb[0].mxu0
  %v580 = vadd.f32 %v100, %v579
  %v581 = vpop.f32.mrb[0].mxu0
  %582 = vmatprep.mubr.bf16.mxu0 0
  %583 = vmatmul.mubr.bf16.gmra.mrb[0].mxu0 %v256
  %v584 = vpop.f32.mrb[0].mxu0
  %v585 = vadd.f32 %v100, %v584
  %v586 = vpop.f32.mrb[0].mxu0
  %v587 = vpop.f32.mrb[0].mxu0
  %v588 = vadd.f32 %v100, %v587
  %v589 = vpop.f32.mrb[0].mxu0
  %590 = vmatprep.mubr.bf16.mxu0 0
  %591 = vmatmul.mubr.bf16.gmra.mrb[0].mxu0 %v257
  %v592 = vpop.f32.mrb[0].mxu0
  %v593 = vadd.f32 %v100, %v592
  %v594 = vpop.f32.mrb[0].mxu0
  %v595 = vpop.f32.mrb[0].mxu0
  %v596 = vadd.f32 %v100, %v595
  %v597 = vpop.f32.mrb[0].mxu0
  %598 = vmatprep.mubr.bf16.mxu0 0
  %599 = vmatmul.mubr.bf16.gmra.mrb[0].mxu0 %v258
  %v600 = vpop.f32.mrb[0].mxu0
  %v601 = vadd.f32 %v100, %v600
  %v602 = vpop.f32.mrb[0].mxu0
  %v603 = vpop.f32.mrb[0].mxu0
  %v604 = vadd.f32 %v100, %v603
  %v605 = vpop.f32.mrb[0].mxu0
  %606 = vmatprep.mubr.bf16.mxu0 0
  %607 = vmatmul.mubr.bf16.gmra.mrb[0].mxu0 %v259
  %v608 = vpop.f32.mrb[0].mxu0
  %v609 = vadd.f32 %v100, %v608
  %v610 = vpop.f32.mrb[0].mxu0
  %v611 = vpop.f32.mrb[0].mxu0
  %v612 = vadd.f32 %v100, %v611
  %v613 = vpop.f32.mrb[0].mxu0
  %614 = vmatprep.mubr.bf16.mxu0 0
  %615 = vmatmul.mubr.bf16.gmra.mrb[0].mxu0 %v260
  %v616 = vpop.f32.mrb[0].mxu0
  %v617 = vadd.f32 %v100, %v616
  %v618 = vpop.f32.mrb[0].mxu0
  %v619 = vpop.f32.mrb[0].mxu0
  %v620 = vadd.f32 %v100, %v619
  %v621 = vpop.f32.mrb[0].mxu0
  %622 = vmatprep.mubr.bf16.mxu0 0
  %623 = vmatmul.mubr.bf16.gmra.mrb[0].mxu0 %v261
  %v624 = vpop.f32.mrb[0].mxu0
  %v625 = vadd.f32 %v100, %v624
  %v626 = vpop.f32.mrb[0].mxu0
  %v627 = vpop.f32.mrb[0].mxu0
  %v628 = vadd.f32 %v100, %v627
  %v629 = vpop.f32.mrb[0].mxu0
  %630 = vdwg.mxu0
  %vm631 = vcmp.gt.f32.partialorder %v377, 0.0
  %vm632 = vcmp.gt.f32.partialorder %v380, 0.0
  %vm633 = vcmp.gt.f32.partialorder %v385, 0.0
  %vm634 = vcmp.gt.f32.partialorder %v388, 0.0
  %vm635 = vcmp.gt.f32.partialorder %v393, 0.0
  %vm636 = vcmp.gt.f32.partialorder %v396, 0.0
  %vm637 = vcmp.gt.f32.partialorder %v401, 0.0
  %vm638 = vcmp.gt.f32.partialorder %v404, 0.0
  %vm639 = vcmp.gt.f32.partialorder %v409, 0.0
  %vm640 = vcmp.gt.f32.partialorder %v412, 0.0
  %vm641 = vcmp.gt.f32.partialorder %v417, 0.0
  %vm642 = vcmp.gt.f32.partialorder %v420, 0.0
  %vm643 = vcmp.gt.f32.partialorder %v425, 0.0
  %vm644 = vcmp.gt.f32.partialorder %v428, 0.0
  %vm645 = vcmp.gt.f32.partialorder %v433, 0.0
  %vm646 = vcmp.gt.f32.partialorder %v436, 0.0
  %vm647 = vcmp.gt.f32.partialorder %v441, 0.0
  %vm648 = vcmp.gt.f32.partialorder %v444, 0.0
  %vm649 = vcmp.gt.f32.partialorder %v449, 0.0
  %vm650 = vcmp.gt.f32.partialorder %v452, 0.0
  %vm651 = vcmp.gt.f32.partialorder %v457, 0.0
  %vm652 = vcmp.gt.f32.partialorder %v460, 0.0
  %vm653 = vcmp.gt.f32.partialorder %v465, 0.0
  %vm654 = vcmp.gt.f32.partialorder %v468, 0.0
  %vm655 = vcmp.gt.f32.partialorder %v473, 0.0
  %vm656 = vcmp.gt.f32.partialorder %v476, 0.0
  %vm657 = vcmp.gt.f32.partialorder %v481, 0.0
  %vm658 = vcmp.gt.f32.partialorder %v484, 0.0
  %vm659 = vcmp.gt.f32.partialorder %v489, 0.0
  %vm660 = vcmp.gt.f32.partialorder %v492, 0.0
  %vm661 = vcmp.gt.f32.partialorder %v497, 0.0
  %vm662 = vcmp.gt.f32.partialorder %v500, 0.0
  %vm663 = vcmp.gt.f32.partialorder %v505, 0.0
  %vm664 = vcmp.gt.f32.partialorder %v508, 0.0
  %vm665 = vcmp.gt.f32.partialorder %v513, 0.0
  %vm666 = vcmp.gt.f32.partialorder %v516, 0.0
  %vm667 = vcmp.gt.f32.partialorder %v521, 0.0
  %vm668 = vcmp.gt.f32.partialorder %v524, 0.0
  %vm669 = vcmp.gt.f32.partialorder %v529, 0.0
  %vm670 = vcmp.gt.f32.partialorder %v532, 0.0
  %vm671 = vcmp.gt.f32.partialorder %v537, 0.0
  %vm672 = vcmp.gt.f32.partialorder %v540, 0.0
  %vm673 = vcmp.gt.f32.partialorder %v545, 0.0
  %vm674 = vcmp.gt.f32.partialorder %v548, 0.0
  %vm675 = vcmp.gt.f32.partialorder %v553, 0.0
  %vm676 = vcmp.gt.f32.partialorder %v556, 0.0
  %vm677 = vcmp.gt.f32.partialorder %v561, 0.0
  %vm678 = vcmp.gt.f32.partialorder %v564, 0.0
  %vm679 = vcmp.gt.f32.partialorder %v569, 0.0
  %vm680 = vcmp.gt.f32.partialorder %v572, 0.0
  %vm681 = vcmp.gt.f32.partialorder %v577, 0.0
  %vm682 = vcmp.gt.f32.partialorder %v580, 0.0
  %vm683 = vcmp.gt.f32.partialorder %v585, 0.0
  %vm684 = vcmp.gt.f32.partialorder %v588, 0.0
  %vm685 = vcmp.gt.f32.partialorder %v593, 0.0
  %vm686 = vcmp.gt.f32.partialorder %v596, 0.0
  %vm687 = vcmp.gt.f32.partialorder %v601, 0.0
  %vm688 = vcmp.gt.f32.partialorder %v604, 0.0
  %vm689 = vcmp.gt.f32.partialorder %v609, 0.0
  %vm690 = vcmp.gt.f32.partialorder %v612, 0.0
  %vm691 = vcmp.gt.f32.partialorder %v617, 0.0
  %vm692 = vcmp.gt.f32.partialorder %v620, 0.0
  %vm693 = vcmp.gt.f32.partialorder %v625, 0.0
  %vm694 = vcmp.gt.f32.partialorder %v628, 0.0
  %v695 = vmul.f32 %v377, 0.2
  %v696 = vmul.f32 %v380, 0.2
  %v697 = vmul.f32 %v385, 0.2
  %v698 = vmul.f32 %v388, 0.2
  %v699 = vmul.f32 %v393, 0.2
  %v700 = vmul.f32 %v396, 0.2
  %v701 = vmul.f32 %v401, 0.2
  %v702 = vmul.f32 %v404, 0.2
  %v703 = vmul.f32 %v409, 0.2
  %v704 = vmul.f32 %v412, 0.2
  %v705 = vmul.f32 %v417, 0.2
  %v706 = vmul.f32 %v420, 0.2
  %v707 = vmul.f32 %v425, 0.2
  %v708 = vmul.f32 %v428, 0.2
  %v709 = vmul.f32 %v433, 0.2
  %v710 = vmul.f32 %v436, 0.2
  %v711 = vmul.f32 %v441, 0.2
  %v712 = vmul.f32 %v444, 0.2
  %v713 = vmul.f32 %v449, 0.2
  %v714 = vmul.f32 %v452, 0.2
  %v715 = vmul.f32 %v457, 0.2
  %v716 = vmul.f32 %v460, 0.2
  %v717 = vmul.f32 %v465, 0.2
  %v718 = vmul.f32 %v468, 0.2
  %v719 = vmul.f32 %v473, 0.2
  %v720 = vmul.f32 %v476, 0.2
  %v721 = vmul.f32 %v481, 0.2
  %v722 = vmul.f32 %v484, 0.2
  %v723 = vmul.f32 %v489, 0.2
  %v724 = vmul.f32 %v492, 0.2
  %v725 = vmul.f32 %v497, 0.2
  %v726 = vmul.f32 %v500, 0.2
  %v727 = vmul.f32 %v505, 0.2
  %v728 = vmul.f32 %v508, 0.2
  %v729 = vmul.f32 %v513, 0.2
  %v730 = vmul.f32 %v516, 0.2
  %v731 = vmul.f32 %v521, 0.2
  %v732 = vmul.f32 %v524, 0.2
  %v733 = vmul.f32 %v529, 0.2
  %v734 = vmul.f32 %v532, 0.2
  %v735 = vmul.f32 %v537, 0.2
  %v736 = vmul.f32 %v540, 0.2
  %v737 = vmul.f32 %v545, 0.2
  %v738 = vmul.f32 %v548, 0.2
  %v739 = vmul.f32 %v553, 0.2
  %v740 = vmul.f32 %v556, 0.2
  %v741 = vmul.f32 %v561, 0.2
  %v742 = vmul.f32 %v564, 0.2
  %v743 = vmul.f32 %v569, 0.2
  %v744 = vmul.f32 %v572, 0.2
  %v745 = vmul.f32 %v577, 0.2
  %v746 = vmul.f32 %v580, 0.2
  %v747 = vmul.f32 %v585, 0.2
  %v748 = vmul.f32 %v588, 0.2
  %v749 = vmul.f32 %v593, 0.2
  %v750 = vmul.f32 %v596, 0.2
  %v751 = vmul.f32 %v601, 0.2
  %v752 = vmul.f32 %v604, 0.2
  %v753 = vmul.f32 %v609, 0.2
  %v754 = vmul.f32 %v612, 0.2
  %v755 = vmul.f32 %v617, 0.2
  %v756 = vmul.f32 %v620, 0.2
  %v757 = vmul.f32 %v625, 0.2
  %v758 = vmul.f32 %v628, 0.2
  %v759 = vsel %vm631, %v377, %v695
  %v760 = vsel %vm632, %v380, %v696
  %v761 = vsel %vm633, %v385, %v697
  %v762 = vsel %vm634, %v388, %v698
  %v763 = vsel %vm635, %v393, %v699
  %v764 = vsel %vm636, %v396, %v700
  %v765 = vsel %vm637, %v401, %v701
  %v766 = vsel %vm638, %v404, %v702
  %v767 = vsel %vm639, %v409, %v703
  %v768 = vsel %vm640, %v412, %v704
  %v769 = vsel %vm641, %v417, %v705
  %v770 = vsel %vm642, %v420, %v706
  %v771 = vsel %vm643, %v425, %v707
  %v772 = vsel %vm644, %v428, %v708
  %v773 = vsel %vm645, %v433, %v709
  %v774 = vsel %vm646, %v436, %v710
  %v775 = vsel %vm647, %v441, %v711
  %v776 = vsel %vm648, %v444, %v712
  %v777 = vsel %vm649, %v449, %v713
  %v778 = vsel %vm650, %v452, %v714
  %v779 = vsel %vm651, %v457, %v715
  %v780 = vsel %vm652, %v460, %v716
  %v781 = vsel %vm653, %v465, %v717
  %v782 = vsel %vm654, %v468, %v718
  %v783 = vsel %vm655, %v473, %v719
  %v784 = vsel %vm656, %v476, %v720
  %v785 = vsel %vm657, %v481, %v721
  %v786 = vsel %vm658, %v484, %v722
  %v787 = vsel %vm659, %v489, %v723
  %v788 = vsel %vm660, %v492, %v724
  %v789 = vsel %vm661, %v497, %v725
  %v790 = vsel %vm662, %v500, %v726
  %v791 = vsel %vm663, %v505, %v727
  %v792 = vsel %vm664, %v508, %v728
  %v793 = vsel %vm665, %v513, %v729
  %v794 = vsel %vm666, %v516, %v730
  %v795 = vsel %vm667, %v521, %v731
  %v796 = vsel %vm668, %v524, %v732
  %v797 = vsel %vm669, %v529, %v733
  %v798 = vsel %vm670, %v532, %v734
  %v799 = vsel %vm671, %v537, %v735
  %v800 = vsel %vm672, %v540, %v736
  %v801 = vsel %vm673, %v545, %v737
  %v802 = vsel %vm674, %v548, %v738
  %v803 = vsel %vm675, %v553, %v739
  %v804 = vsel %vm676, %v556, %v740
  %v805 = vsel %vm677, %v561, %v741
  %v806 = vsel %vm678, %v564, %v742
  %v807 = vsel %vm679, %v569, %v743
  %v808 = vsel %vm680, %v572, %v744
  %v809 = vsel %vm681, %v577, %v745
  %v810 = vsel %vm682, %v580, %v746
  %v811 = vsel %vm683, %v585, %v747
  %v812 = vsel %vm684, %v588, %v748
  %v813 = vsel %vm685, %v593, %v749
  %v814 = vsel %vm686, %v596, %v750
  %v815 = vsel %vm687, %v601, %v751
  %v816 = vsel %vm688, %v604, %v752
  %v817 = vsel %vm689, %v609, %v753
  %v818 = vsel %vm690, %v612, %v754
  %v819 = vsel %vm691, %v617, %v755
  %v820 = vsel %vm692, %v620, %v756
  %v821 = vsel %vm693, %v625, %v757
  %v822 = vsel %vm694, %v628, %v758
  %v823 = vpack.c.bf16 %v760, %v759
  %v824 = vpack.c.bf16 %v762, %v761
  %v825 = vpack.c.bf16 %v764, %v763
  %v826 = vpack.c.bf16 %v766, %v765
  %v827 = vpack.c.bf16 %v768, %v767
  %v828 = vpack.c.bf16 %v770, %v769
  %v829 = vpack.c.bf16 %v772, %v771
  %v830 = vpack.c.bf16 %v774, %v773
  %v831 = vpack.c.bf16 %v776, %v775
  %v832 = vpack.c.bf16 %v778, %v777
  %v833 = vpack.c.bf16 %v780, %v779
  %v834 = vpack.c.bf16 %v782, %v781
  %v835 = vpack.c.bf16 %v784, %v783
  %v836 = vpack.c.bf16 %v786, %v785
  %v837 = vpack.c.bf16 %v788, %v787
  %v838 = vpack.c.bf16 %v790, %v789
  %v839 = vpack.c.bf16 %v792, %v791
  %v840 = vpack.c.bf16 %v794, %v793
  %v841 = vpack.c.bf16 %v796, %v795
  %v842 = vpack.c.bf16 %v798, %v797
  %v843 = vpack.c.bf16 %v800, %v799
  %v844 = vpack.c.bf16 %v802, %v801
  %v845 = vpack.c.bf16 %v804, %v803
  %v846 = vpack.c.bf16 %v806, %v805
  %v847 = vpack.c.bf16 %v808, %v807
  %v848 = vpack.c.bf16 %v810, %v809
  %v849 = vpack.c.bf16 %v812, %v811
  %v850 = vpack.c.bf16 %v814, %v813
  %v851 = vpack.c.bf16 %v816, %v815
  %v852 = vpack.c.bf16 %v818, %v817
  %v853 = vpack.c.bf16 %v820, %v819
  %v854 = vpack.c.bf16 %v822, %v821
  %v887 = vunpack.c.l.b16 %v823
  %v888 = vunpack.c.h.b16 %v823
  %v889 = vunpack.c.l.b16 %v824
  %v890 = vunpack.c.h.b16 %v824
  %v891 = vunpack.c.l.b16 %v825
  %v892 = vunpack.c.h.b16 %v825
  %v893 = vunpack.c.l.b16 %v826
  %v894 = vunpack.c.h.b16 %v826
  %v895 = vunpack.c.l.b16 %v827
  %v896 = vunpack.c.h.b16 %v827
  %v897 = vunpack.c.l.b16 %v828
  %v898 = vunpack.c.h.b16 %v828
  %v899 = vunpack.c.l.b16 %v829
  %v900 = vunpack.c.h.b16 %v829
  %v901 = vunpack.c.l.b16 %v830
  %v902 = vunpack.c.h.b16 %v830
  %v903 = vunpack.c.l.b16 %v831
  %v904 = vunpack.c.h.b16 %v831
  %v905 = vunpack.c.l.b16 %v832
  %v906 = vunpack.c.h.b16 %v832
  %v907 = vunpack.c.l.b16 %v833
  %v908 = vunpack.c.h.b16 %v833
  %v909 = vunpack.c.l.b16 %v834
  %v910 = vunpack.c.h.b16 %v834
  %v911 = vunpack.c.l.b16 %v835
  %v912 = vunpack.c.h.b16 %v835
  %v913 = vunpack.c.l.b16 %v836
  %v914 = vunpack.c.h.b16 %v836
  %v915 = vunpack.c.l.b16 %v837
  %v916 = vunpack.c.h.b16 %v837
  %v917 = vunpack.c.l.b16 %v838
  %v918 = vunpack.c.h.b16 %v838
  %v919 = vunpack.c.l.b16 %v839
  %v920 = vunpack.c.h.b16 %v839
  %v921 = vunpack.c.l.b16 %v840
  %v922 = vunpack.c.h.b16 %v840
  %v923 = vunpack.c.l.b16 %v841
  %v924 = vunpack.c.h.b16 %v841
  %v925 = vunpack.c.l.b16 %v842
  %v926 = vunpack.c.h.b16 %v842
  %v927 = vunpack.c.l.b16 %v843
  %v928 = vunpack.c.h.b16 %v843
  %v929 = vunpack.c.l.b16 %v844
  %v930 = vunpack.c.h.b16 %v844
  %v931 = vunpack.c.l.b16 %v845
  %v932 = vunpack.c.h.b16 %v845
  %v933 = vunpack.c.l.b16 %v846
  %v934 = vunpack.c.h.b16 %v846
  %v935 = vunpack.c.l.b16 %v847
  %v936 = vunpack.c.h.b16 %v847
  %v937 = vunpack.c.l.b16 %v848
  %v938 = vunpack.c.h.b16 %v848
  %v939 = vunpack.c.l.b16 %v849
  %v940 = vunpack.c.h.b16 %v849
  %v941 = vunpack.c.l.b16 %v850
  %v942 = vunpack.c.h.b16 %v850
  %v943 = vunpack.c.l.b16 %v851
  %v944 = vunpack.c.h.b16 %v851
  %v945 = vunpack.c.l.b16 %v852
  %v946 = vunpack.c.h.b16 %v852
  %v947 = vunpack.c.l.b16 %v853
  %v948 = vunpack.c.h.b16 %v853
  %v949 = vunpack.c.l.b16 %v854
  %v950 = vunpack.c.h.b16 %v854
  %v951 = vpack.c.b16 %v887, %v887
  %v952 = vpack.c.b16 %v888, %v888
  %v953 = vpack.c.b16 %v889, %v889
  %v954 = vpack.c.b16 %v890, %v890
  %v955 = vpack.c.b16 %v891, %v891
  %v956 = vpack.c.b16 %v892, %v892
  %v957 = vpack.c.b16 %v893, %v893
  %v958 = vpack.c.b16 %v894, %v894
  %v959 = vpack.c.b16 %v895, %v895
  %v960 = vpack.c.b16 %v896, %v896
  %v961 = vpack.c.b16 %v897, %v897
  %v962 = vpack.c.b16 %v898, %v898
  %v963 = vpack.c.b16 %v899, %v899
  %v964 = vpack.c.b16 %v900, %v900
  %v965 = vpack.c.b16 %v901, %v901
  %v966 = vpack.c.b16 %v902, %v902
  %v967 = vpack.c.b16 %v903, %v903
  %v968 = vpack.c.b16 %v904, %v904
  %v969 = vpack.c.b16 %v905, %v905
  %v970 = vpack.c.b16 %v906, %v906
  %v971 = vpack.c.b16 %v907, %v907
  %v972 = vpack.c.b16 %v908, %v908
  %v973 = vpack.c.b16 %v909, %v909
  %v974 = vpack.c.b16 %v910, %v910
  %v975 = vpack.c.b16 %v911, %v911
  %v976 = vpack.c.b16 %v912, %v912
  %v977 = vpack.c.b16 %v913, %v913
  %v978 = vpack.c.b16 %v914, %v914
  %v979 = vpack.c.b16 %v915, %v915
  %v980 = vpack.c.b16 %v916, %v916
  %v981 = vpack.c.b16 %v917, %v917
  %v982 = vpack.c.b16 %v918, %v918
  %v983 = vpack.c.b16 %v919, %v919
  %v984 = vpack.c.b16 %v920, %v920
  %v985 = vpack.c.b16 %v921, %v921
  %v986 = vpack.c.b16 %v922, %v922
  %v987 = vpack.c.b16 %v923, %v923
  %v988 = vpack.c.b16 %v924, %v924
  %v989 = vpack.c.b16 %v925, %v925
  %v990 = vpack.c.b16 %v926, %v926
  %v991 = vpack.c.b16 %v927, %v927
  %v992 = vpack.c.b16 %v928, %v928
  %v993 = vpack.c.b16 %v929, %v929
  %v994 = vpack.c.b16 %v930, %v930
  %v995 = vpack.c.b16 %v931, %v931
  %v996 = vpack.c.b16 %v932, %v932
  %v997 = vpack.c.b16 %v933, %v933
  %v998 = vpack.c.b16 %v934, %v934
  %v999 = vpack.c.b16 %v935, %v935
  %v1000 = vpack.c.b16 %v936, %v936
  %v1001 = vpack.c.b16 %v937, %v937
  %v1002 = vpack.c.b16 %v938, %v938
  %v1003 = vpack.c.b16 %v939, %v939
  %v1004 = vpack.c.b16 %v940, %v940
  %v1005 = vpack.c.b16 %v941, %v941
  %v1006 = vpack.c.b16 %v942, %v942
  %v1007 = vpack.c.b16 %v943, %v943
  %v1008 = vpack.c.b16 %v944, %v944
  %v1009 = vpack.c.b16 %v945, %v945
  %v1010 = vpack.c.b16 %v946, %v946
  %v1011 = vpack.c.b16 %v947, %v947
  %v1012 = vpack.c.b16 %v948, %v948
  %v1013 = vpack.c.b16 %v949, %v949
  %v1014 = vpack.c.b16 %v950, %v950
  %1079 = vst [vmem:[%s3] sm:$0xf] %v951
  %1080 = vst [vmem:[%s3 + $0x4] sm:$0xf] %v952
  %1081 = vst [vmem:[%s3 + $0x8] sm:$0xf] %v953
  %1082 = vst [vmem:[%s3 + $0xc] sm:$0xf] %v954
  %1083 = vst [vmem:[%s3 + $0x10] sm:$0xf] %v955
  %1084 = vst [vmem:[%s3 + $0x14] sm:$0xf] %v956
  %1085 = vst [vmem:[%s3 + $0x18] sm:$0xf] %v957
  %1086 = vst [vmem:[%s3 + $0x1c] sm:$0xf] %v958
  %1087 = vst [vmem:[%s3 + $0x20] sm:$0xf] %v959
  %1088 = vst [vmem:[%s3 + $0x24] sm:$0xf] %v960
  %1089 = vst [vmem:[%s3 + $0x28] sm:$0xf] %v961
  %1090 = vst [vmem:[%s3 + $0x2c] sm:$0xf] %v962
  %1091 = vst [vmem:[%s3 + $0x30] sm:$0xf] %v963
  %1092 = vst [vmem:[%s3 + $0x34] sm:$0xf] %v964
  %1093 = vst [vmem:[%s3 + $0x38] sm:$0xf] %v965
  %1094 = vst [vmem:[%s3 + $0x3c] sm:$0xf] %v966
  %1095 = vst [vmem:[%s3 + $0x40] sm:$0xf] %v967
  %1096 = vst [vmem:[%s3 + $0x44] sm:$0xf] %v968
  %1097 = vst [vmem:[%s3 + $0x48] sm:$0xf] %v969
  %1098 = vst [vmem:[%s3 + $0x4c] sm:$0xf] %v970
  %1099 = vst [vmem:[%s3 + $0x50] sm:$0xf] %v971
  %1100 = vst [vmem:[%s3 + $0x54] sm:$0xf] %v972
  %1101 = vst [vmem:[%s3 + $0x58] sm:$0xf] %v973
  %1102 = vst [vmem:[%s3 + $0x5c] sm:$0xf] %v974
  %1103 = vst [vmem:[%s3 + $0x60] sm:$0xf] %v975
  %1104 = vst [vmem:[%s3 + $0x64] sm:$0xf] %v976
  %1105 = vst [vmem:[%s3 + $0x68] sm:$0xf] %v977
  %1106 = vst [vmem:[%s3 + $0x6c] sm:$0xf] %v978
  %1107 = vst [vmem:[%s3 + $0x70] sm:$0xf] %v979
  %1108 = vst [vmem:[%s3 + $0x74] sm:$0xf] %v980
  %1109 = vst [vmem:[%s3 + $0x78] sm:$0xf] %v981
  %1110 = vst [vmem:[%s3 + $0x7c] sm:$0xf] %v982
  %1111 = vst [vmem:[%s3 + $0x80] sm:$0xf] %v983
  %1112 = vst [vmem:[%s3 + $0x84] sm:$0xf] %v984
  %1113 = vst [vmem:[%s3 + $0x88] sm:$0xf] %v985
  %1114 = vst [vmem:[%s3 + $0x8c] sm:$0xf] %v986
  %1115 = vst [vmem:[%s3 + $0x90] sm:$0xf] %v987
  %1116 = vst [vmem:[%s3 + $0x94] sm:$0xf] %v988
  %1117 = vst [vmem:[%s3 + $0x98] sm:$0xf] %v989
  %1118 = vst [vmem:[%s3 + $0x9c] sm:$0xf] %v990
  %1119 = vst [vmem:[%s3 + $0xa0] sm:$0xf] %v991
  %1120 = vst [vmem:[%s3 + $0xa4] sm:$0xf] %v992
  %1121 = vst [vmem:[%s3 + $0xa8] sm:$0xf] %v993
  %1122 = vst [vmem:[%s3 + $0xac] sm:$0xf] %v994
  %1123 = vst [vmem:[%s3 + $0xb0] sm:$0xf] %v995
  %1124 = vst [vmem:[%s3 + $0xb4] sm:$0xf] %v996
  %1125 = vst [vmem:[%s3 + $0xb8] sm:$0xf] %v997
  %1126 = vst [vmem:[%s3 + $0xbc] sm:$0xf] %v998
  %1127 = vst [vmem:[%s3 + $0xc0] sm:$0xf] %v999
  %1128 = vst [vmem:[%s3 + $0xc4] sm:$0xf] %v1000
  %1129 = vst [vmem:[%s3 + $0xc8] sm:$0xf] %v1001
  %1130 = vst [vmem:[%s3 + $0xcc] sm:$0xf] %v1002
  %1131 = vst [vmem:[%s3 + $0xd0] sm:$0xf] %v1003
  %1132 = vst [vmem:[%s3 + $0xd4] sm:$0xf] %v1004
  %1133 = vst [vmem:[%s3 + $0xd8] sm:$0xf] %v1005
  %1134 = vst [vmem:[%s3 + $0xdc] sm:$0xf] %v1006
  %1135 = vst [vmem:[%s3 + $0xe0] sm:$0xf] %v1007
  %1136 = vst [vmem:[%s3 + $0xe4] sm:$0xf] %v1008
  %1137 = vst [vmem:[%s3 + $0xe8] sm:$0xf] %v1009
  %1138 = vst [vmem:[%s3 + $0xec] sm:$0xf] %v1010
  %1139 = vst [vmem:[%s3 + $0xf0] sm:$0xf] %v1011
  %1140 = vst [vmem:[%s3 + $0xf4] sm:$0xf] %v1012
  %1141 = vst [vmem:[%s3 + $0xf8] sm:$0xf] %v1013
  %1142 = vst [vmem:[%s3 + $0xfc] sm:$0xf] %v1014
  // Predicated region
  $region14: #{discriminator_forward.5} parent=0 // pred_check
    _
  $region15: #{discriminator_forward.5} parent=0 // pred_check_branch
    %1144 = sbr.rel (0) target = $region17
  $region16: #{discriminator_forward.5} parent=0 // pred_region
    _
  $region17: #{discriminator_forward.5} parent=0 // pred_fallthru
    _
  // Predicated region
  $region18: #{discriminator_forward.5} parent=0 // pred_check
    _
  $region19: #{discriminator_forward.5} parent=0 // pred_check_branch
    %1146 = sbr.rel (0) target = $region21
  $region20: #{discriminator_forward.5} parent=0 // pred_region
    _
  $region21: #{discriminator_forward.5} parent=0 // pred_fallthru
    _

// kernel: discriminator_forward.6
$region0: #{discriminator_forward.6}
  #allocation0 [shape = 'u32[]', space=smem, size = 0x4, offset = 0x4, fixed_abs, tag = 'smem constant byte address 0x4 - core index']
  #allocation1 [shape = 'u32[144,128]{1,0:T(1,128)}', space=vmem, size = 0x12000, scoped, tag = 'internal scratch']
  %s0 = inlined_call_operand.vmem [shape: bf16[128,256], index: 0, kind: input, shape index: {}]
  %s1 = inlined_call_operand.vmem [shape: bf16[256,128], index: 1, kind: input, shape index: {}]
  %s2 = inlined_call_operand.vmem [shape: f32[1,128], index: 2, kind: input, shape index: {}]
  %s3 = inlined_call_operand.vmem [shape: bf16[128,128], index: 3, kind: output, shape index: {}]
  %s4 = sld [smem:[#allocation0]]
  $region22: #{discriminator_forward.6} parent=0
    _
  %s6 = ssub.s32 1, %s4
  %s7 = scalar_select 0, %s6, %s4
  // Predicated region
  $region2: #{discriminator_forward.6} parent=0 // pred_check
    _
  $region3: #{discriminator_forward.6} parent=0 // pred_check_branch
    %9 = sbr.rel (0) target = $region5
  $region4: #{discriminator_forward.6} parent=0 // pred_region
    _
  $region5: #{discriminator_forward.6} parent=0 // pred_fallthru
    _
  // Predicated region
  $region6: #{discriminator_forward.6} parent=0 // pred_check
    _
  $region7: #{discriminator_forward.6} parent=0 // pred_check_branch
    %11 = sbr.rel (0) target = $region9
  $region8: #{discriminator_forward.6} parent=0 // pred_region
    _
  $region9: #{discriminator_forward.6} parent=0 // pred_fallthru
    _
  // Predicated region
  $region10: #{discriminator_forward.6} parent=0 // pred_check
    _
  $region11: #{discriminator_forward.6} parent=0 // pred_check_branch
    %13 = sbr.rel (0) target = $region13
  $region12: #{discriminator_forward.6} parent=0 // pred_region
    _
  $region13: #{discriminator_forward.6} parent=0 // pred_fallthru
    _
  %v15 = vld [vmem:[%s0] sm:$0xff]
  %v16 = vld [vmem:[%s0 + $0x8] sm:$0xff]
  %v17 = vld [vmem:[%s0 + $0x10] sm:$0xff]
  %v18 = vld [vmem:[%s0 + $0x18] sm:$0xff]
  %v19 = vld [vmem:[%s0 + $0x20] sm:$0xff]
  %v20 = vld [vmem:[%s0 + $0x28] sm:$0xff]
  %v21 = vld [vmem:[%s0 + $0x30] sm:$0xff]
  %v22 = vld [vmem:[%s0 + $0x38] sm:$0xff]
  %v23 = vld [vmem:[%s0 + $0x40] sm:$0xff]
  %v24 = vld [vmem:[%s0 + $0x48] sm:$0xff]
  %v25 = vld [vmem:[%s0 + $0x50] sm:$0xff]
  %v26 = vld [vmem:[%s0 + $0x58] sm:$0xff]
  %v27 = vld [vmem:[%s0 + $0x60] sm:$0xff]
  %v28 = vld [vmem:[%s0 + $0x68] sm:$0xff]
  %v29 = vld [vmem:[%s0 + $0x70] sm:$0xff]
  %v30 = vld [vmem:[%s0 + $0x78] sm:$0xff]
  %v31 = vld [vmem:[%s1] sm:$0xf]
  %v32 = vld [vmem:[%s1 + $0x4] sm:$0xf]
  %v33 = vld [vmem:[%s1 + $0x8] sm:$0xf]
  %v34 = vld [vmem:[%s1 + $0xc] sm:$0xf]
  %v35 = vld [vmem:[%s1 + $0x10] sm:$0xf]
  %v36 = vld [vmem:[%s1 + $0x14] sm:$0xf]
  %v37 = vld [vmem:[%s1 + $0x18] sm:$0xf]
  %v38 = vld [vmem:[%s1 + $0x1c] sm:$0xf]
  %v39 = vld [vmem:[%s1 + $0x20] sm:$0xf]
  %v40 = vld [vmem:[%s1 + $0x24] sm:$0xf]
  %v41 = vld [vmem:[%s1 + $0x28] sm:$0xf]
  %v42 = vld [vmem:[%s1 + $0x2c] sm:$0xf]
  %v43 = vld [vmem:[%s1 + $0x30] sm:$0xf]
  %v44 = vld [vmem:[%s1 + $0x34] sm:$0xf]
  %v45 = vld [vmem:[%s1 + $0x38] sm:$0xf]
  %v46 = vld [vmem:[%s1 + $0x3c] sm:$0xf]
  %v47 = vld [vmem:[%s1 + $0x40] sm:$0xf]
  %v48 = vld [vmem:[%s1 + $0x44] sm:$0xf]
  %v49 = vld [vmem:[%s1 + $0x48] sm:$0xf]
  %v50 = vld [vmem:[%s1 + $0x4c] sm:$0xf]
  %v51 = vld [vmem:[%s1 + $0x50] sm:$0xf]
  %v52 = vld [vmem:[%s1 + $0x54] sm:$0xf]
  %v53 = vld [vmem:[%s1 + $0x58] sm:$0xf]
  %v54 = vld [vmem:[%s1 + $0x5c] sm:$0xf]
  %v55 = vld [vmem:[%s1 + $0x60] sm:$0xf]
  %v56 = vld [vmem:[%s1 + $0x64] sm:$0xf]
  %v57 = vld [vmem:[%s1 + $0x68] sm:$0xf]
  %v58 = vld [vmem:[%s1 + $0x6c] sm:$0xf]
  %v59 = vld [vmem:[%s1 + $0x70] sm:$0xf]
  %v60 = vld [vmem:[%s1 + $0x74] sm:$0xf]
  %v61 = vld [vmem:[%s1 + $0x78] sm:$0xf]
  %v62 = vld [vmem:[%s1 + $0x7c] sm:$0xf]
  %v63 = vld [vmem:[%s2] sm:$0x1]
  %v65 = vlaneseq
  %v66 = vshrl.u32 %v65, 7
  %v67 = vsub.s32 0, %v66
  %v68 = vrot.slane %v63, %v67
  %v86 = vunpack.c.l.b16 %v15
  %v87 = vunpack.c.h.b16 %v15
  %v88 = vunpack.c.l.b16 %v16
  %v89 = vunpack.c.h.b16 %v16
  %v90 = vunpack.c.l.b16 %v17
  %v91 = vunpack.c.h.b16 %v17
  %v92 = vunpack.c.l.b16 %v18
  %v93 = vunpack.c.h.b16 %v18
  %v94 = vunpack.c.l.b16 %v19
  %v95 = vunpack.c.h.b16 %v19
  %v96 = vunpack.c.l.b16 %v20
  %v97 = vunpack.c.h.b16 %v20
  %v98 = vunpack.c.l.b16 %v21
  %v99 = vunpack.c.h.b16 %v21
  %v100 = vunpack.c.l.b16 %v22
  %v101 = vunpack.c.h.b16 %v22
  %v102 = vunpack.c.l.b16 %v23
  %v103 = vunpack.c.h.b16 %v23
  %v104 = vunpack.c.l.b16 %v24
  %v105 = vunpack.c.h.b16 %v24
  %v106 = vunpack.c.l.b16 %v25
  %v107 = vunpack.c.h.b16 %v25
  %v108 = vunpack.c.l.b16 %v26
  %v109 = vunpack.c.h.b16 %v26
  %v110 = vunpack.c.l.b16 %v27
  %v111 = vunpack.c.h.b16 %v27
  %v112 = vunpack.c.l.b16 %v28
  %v113 = vunpack.c.h.b16 %v28
  %v114 = vunpack.c.l.b16 %v29
  %v115 = vunpack.c.h.b16 %v29
  %v116 = vunpack.c.l.b16 %v30
  %v117 = vunpack.c.h.b16 %v30
  %v118 = vpack.c.b16 %v88, %v86
  %v119 = vpack.c.b16 %v89, %v87
  %v120 = vpack.c.b16 %v92, %v90
  %v121 = vpack.c.b16 %v93, %v91
  %v122 = vpack.c.b16 %v96, %v94
  %v123 = vpack.c.b16 %v97, %v95
  %v124 = vpack.c.b16 %v100, %v98
  %v125 = vpack.c.b16 %v101, %v99
  %v126 = vpack.c.b16 %v104, %v102
  %v127 = vpack.c.b16 %v105, %v103
  %v128 = vpack.c.b16 %v108, %v106
  %v129 = vpack.c.b16 %v109, %v107
  %v130 = vpack.c.b16 %v112, %v110
  %v131 = vpack.c.b16 %v113, %v111
  %v132 = vpack.c.b16 %v116, %v114
  %v133 = vpack.c.b16 %v117, %v115
  %v182 = vunpack.c.l.b16 %v31
  %v183 = vunpack.c.l.b16 %v32
  %v184 = vunpack.c.l.b16 %v33
  %v185 = vunpack.c.l.b16 %v34
  %v186 = vunpack.c.l.b16 %v35
  %v187 = vunpack.c.l.b16 %v36
  %v188 = vunpack.c.l.b16 %v37
  %v189 = vunpack.c.l.b16 %v38
  %v190 = vunpack.c.l.b16 %v39
  %v191 = vunpack.c.l.b16 %v40
  %v192 = vunpack.c.l.b16 %v41
  %v193 = vunpack.c.l.b16 %v42
  %v194 = vunpack.c.l.b16 %v43
  %v195 = vunpack.c.l.b16 %v44
  %v196 = vunpack.c.l.b16 %v45
  %v197 = vunpack.c.l.b16 %v46
  %v198 = vunpack.c.l.b16 %v47
  %v199 = vunpack.c.l.b16 %v48
  %v200 = vunpack.c.l.b16 %v49
  %v201 = vunpack.c.l.b16 %v50
  %v202 = vunpack.c.l.b16 %v51
  %v203 = vunpack.c.l.b16 %v52
  %v204 = vunpack.c.l.b16 %v53
  %v205 = vunpack.c.l.b16 %v54
  %v206 = vunpack.c.l.b16 %v55
  %v207 = vunpack.c.l.b16 %v56
  %v208 = vunpack.c.l.b16 %v57
  %v209 = vunpack.c.l.b16 %v58
  %v210 = vunpack.c.l.b16 %v59
  %v211 = vunpack.c.l.b16 %v60
  %v212 = vunpack.c.l.b16 %v61
  %v213 = vunpack.c.l.b16 %v62
  %v214 = vpack.c.b16 %v183, %v182
  %v215 = vpack.c.b16 %v185, %v184
  %v216 = vpack.c.b16 %v187, %v186
  %v217 = vpack.c.b16 %v189, %v188
  %v218 = vpack.c.b16 %v191, %v190
  %v219 = vpack.c.b16 %v193, %v192
  %v220 = vpack.c.b16 %v195, %v194
  %v221 = vpack.c.b16 %v197, %v196
  %v222 = vpack.c.b16 %v199, %v198
  %v223 = vpack.c.b16 %v201, %v200
  %v224 = vpack.c.b16 %v203, %v202
  %v225 = vpack.c.b16 %v205, %v204
  %v226 = vpack.c.b16 %v207, %v206
  %v227 = vpack.c.b16 %v209, %v208
  %v228 = vpack.c.b16 %v211, %v210
  %v229 = vpack.c.b16 %v213, %v212
  %246 = vmatprep.subr.bf16.mxu0 0
  %247 = vmatpush1.bf16.msra.mxu0 %v214
  %248 = vmatprep.subr.bf16.mxu0 0
  %249 = vmatpush1.bf16.msra.mxu0 %v215
  %250 = vmatprep.subr.bf16.mxu0 0
  %251 = vmatpush1.bf16.msra.mxu0 %v216
  %252 = vmatprep.subr.bf16.mxu0 0
  %253 = vmatpush1.bf16.msra.mxu0 %v217
  %254 = vmatprep.subr.bf16.mxu0 0
  %255 = vmatpush1.bf16.msra.mxu0 %v218
  %256 = vmatprep.subr.bf16.mxu0 0
  %257 = vmatpush1.bf16.msra.mxu0 %v219
  %258 = vmatprep.subr.bf16.mxu0 0
  %259 = vmatpush1.bf16.msra.mxu0 %v220
  %260 = vmatprep.subr.bf16.mxu0 0
  %261 = vmatpush1.bf16.msra.mxu0 %v221
  %262 = vmatprep.subr.bf16.mxu0 0
  %263 = vmatpush1.bf16.msra.mxu0 %v222
  %264 = vmatprep.subr.bf16.mxu0 0
  %265 = vmatpush1.bf16.msra.mxu0 %v223
  %266 = vmatprep.subr.bf16.mxu0 0
  %267 = vmatpush1.bf16.msra.mxu0 %v224
  %268 = vmatprep.subr.bf16.mxu0 0
  %269 = vmatpush1.bf16.msra.mxu0 %v225
  %270 = vmatprep.subr.bf16.mxu0 0
  %271 = vmatpush1.bf16.msra.mxu0 %v226
  %272 = vmatprep.subr.bf16.mxu0 0
  %273 = vmatpush1.bf16.msra.mxu0 %v227
  %274 = vmatprep.subr.bf16.mxu0 0
  %275 = vmatpush1.bf16.msra.mxu0 %v228
  %276 = vmatprep.subr.bf16.mxu0 0
  %277 = vmatpush1.bf16.msra.mxu0 %v229
  %278 = vmatprep.mubr.bf16.mxu0 %v119
  %279 = vmatmul.mubr.bf16.gmra.mrb[0].mxu0 %v118
  %v280 = vpop.f32.mrb[0].mxu0
  %v281 = vadd.f32 %v68, %v280
  %v282 = vpop.f32.mrb[0].mxu0
  %v283 = vpop.f32.mrb[0].mxu0
  %v284 = vadd.f32 %v68, %v283
  %v285 = vpop.f32.mrb[0].mxu0
  %286 = vmatprep.mubr.bf16.mxu0 %v121
  %287 = vmatmul.mubr.bf16.gmra.mrb[0].mxu0 %v120
  %v288 = vpop.f32.mrb[0].mxu0
  %v289 = vadd.f32 %v68, %v288
  %v290 = vpop.f32.mrb[0].mxu0
  %v291 = vpop.f32.mrb[0].mxu0
  %v292 = vadd.f32 %v68, %v291
  %v293 = vpop.f32.mrb[0].mxu0
  %294 = vmatprep.mubr.bf16.mxu0 %v123
  %295 = vmatmul.mubr.bf16.gmra.mrb[0].mxu0 %v122
  %v296 = vpop.f32.mrb[0].mxu0
  %v297 = vadd.f32 %v68, %v296
  %v298 = vpop.f32.mrb[0].mxu0
  %v299 = vpop.f32.mrb[0].mxu0
  %v300 = vadd.f32 %v68, %v299
  %v301 = vpop.f32.mrb[0].mxu0
  %302 = vmatprep.mubr.bf16.mxu0 %v125
  %303 = vmatmul.mubr.bf16.gmra.mrb[0].mxu0 %v124
  %v304 = vpop.f32.mrb[0].mxu0
  %v305 = vadd.f32 %v68, %v304
  %v306 = vpop.f32.mrb[0].mxu0
  %v307 = vpop.f32.mrb[0].mxu0
  %v308 = vadd.f32 %v68, %v307
  %v309 = vpop.f32.mrb[0].mxu0
  %310 = vmatprep.mubr.bf16.mxu0 %v127
  %311 = vmatmul.mubr.bf16.gmra.mrb[0].mxu0 %v126
  %v312 = vpop.f32.mrb[0].mxu0
  %v313 = vadd.f32 %v68, %v312
  %v314 = vpop.f32.mrb[0].mxu0
  %v315 = vpop.f32.mrb[0].mxu0
  %v316 = vadd.f32 %v68, %v315
  %v317 = vpop.f32.mrb[0].mxu0
  %318 = vmatprep.mubr.bf16.mxu0 %v129
  %319 = vmatmul.mubr.bf16.gmra.mrb[0].mxu0 %v128
  %v320 = vpop.f32.mrb[0].mxu0
  %v321 = vadd.f32 %v68, %v320
  %v322 = vpop.f32.mrb[0].mxu0
  %v323 = vpop.f32.mrb[0].mxu0
  %v324 = vadd.f32 %v68, %v323
  %v325 = vpop.f32.mrb[0].mxu0
  %326 = vmatprep.mubr.bf16.mxu0 %v131
  %327 = vmatmul.mubr.bf16.gmra.mrb[0].mxu0 %v130
  %v328 = vpop.f32.mrb[0].mxu0
  %v329 = vadd.f32 %v68, %v328
  %v330 = vpop.f32.mrb[0].mxu0
  %v331 = vpop.f32.mrb[0].mxu0
  %v332 = vadd.f32 %v68, %v331
  %v333 = vpop.f32.mrb[0].mxu0
  %334 = vmatprep.mubr.bf16.mxu0 %v133
  %335 = vmatmul.mubr.bf16.gmra.mrb[0].mxu0 %v132
  %v336 = vpop.f32.mrb[0].mxu0
  %v337 = vadd.f32 %v68, %v336
  %v338 = vpop.f32.mrb[0].mxu0
  %v339 = vpop.f32.mrb[0].mxu0
  %v340 = vadd.f32 %v68, %v339
  %v341 = vpop.f32.mrb[0].mxu0
  %342 = vdwg.mxu0
  %vm343 = vcmp.gt.f32.partialorder %v281, 0.0
  %vm344 = vcmp.gt.f32.partialorder %v284, 0.0
  %vm345 = vcmp.gt.f32.partialorder %v289, 0.0
  %vm346 = vcmp.gt.f32.partialorder %v292, 0.0
  %vm347 = vcmp.gt.f32.partialorder %v297, 0.0
  %vm348 = vcmp.gt.f32.partialorder %v300, 0.0
  %vm349 = vcmp.gt.f32.partialorder %v305, 0.0
  %vm350 = vcmp.gt.f32.partialorder %v308, 0.0
  %vm351 = vcmp.gt.f32.partialorder %v313, 0.0
  %vm352 = vcmp.gt.f32.partialorder %v316, 0.0
  %vm353 = vcmp.gt.f32.partialorder %v321, 0.0
  %vm354 = vcmp.gt.f32.partialorder %v324, 0.0
  %vm355 = vcmp.gt.f32.partialorder %v329, 0.0
  %vm356 = vcmp.gt.f32.partialorder %v332, 0.0
  %vm357 = vcmp.gt.f32.partialorder %v337, 0.0
  %vm358 = vcmp.gt.f32.partialorder %v340, 0.0
  %v359 = vmul.f32 %v281, 0.2
  %v360 = vmul.f32 %v284, 0.2
  %v361 = vmul.f32 %v289, 0.2
  %v362 = vmul.f32 %v292, 0.2
  %v363 = vmul.f32 %v297, 0.2
  %v364 = vmul.f32 %v300, 0.2
  %v365 = vmul.f32 %v305, 0.2
  %v366 = vmul.f32 %v308, 0.2
  %v367 = vmul.f32 %v313, 0.2
  %v368 = vmul.f32 %v316, 0.2
  %v369 = vmul.f32 %v321, 0.2
  %v370 = vmul.f32 %v324, 0.2
  %v371 = vmul.f32 %v329, 0.2
  %v372 = vmul.f32 %v332, 0.2
  %v373 = vmul.f32 %v337, 0.2
  %v374 = vmul.f32 %v340, 0.2
  %v375 = vsel %vm343, %v281, %v359
  %v376 = vsel %vm344, %v284, %v360
  %v377 = vsel %vm345, %v289, %v361
  %v378 = vsel %vm346, %v292, %v362
  %v379 = vsel %vm347, %v297, %v363
  %v380 = vsel %vm348, %v300, %v364
  %v381 = vsel %vm349, %v305, %v365
  %v382 = vsel %vm350, %v308, %v366
  %v383 = vsel %vm351, %v313, %v367
  %v384 = vsel %vm352, %v316, %v368
  %v385 = vsel %vm353, %v321, %v369
  %v386 = vsel %vm354, %v324, %v370
  %v387 = vsel %vm355, %v329, %v371
  %v388 = vsel %vm356, %v332, %v372
  %v389 = vsel %vm357, %v337, %v373
  %v390 = vsel %vm358, %v340, %v374
  %v391 = vpack.c.bf16 %v376, %v375
  %v392 = vpack.c.bf16 %v378, %v377
  %v393 = vpack.c.bf16 %v380, %v379
  %v394 = vpack.c.bf16 %v382, %v381
  %v395 = vpack.c.bf16 %v384, %v383
  %v396 = vpack.c.bf16 %v386, %v385
  %v397 = vpack.c.bf16 %v388, %v387
  %v398 = vpack.c.bf16 %v390, %v389
  %v407 = vunpack.c.l.b16 %v391
  %v408 = vunpack.c.h.b16 %v391
  %v409 = vunpack.c.l.b16 %v392
  %v410 = vunpack.c.h.b16 %v392
  %v411 = vunpack.c.l.b16 %v393
  %v412 = vunpack.c.h.b16 %v393
  %v413 = vunpack.c.l.b16 %v394
  %v414 = vunpack.c.h.b16 %v394
  %v415 = vunpack.c.l.b16 %v395
  %v416 = vunpack.c.h.b16 %v395
  %v417 = vunpack.c.l.b16 %v396
  %v418 = vunpack.c.h.b16 %v396
  %v419 = vunpack.c.l.b16 %v397
  %v420 = vunpack.c.h.b16 %v397
  %v421 = vunpack.c.l.b16 %v398
  %v422 = vunpack.c.h.b16 %v398
  %v423 = vpack.c.b16 %v407, %v407
  %v424 = vpack.c.b16 %v408, %v408
  %v425 = vpack.c.b16 %v409, %v409
  %v426 = vpack.c.b16 %v410, %v410
  %v427 = vpack.c.b16 %v411, %v411
  %v428 = vpack.c.b16 %v412, %v412
  %v429 = vpack.c.b16 %v413, %v413
  %v430 = vpack.c.b16 %v414, %v414
  %v431 = vpack.c.b16 %v415, %v415
  %v432 = vpack.c.b16 %v416, %v416
  %v433 = vpack.c.b16 %v417, %v417
  %v434 = vpack.c.b16 %v418, %v418
  %v435 = vpack.c.b16 %v419, %v419
  %v436 = vpack.c.b16 %v420, %v420
  %v437 = vpack.c.b16 %v421, %v421
  %v438 = vpack.c.b16 %v422, %v422
  %455 = vst [vmem:[%s3] sm:$0xf] %v423
  %456 = vst [vmem:[%s3 + $0x4] sm:$0xf] %v424
  %457 = vst [vmem:[%s3 + $0x8] sm:$0xf] %v425
  %458 = vst [vmem:[%s3 + $0xc] sm:$0xf] %v426
  %459 = vst [vmem:[%s3 + $0x10] sm:$0xf] %v427
  %460 = vst [vmem:[%s3 + $0x14] sm:$0xf] %v428
  %461 = vst [vmem:[%s3 + $0x18] sm:$0xf] %v429
  %462 = vst [vmem:[%s3 + $0x1c] sm:$0xf] %v430
  %463 = vst [vmem:[%s3 + $0x20] sm:$0xf] %v431
  %464 = vst [vmem:[%s3 + $0x24] sm:$0xf] %v432
  %465 = vst [vmem:[%s3 + $0x28] sm:$0xf] %v433
  %466 = vst [vmem:[%s3 + $0x2c] sm:$0xf] %v434
  %467 = vst [vmem:[%s3 + $0x30] sm:$0xf] %v435
  %468 = vst [vmem:[%s3 + $0x34] sm:$0xf] %v436
  %469 = vst [vmem:[%s3 + $0x38] sm:$0xf] %v437
  %470 = vst [vmem:[%s3 + $0x3c] sm:$0xf] %v438
  // Predicated region
  $region14: #{discriminator_forward.6} parent=0 // pred_check
    _
  $region15: #{discriminator_forward.6} parent=0 // pred_check_branch
    %472 = sbr.rel (0) target = $region17
  $region16: #{discriminator_forward.6} parent=0 // pred_region
    _
  $region17: #{discriminator_forward.6} parent=0 // pred_fallthru
    _
  // Predicated region
  $region18: #{discriminator_forward.6} parent=0 // pred_check
    _
  $region19: #{discriminator_forward.6} parent=0 // pred_check_branch
    %474 = sbr.rel (0) target = $region21
  $region20: #{discriminator_forward.6} parent=0 // pred_region
    _
  $region21: #{discriminator_forward.6} parent=0 // pred_fallthru
    _

// kernel: discriminator_forward.7
$region0: #{discriminator_forward.7}
  #allocation0 [shape = 'u32[]', space=smem, size = 0x4, offset = 0x4, fixed_abs, tag = 'smem constant byte address 0x4 - core index']
  #allocation1 [shape = 'u32[144,128]{1,0:T(1,128)}', space=vmem, size = 0x12000, scoped, tag = 'internal scratch']
  %s0 = inlined_call_operand.vmem [shape: bf16[32,512], index: 0, kind: input, shape index: {}]
  %s1 = inlined_call_operand.vmem [shape: bf16[512,128], index: 1, kind: input, shape index: {}]
  %s2 = inlined_call_operand.vmem [shape: f32[1,128], index: 2, kind: input, shape index: {}]
  %s3 = inlined_call_operand.vmem [shape: bf16[32,128], index: 3, kind: output, shape index: {}]
  %s4 = sld [smem:[#allocation0]]
  $region22: #{discriminator_forward.7} parent=0
    _
  %s6 = ssub.s32 1, %s4
  %s7 = scalar_select 0, %s6, %s4
  // Predicated region
  $region2: #{discriminator_forward.7} parent=0 // pred_check
    _
  $region3: #{discriminator_forward.7} parent=0 // pred_check_branch
    %9 = sbr.rel (0) target = $region5
  $region4: #{discriminator_forward.7} parent=0 // pred_region
    _
  $region5: #{discriminator_forward.7} parent=0 // pred_fallthru
    _
  // Predicated region
  $region6: #{discriminator_forward.7} parent=0 // pred_check
    _
  $region7: #{discriminator_forward.7} parent=0 // pred_check_branch
    %11 = sbr.rel (0) target = $region9
  $region8: #{discriminator_forward.7} parent=0 // pred_region
    _
  $region9: #{discriminator_forward.7} parent=0 // pred_fallthru
    _
  // Predicated region
  $region10: #{discriminator_forward.7} parent=0 // pred_check
    _
  $region11: #{discriminator_forward.7} parent=0 // pred_check_branch
    %13 = sbr.rel (0) target = $region13
  $region12: #{discriminator_forward.7} parent=0 // pred_region
    _
  $region13: #{discriminator_forward.7} parent=0 // pred_fallthru
    _
  %v15 = vld [vmem:[%s0] sm:$0xff]
  %v16 = vld [vmem:[%s0 + $0x8] sm:$0xff]
  %v17 = vld [vmem:[%s0 + $0x10] sm:$0xff]
  %v18 = vld [vmem:[%s0 + $0x18] sm:$0xff]
  %v19 = vld [vmem:[%s0 + $0x20] sm:$0xff]
  %v20 = vld [vmem:[%s0 + $0x28] sm:$0xff]
  %v21 = vld [vmem:[%s0 + $0x30] sm:$0xff]
  %v22 = vld [vmem:[%s0 + $0x38] sm:$0xff]
  %v23 = vld [vmem:[%s1] sm:$0xf]
  %v24 = vld [vmem:[%s1 + $0x4] sm:$0xf]
  %v25 = vld [vmem:[%s1 + $0x8] sm:$0xf]
  %v26 = vld [vmem:[%s1 + $0xc] sm:$0xf]
  %v27 = vld [vmem:[%s1 + $0x10] sm:$0xf]
  %v28 = vld [vmem:[%s1 + $0x14] sm:$0xf]
  %v29 = vld [vmem:[%s1 + $0x18] sm:$0xf]
  %v30 = vld [vmem:[%s1 + $0x1c] sm:$0xf]
  %v31 = vld [vmem:[%s1 + $0x20] sm:$0xf]
  %v32 = vld [vmem:[%s1 + $0x24] sm:$0xf]
  %v33 = vld [vmem:[%s1 + $0x28] sm:$0xf]
  %v34 = vld [vmem:[%s1 + $0x2c] sm:$0xf]
  %v35 = vld [vmem:[%s1 + $0x30] sm:$0xf]
  %v36 = vld [vmem:[%s1 + $0x34] sm:$0xf]
  %v37 = vld [vmem:[%s1 + $0x38] sm:$0xf]
  %v38 = vld [vmem:[%s1 + $0x3c] sm:$0xf]
  %v39 = vld [vmem:[%s1 + $0x40] sm:$0xf]
  %v40 = vld [vmem:[%s1 + $0x44] sm:$0xf]
  %v41 = vld [vmem:[%s1 + $0x48] sm:$0xf]
  %v42 = vld [vmem:[%s1 + $0x4c] sm:$0xf]
  %v43 = vld [vmem:[%s1 + $0x50] sm:$0xf]
  %v44 = vld [vmem:[%s1 + $0x54] sm:$0xf]
  %v45 = vld [vmem:[%s1 + $0x58] sm:$0xf]
  %v46 = vld [vmem:[%s1 + $0x5c] sm:$0xf]
  %v47 = vld [vmem:[%s1 + $0x60] sm:$0xf]
  %v48 = vld [vmem:[%s1 + $0x64] sm:$0xf]
  %v49 = vld [vmem:[%s1 + $0x68] sm:$0xf]
  %v50 = vld [vmem:[%s1 + $0x6c] sm:$0xf]
  %v51 = vld [vmem:[%s1 + $0x70] sm:$0xf]
  %v52 = vld [vmem:[%s1 + $0x74] sm:$0xf]
  %v53 = vld [vmem:[%s1 + $0x78] sm:$0xf]
  %v54 = vld [vmem:[%s1 + $0x7c] sm:$0xf]
  %v55 = vld [vmem:[%s1 + $0x80] sm:$0xf]
  %v56 = vld [vmem:[%s1 + $0x84] sm:$0xf]
  %v57 = vld [vmem:[%s1 + $0x88] sm:$0xf]
  %v58 = vld [vmem:[%s1 + $0x8c] sm:$0xf]
  %v59 = vld [vmem:[%s1 + $0x90] sm:$0xf]
  %v60 = vld [vmem:[%s1 + $0x94] sm:$0xf]
  %v61 = vld [vmem:[%s1 + $0x98] sm:$0xf]
  %v62 = vld [vmem:[%s1 + $0x9c] sm:$0xf]
  %v63 = vld [vmem:[%s1 + $0xa0] sm:$0xf]
  %v64 = vld [vmem:[%s1 + $0xa4] sm:$0xf]
  %v65 = vld [vmem:[%s1 + $0xa8] sm:$0xf]
  %v66 = vld [vmem:[%s1 + $0xac] sm:$0xf]
  %v67 = vld [vmem:[%s1 + $0xb0] sm:$0xf]
  %v68 = vld [vmem:[%s1 + $0xb4] sm:$0xf]
  %v69 = vld [vmem:[%s1 + $0xb8] sm:$0xf]
  %v70 = vld [vmem:[%s1 + $0xbc] sm:$0xf]
  %v71 = vld [vmem:[%s1 + $0xc0] sm:$0xf]
  %v72 = vld [vmem:[%s1 + $0xc4] sm:$0xf]
  %v73 = vld [vmem:[%s1 + $0xc8] sm:$0xf]
  %v74 = vld [vmem:[%s1 + $0xcc] sm:$0xf]
  %v75 = vld [vmem:[%s1 + $0xd0] sm:$0xf]
  %v76 = vld [vmem:[%s1 + $0xd4] sm:$0xf]
  %v77 = vld [vmem:[%s1 + $0xd8] sm:$0xf]
  %v78 = vld [vmem:[%s1 + $0xdc] sm:$0xf]
  %v79 = vld [vmem:[%s1 + $0xe0] sm:$0xf]
  %v80 = vld [vmem:[%s1 + $0xe4] sm:$0xf]
  %v81 = vld [vmem:[%s1 + $0xe8] sm:$0xf]
  %v82 = vld [vmem:[%s1 + $0xec] sm:$0xf]
  %v83 = vld [vmem:[%s1 + $0xf0] sm:$0xf]
  %v84 = vld [vmem:[%s1 + $0xf4] sm:$0xf]
  %v85 = vld [vmem:[%s1 + $0xf8] sm:$0xf]
  %v86 = vld [vmem:[%s1 + $0xfc] sm:$0xf]
  %v87 = vld [vmem:[%s2] sm:$0x1]
  %v89 = vlaneseq
  %v90 = vshrl.u32 %v89, 7
  %v91 = vsub.s32 0, %v90
  %v92 = vrot.slane %v87, %v91
  %v102 = vunpack.c.l.b16 %v15
  %v103 = vunpack.c.h.b16 %v15
  %v104 = vunpack.c.l.b16 %v16
  %v105 = vunpack.c.h.b16 %v16
  %v106 = vunpack.c.l.b16 %v17
  %v107 = vunpack.c.h.b16 %v17
  %v108 = vunpack.c.l.b16 %v18
  %v109 = vunpack.c.h.b16 %v18
  %v110 = vunpack.c.l.b16 %v19
  %v111 = vunpack.c.h.b16 %v19
  %v112 = vunpack.c.l.b16 %v20
  %v113 = vunpack.c.h.b16 %v20
  %v114 = vunpack.c.l.b16 %v21
  %v115 = vunpack.c.h.b16 %v21
  %v116 = vunpack.c.l.b16 %v22
  %v117 = vunpack.c.h.b16 %v22
  %v118 = vpack.c.b16 %v106, %v102
  %v119 = vpack.c.b16 %v107, %v103
  %v120 = vpack.c.b16 %v108, %v104
  %v121 = vpack.c.b16 %v109, %v105
  %v122 = vpack.c.b16 %v114, %v110
  %v123 = vpack.c.b16 %v115, %v111
  %v124 = vpack.c.b16 %v116, %v112
  %v125 = vpack.c.b16 %v117, %v113
  %v198 = vunpack.c.l.b16 %v23
  %v199 = vunpack.c.l.b16 %v24
  %v200 = vunpack.c.l.b16 %v25
  %v201 = vunpack.c.l.b16 %v26
  %v202 = vunpack.c.l.b16 %v27
  %v203 = vunpack.c.l.b16 %v28
  %v204 = vunpack.c.l.b16 %v29
  %v205 = vunpack.c.l.b16 %v30
  %v206 = vunpack.c.l.b16 %v31
  %v207 = vunpack.c.l.b16 %v32
  %v208 = vunpack.c.l.b16 %v33
  %v209 = vunpack.c.l.b16 %v34
  %v210 = vunpack.c.l.b16 %v35
  %v211 = vunpack.c.l.b16 %v36
  %v212 = vunpack.c.l.b16 %v37
  %v213 = vunpack.c.l.b16 %v38
  %v214 = vunpack.c.l.b16 %v39
  %v215 = vunpack.c.l.b16 %v40
  %v216 = vunpack.c.l.b16 %v41
  %v217 = vunpack.c.l.b16 %v42
  %v218 = vunpack.c.l.b16 %v43
  %v219 = vunpack.c.l.b16 %v44
  %v220 = vunpack.c.l.b16 %v45
  %v221 = vunpack.c.l.b16 %v46
  %v222 = vunpack.c.l.b16 %v47
  %v223 = vunpack.c.l.b16 %v48
  %v224 = vunpack.c.l.b16 %v49
  %v225 = vunpack.c.l.b16 %v50
  %v226 = vunpack.c.l.b16 %v51
  %v227 = vunpack.c.l.b16 %v52
  %v228 = vunpack.c.l.b16 %v53
  %v229 = vunpack.c.l.b16 %v54
  %v230 = vunpack.c.l.b16 %v55
  %v231 = vunpack.c.l.b16 %v56
  %v232 = vunpack.c.l.b16 %v57
  %v233 = vunpack.c.l.b16 %v58
  %v234 = vunpack.c.l.b16 %v59
  %v235 = vunpack.c.l.b16 %v60
  %v236 = vunpack.c.l.b16 %v61
  %v237 = vunpack.c.l.b16 %v62
  %v238 = vunpack.c.l.b16 %v63
  %v239 = vunpack.c.l.b16 %v64
  %v240 = vunpack.c.l.b16 %v65
  %v241 = vunpack.c.l.b16 %v66
  %v242 = vunpack.c.l.b16 %v67
  %v243 = vunpack.c.l.b16 %v68
  %v244 = vunpack.c.l.b16 %v69
  %v245 = vunpack.c.l.b16 %v70
  %v246 = vunpack.c.l.b16 %v71
  %v247 = vunpack.c.l.b16 %v72
  %v248 = vunpack.c.l.b16 %v73
  %v249 = vunpack.c.l.b16 %v74
  %v250 = vunpack.c.l.b16 %v75
  %v251 = vunpack.c.l.b16 %v76
  %v252 = vunpack.c.l.b16 %v77
  %v253 = vunpack.c.l.b16 %v78
  %v254 = vunpack.c.l.b16 %v79
  %v255 = vunpack.c.l.b16 %v80
  %v256 = vunpack.c.l.b16 %v81
  %v257 = vunpack.c.l.b16 %v82
  %v258 = vunpack.c.l.b16 %v83
  %v259 = vunpack.c.l.b16 %v84
  %v260 = vunpack.c.l.b16 %v85
  %v261 = vunpack.c.l.b16 %v86
  %v262 = vpack.c.b16 %v199, %v198
  %v263 = vpack.c.b16 %v201, %v200
  %v264 = vpack.c.b16 %v203, %v202
  %v265 = vpack.c.b16 %v205, %v204
  %v266 = vpack.c.b16 %v207, %v206
  %v267 = vpack.c.b16 %v209, %v208
  %v268 = vpack.c.b16 %v211, %v210
  %v269 = vpack.c.b16 %v213, %v212
  %v270 = vpack.c.b16 %v215, %v214
  %v271 = vpack.c.b16 %v217, %v216
  %v272 = vpack.c.b16 %v219, %v218
  %v273 = vpack.c.b16 %v221, %v220
  %v274 = vpack.c.b16 %v223, %v222
  %v275 = vpack.c.b16 %v225, %v224
  %v276 = vpack.c.b16 %v227, %v226
  %v277 = vpack.c.b16 %v229, %v228
  %v278 = vpack.c.b16 %v231, %v230
  %v279 = vpack.c.b16 %v233, %v232
  %v280 = vpack.c.b16 %v235, %v234
  %v281 = vpack.c.b16 %v237, %v236
  %v282 = vpack.c.b16 %v239, %v238
  %v283 = vpack.c.b16 %v241, %v240
  %v284 = vpack.c.b16 %v243, %v242
  %v285 = vpack.c.b16 %v245, %v244
  %v286 = vpack.c.b16 %v247, %v246
  %v287 = vpack.c.b16 %v249, %v248
  %v288 = vpack.c.b16 %v251, %v250
  %v289 = vpack.c.b16 %v253, %v252
  %v290 = vpack.c.b16 %v255, %v254
  %v291 = vpack.c.b16 %v257, %v256
  %v292 = vpack.c.b16 %v259, %v258
  %v293 = vpack.c.b16 %v261, %v260
  %326 = vmatprep.subr.bf16.mxu0 0
  %327 = vmatpush1.bf16.msra.mxu0 %v262
  %328 = vmatprep.subr.bf16.mxu0 0
  %329 = vmatpush1.bf16.msra.mxu0 %v263
  %330 = vmatprep.subr.bf16.mxu0 0
  %331 = vmatpush1.bf16.msra.mxu0 %v264
  %332 = vmatprep.subr.bf16.mxu0 0
  %333 = vmatpush1.bf16.msra.mxu0 %v265
  %334 = vmatprep.subr.bf16.mxu0 0
  %335 = vmatpush1.bf16.msra.mxu0 %v266
  %336 = vmatprep.subr.bf16.mxu0 0
  %337 = vmatpush1.bf16.msra.mxu0 %v267
  %338 = vmatprep.subr.bf16.mxu0 0
  %339 = vmatpush1.bf16.msra.mxu0 %v268
  %340 = vmatprep.subr.bf16.mxu0 0
  %341 = vmatpush1.bf16.msra.mxu0 %v269
  %342 = vmatprep.subr.bf16.mxu0 0
  %343 = vmatpush1.bf16.msra.mxu0 %v270
  %344 = vmatprep.subr.bf16.mxu0 0
  %345 = vmatpush1.bf16.msra.mxu0 %v271
  %346 = vmatprep.subr.bf16.mxu0 0
  %347 = vmatpush1.bf16.msra.mxu0 %v272
  %348 = vmatprep.subr.bf16.mxu0 0
  %349 = vmatpush1.bf16.msra.mxu0 %v273
  %350 = vmatprep.subr.bf16.mxu0 0
  %351 = vmatpush1.bf16.msra.mxu0 %v274
  %352 = vmatprep.subr.bf16.mxu0 0
  %353 = vmatpush1.bf16.msra.mxu0 %v275
  %354 = vmatprep.subr.bf16.mxu0 0
  %355 = vmatpush1.bf16.msra.mxu0 %v276
  %356 = vmatprep.subr.bf16.mxu0 0
  %357 = vmatpush1.bf16.msra.mxu0 %v277
  %358 = vmatprep.mubr.bf16.mxu0 %v119
  %359 = vmatmul.mubr.bf16.gmra.mrb[0].mxu0 %v118
  %v360 = vpop.f32.mrb[0].mxu0
  %v361 = vadd.f32 %v92, %v360
  %v362 = vpop.f32.mrb[0].mxu0
  %v363 = vpop.f32.mrb[0].mxu0
  %v364 = vadd.f32 %v92, %v363
  %v365 = vpop.f32.mrb[0].mxu0
  %366 = vmatprep.mubr.bf16.mxu0 %v123
  %367 = vmatmul.mubr.bf16.gmra.mrb[0].mxu0 %v122
  %v368 = vpop.f32.mrb[0].mxu0
  %v369 = vadd.f32 %v92, %v368
  %v370 = vpop.f32.mrb[0].mxu0
  %v371 = vpop.f32.mrb[0].mxu0
  %v372 = vadd.f32 %v92, %v371
  %v373 = vpop.f32.mrb[0].mxu0
  %374 = vdwg.mxu0
  %375 = vmatprep.subr.bf16.mxu0 0
  %376 = vmatpush1.bf16.msra.mxu0 %v278
  %377 = vmatprep.subr.bf16.mxu0 0
  %378 = vmatpush1.bf16.msra.mxu0 %v279
  %379 = vmatprep.subr.bf16.mxu0 0
  %380 = vmatpush1.bf16.msra.mxu0 %v280
  %381 = vmatprep.subr.bf16.mxu0 0
  %382 = vmatpush1.bf16.msra.mxu0 %v281
  %383 = vmatprep.subr.bf16.mxu0 0
  %384 = vmatpush1.bf16.msra.mxu0 %v282
  %385 = vmatprep.subr.bf16.mxu0 0
  %386 = vmatpush1.bf16.msra.mxu0 %v283
  %387 = vmatprep.subr.bf16.mxu0 0
  %388 = vmatpush1.bf16.msra.mxu0 %v284
  %389 = vmatprep.subr.bf16.mxu0 0
  %390 = vmatpush1.bf16.msra.mxu0 %v285
  %391 = vmatprep.subr.bf16.mxu0 0
  %392 = vmatpush1.bf16.msra.mxu0 %v286
  %393 = vmatprep.subr.bf16.mxu0 0
  %394 = vmatpush1.bf16.msra.mxu0 %v287
  %395 = vmatprep.subr.bf16.mxu0 0
  %396 = vmatpush1.bf16.msra.mxu0 %v288
  %397 = vmatprep.subr.bf16.mxu0 0
  %398 = vmatpush1.bf16.msra.mxu0 %v289
  %399 = vmatprep.subr.bf16.mxu0 0
  %400 = vmatpush1.bf16.msra.mxu0 %v290
  %401 = vmatprep.subr.bf16.mxu0 0
  %402 = vmatpush1.bf16.msra.mxu0 %v291
  %403 = vmatprep.subr.bf16.mxu0 0
  %404 = vmatpush1.bf16.msra.mxu0 %v292
  %405 = vmatprep.subr.bf16.mxu0 0
  %406 = vmatpush1.bf16.msra.mxu0 %v293
  %407 = vmatprep.mubr.bf16.mxu0 %v121
  %408 = vmatmul.mubr.bf16.gmra.mrb[0].mxu0 %v120
  %v409 = vpop.f32.mrb[0].mxu0
  %v410 = vadd.f32 %v361, %v409
  %v411 = vpop.f32.mrb[0].mxu0
  %v412 = vpop.f32.mrb[0].mxu0
  %v413 = vadd.f32 %v364, %v412
  %v414 = vpop.f32.mrb[0].mxu0
  %415 = vmatprep.mubr.bf16.mxu0 %v125
  %416 = vmatmul.mubr.bf16.gmra.mrb[0].mxu0 %v124
  %v417 = vpop.f32.mrb[0].mxu0
  %v418 = vadd.f32 %v369, %v417
  %v419 = vpop.f32.mrb[0].mxu0
  %v420 = vpop.f32.mrb[0].mxu0
  %v421 = vadd.f32 %v372, %v420
  %v422 = vpop.f32.mrb[0].mxu0
  %423 = vdwg.mxu0
  %vm424 = vcmp.gt.f32.partialorder %v410, 0.0
  %vm425 = vcmp.gt.f32.partialorder %v413, 0.0
  %vm426 = vcmp.gt.f32.partialorder %v418, 0.0
  %vm427 = vcmp.gt.f32.partialorder %v421, 0.0
  %v428 = vmul.f32 %v410, 0.2
  %v429 = vmul.f32 %v413, 0.2
  %v430 = vmul.f32 %v418, 0.2
  %v431 = vmul.f32 %v421, 0.2
  %v432 = vsel %vm424, %v410, %v428
  %v433 = vsel %vm425, %v413, %v429
  %v434 = vsel %vm426, %v418, %v430
  %v435 = vsel %vm427, %v421, %v431
  %v436 = vpack.c.bf16 %v433, %v432
  %v437 = vpack.c.bf16 %v435, %v434
  %v440 = vunpack.c.l.b16 %v436
  %v441 = vunpack.c.h.b16 %v436
  %v442 = vunpack.c.l.b16 %v437
  %v443 = vunpack.c.h.b16 %v437
  %v444 = vpack.c.b16 %v440, %v440
  %v445 = vpack.c.b16 %v441, %v441
  %v446 = vpack.c.b16 %v442, %v442
  %v447 = vpack.c.b16 %v443, %v443
  %452 = vst [vmem:[%s3] sm:$0xf] %v444
  %453 = vst [vmem:[%s3 + $0x4] sm:$0xf] %v445
  %454 = vst [vmem:[%s3 + $0x8] sm:$0xf] %v446
  %455 = vst [vmem:[%s3 + $0xc] sm:$0xf] %v447
  // Predicated region
  $region14: #{discriminator_forward.7} parent=0 // pred_check
    _
  $region15: #{discriminator_forward.7} parent=0 // pred_check_branch
    %457 = sbr.rel (0) target = $region17
  $region16: #{discriminator_forward.7} parent=0 // pred_region
    _
  $region17: #{discriminator_forward.7} parent=0 // pred_fallthru
    _
  // Predicated region
  $region18: #{discriminator_forward.7} parent=0 // pred_check
    _
  $region19: #{discriminator_forward.7} parent=0 // pred_check_branch
    %459 = sbr.rel (0) target = $region21
  $region20: #{discriminator_forward.7} parent=0 // pred_region
    _
  $region21: #{discriminator_forward.7} parent=0 // pred_fallthru
    _

</llo_original>
